<compile_context>
chip_gen: v6e
topology: v6e:2x2x1
jax: 0.10.0
libtpu: 0.0.40
codegen_flags: <defaults>
</compile_context>

<pallas_src>
import functools
import math

import jax
import jax.numpy as jnp
from jax import lax
from jax.experimental import pallas as pl
from jax.experimental.pallas import tpu as pltpu

_NEG_BIG = -1e30            # finite mask sentinel (avoids NaN from (-inf)-(-inf))


def _pick_vmem_limit():
    """Scoped-VMEM budget per generation: ~48 MiB on v7x (64 MiB physical),
    ~96 MiB on v5e/v6e (128 MiB physical)."""
    cap = None
    try:
        cap = getattr(pltpu.get_tpu_info(), "vmem_capacity_bytes", None)
    except Exception:
        cap = None
    if not cap:
        cap = 64 * 1024 * 1024          # conservative fallback (v7x per-core)
    return int(min(cap * 3 // 4, 100 * 1024 * 1024))


_VMEM_LIMIT = _pick_vmem_limit()


def _round_up(x, m):
    return ((x + m - 1) // m) * m


def _pad_and_tile(seq_len, max_tile, sub=8):
    """Pad a sequence length to a tileable size and pick the tile.
    `sub` = sublane alignment (8 for f32, 16 for bf16 packing)."""
    max_tile = _round_up(max(max_tile, sub), sub)
    s = _round_up(seq_len, sub)
    if s <= max_tile:
        return s, s
    return _round_up(s, max_tile), max_tile


# --------------------------------------------------------------------------- #
# Linear projection kernels:  y = (x @ W + b) * scale                          #
# --------------------------------------------------------------------------- #
def _linear_kernel_single(x_ref, w_ref, b_ref, o_ref, *, scale):
    # Whole contraction in one step (small/medium in_dim).
    y = jnp.dot(x_ref[...], w_ref[...], preferred_element_type=jnp.float32)
    y = y + b_ref[...]
    if scale != 1.0:                    # fold 1/sqrt(hd) into Q here:
        y = y * scale                   # O(rows*hidden), not O(H*Sq*Skv)
    o_ref[...] = y.astype(o_ref.dtype)


def _linear_kernel_ktiled(x_ref, w_ref, b_ref, o_ref, acc_ref, *, scale):
    # Contraction tiled over the last ("arbitrary") grid axis, f32 accumulator
    # in VMEM scratch (P3 init/finalize pattern).
    @pl.when(pl.program_id(2) == 0)
    def _init():
        acc_ref[...] = jnp.zeros_like(acc_ref)

    acc_ref[...] += jnp.dot(x_ref[...], w_ref[...],
                            preferred_element_type=jnp.float32)

    @pl.when(pl.program_id(2) == pl.num_programs(2) - 1)
    def _store():
        y = acc_ref[...] + b_ref[...]
        if scale != 1.0:
            y = y * scale
        o_ref[...] = y.astype(o_ref.dtype)


def _linear(x, w, b, *, scale, compute_dtype,
            row_tile=256, col_tile=512, k_tile=1024):
    """y = (x @ w + b) * scale, tiled over rows, output channels and (when
    large) the contraction axis."""
    rows, in_dim = x.shape
    out_dim = w.shape[1]
    sub = 8 if jnp.dtype(compute_dtype).itemsize >= 4 else 16

    tm = _round_up(rows, sub) if rows <= row_tile else row_tile
    rows_pad = _round_up(rows, tm)
    xp = x if rows_pad == rows else jnp.pad(x, ((0, rows_pad - rows), (0, 0)))

    # Cast activations/weights *before* pallas_call so the DMA moves the narrow
    # dtype (projections are HBM-bandwidth bound on the activation read).
    xp = xp.astype(compute_dtype)
    w_c = w.astype(compute_dtype)       # bias stays f32 (added after f32 acc)

    tn = col_tile if (out_dim > col_tile and out_dim % col_tile == 0) else out_dim
    tk = k_tile if (in_dim > k_tile and in_dim % k_tile == 0) else in_dim
    n_r, n_c, n_k = rows_pad // tm, out_dim // tn, in_dim // tk

    # Grid ordering: keep the larger operand resident across the inner axis.
    #  * weight-major (cols outer, rows inner): the (tk, tn) weight block is
    #    constant across the inner loop -> whole weight streamed from HBM once
    #    (activations re-streamed n_c times).  This is the typical projection
    #    case (in_dim*out_dim >= rows*in_dim).
    #  * row-major otherwise.
    weight_major = in_dim * out_dim >= rows_pad * in_dim
    if weight_major:
        grid = (n_c, n_r, n_k)
        x_map = lambda c, r, kk: (r, kk)
        w_map = lambda c, r, kk: (kk, c)
        b_map = lambda c, r, kk: (0, c)
        o_map = lambda c, r, kk: (r, c)
    else:
        grid = (n_r, n_c, n_k)
        x_map = lambda r, c, kk: (r, kk)
        w_map = lambda r, c, kk: (kk, c)
        b_map = lambda r, c, kk: (0, c)
        o_map = lambda r, c, kk: (r, c)

    if n_k == 1:
        kernel = functools.partial(_linear_kernel_single, scale=scale)
        scratch = []
    else:
        kernel = functools.partial(_linear_kernel_ktiled, scale=scale)
        scratch = [pltpu.VMEM((tm, tn), jnp.float32)]

    y = pl.pallas_call(
        kernel,
        out_shape=jax.ShapeDtypeStruct((rows_pad, out_dim), compute_dtype),
        grid_spec=pltpu.PrefetchScalarGridSpec(
            num_scalar_prefetch=0,
            grid=grid,
            in_specs=[
                pl.BlockSpec((tm, tk), x_map),
                pl.BlockSpec((tk, tn), w_map),
                pl.BlockSpec((1, tn), b_map),
            ],
            out_specs=pl.BlockSpec((tm, tn), o_map),
            scratch_shapes=scratch,
        ),
        compiler_params=pltpu.CompilerParams(
            dimension_semantics=("parallel", "parallel", "arbitrary"),
            vmem_limit_bytes=_VMEM_LIMIT,
        ),
    )(xp, w_c, b)
    return y if rows_pad == rows else y[:rows]


# --------------------------------------------------------------------------- #
# Flash-attention kernel (online softmax over kv tiles) + fused out-projection #
# --------------------------------------------------------------------------- #
def _flash_attn_kernel(q_ref, kv_ref, wo_ref, bo_ref, o_ref,
                       m_sc, l_sc, acc_sc, *,
                       num_heads, head_dim, hidden, tq, tk, skv,
                       is_causal, mask_padding, compute_dtype):
    q_idx = pl.program_id(1)
    kv_idx = pl.program_id(2)
    last_kv = pl.num_programs(2) - 1

    @pl.when(kv_idx == 0)
    def _init():
        m_sc[...] = jnp.full_like(m_sc, _NEG_BIG)
        l_sc[...] = jnp.zeros_like(l_sc)
        acc_sc[...] = jnp.zeros_like(acc_sc)

    def _process(apply_bias):
        q = q_ref[0]          # (tq, hidden), already scaled by 1/sqrt(head_dim)
        kv = kv_ref[0]        # (tk, 2*hidden) = [K | V] lane-concatenated

        if apply_bias:
            # Additive mask: 0 for valid keys, -1e30 for kv-padding / causal-
            # future keys.  Causal alignment is top-left (key_pos > query_pos
            # masked), matching torch.triu(ones(Sq, Skv), diagonal=1).
            kpos = kv_idx * tk + lax.broadcasted_iota(jnp.int32, (tq, tk), 1)
            valid = None
            if mask_padding:
                valid = kpos < skv
            if is_causal:
                qpos = q_idx * tq + lax.broadcasted_iota(jnp.int32, (tq, tk), 0)
                cval = kpos <= qpos
                valid = cval if valid is None else jnp.logical_and(valid, cval)
            bias = jnp.where(valid, 0.0, _NEG_BIG).astype(jnp.float32)

        # Whole-slab loads of the online-softmax state: one access per state;
        # the per-head slices below are register/lane slices, not masked VMEM
        # read-modify-writes.
        m_prev = m_sc[...]            # (tq, H)
        l_prev = l_sc[...]            # (tq, H)
        acc_prev = acc_sc[...]        # (tq, hidden)

        m_parts, l_parts, acc_parts = [], [], []
        # TODO(synk): switch to lax.fori_loop over heads (vreg pressure) once
        # head_dim is 128-aligned in production shapes.
        for h in range(num_heads):
            lo = h * head_dim
            qh = q[:, lo:lo + head_dim]                       # (tq, hd)
            kh = kv[:, lo:lo + head_dim]                      # (tk, hd)
            vh = kv[:, hidden + lo:hidden + lo + head_dim]    # (tk, hd)

            # scores = qh @ kh.T  (f32 accumulation on the MXU; tiny-K regime
            # for small head_dim -> EUP/VPU bound, see header note).
            s = lax.dot_general(qh, kh, (((1,), (1,)), ((), ())),
                                preferred_element_type=jnp.float32)
            if apply_bias:
                s = s + bias

            m_prev_h = m_prev[:, h:h + 1]                     # (tq, 1) register
            m_new_h = jnp.maximum(m_prev_h, jnp.max(s, axis=-1, keepdims=True))
            alpha_h = jnp.exp(m_prev_h - m_new_h)
            p = jnp.exp(s - m_new_h)          # softmax math kept in f32 (v5e)
            l_new_h = alpha_h * l_prev[:, h:h + 1] + jnp.sum(p, axis=-1,
                                                             keepdims=True)
            pv = jnp.dot(p.astype(compute_dtype), vh,
                         preferred_element_type=jnp.float32)
            acc_new_h = alpha_h * acc_prev[:, lo:lo + head_dim] + pv

            m_parts.append(m_new_h)
            l_parts.append(l_new_h)
            acc_parts.append(acc_new_h)

        # One whole-slab store per state per kv step instead of H width-1 /
        # width-head_dim masked stores (worst case for the v5e single vst slot).
        m_sc[...] = jnp.concatenate(m_parts, axis=1)
        l_sc[...] = jnp.concatenate(l_parts, axis=1)
        acc_sc[...] = jnp.concatenate(acc_parts, axis=1)

    # ---- tile gating --------------------------------------------------------
    # Causal tile skipping: tiles strictly above the diagonal do nothing (and
    # their K/V blocks are never re-DMA'd thanks to the clamped index_map).
    run_tile = (kv_idx * tk <= q_idx * tq + (tq - 1)) if is_causal else None

    # Mask gating: only build / add the additive bias on tiles that actually
    # contain masked keys (diagonal-straddling causal tiles, last padded tile).
    needs_bias = None
    if is_causal:
        needs_bias = kv_idx * tk + (tk - 1) > q_idx * tq
    if mask_padding:
        pad_term = kv_idx == last_kv
        needs_bias = pad_term if needs_bias is None else jnp.logical_or(
            needs_bias, pad_term)

    if needs_bias is None:
        if run_tile is None:
            _process(False)
        else:
            pl.when(run_tile)(lambda: _process(False))
    else:
        if run_tile is None:
            pl.when(needs_bias)(lambda: _process(True))
            pl.when(jnp.logical_not(needs_bias))(lambda: _process(False))
        else:
            pl.when(jnp.logical_and(run_tile, needs_bias))(
                lambda: _process(True))
            pl.when(jnp.logical_and(run_tile, jnp.logical_not(needs_bias)))(
                lambda: _process(False))

    @pl.when(kv_idx == last_kv)
    def _finalize():
        # One EUP reciprocal over the whole (tq, H) l slab, then per-head
        # register multiplies; acc scratch is only read here (never rewritten).
        inv = pl.reciprocal(l_sc[...], approx=True)
        acc = acc_sc[...]
        ctx_parts = [acc[:, h * head_dim:(h + 1) * head_dim] * inv[:, h:h + 1]
                     for h in range(num_heads)]
        ctx = jnp.concatenate(ctx_parts, axis=1).astype(compute_dtype)
        # Fused output projection; the output last dim is padded to a multiple
        # of 128 lanes so stores are unmasked (lane-dense).
        out = jnp.dot(ctx, wo_ref[...],
                      preferred_element_type=jnp.float32) + bo_ref[...]
        o_ref[0] = out.astype(o_ref.dtype)


def _flash_attention(q, kv, wo_p, bo_p, *, num_heads, skv_true, is_causal,
                     compute_dtype, out_dtype, tq, tk):
    B, sq_pad, hidden = q.shape
    _, skv_pad, hidden2 = kv.shape
    head_dim = hidden // num_heads
    do_pad = wo_p.shape[1]
    mask_padding = (skv_pad != skv_true)

    kernel = functools.partial(
        _flash_attn_kernel, num_heads=num_heads, head_dim=head_dim,
        hidden=hidden, tq=tq, tk=tk, skv=skv_true, is_causal=is_causal,
        mask_padding=mask_padding, compute_dtype=compute_dtype)

    # Causal: clamp the kv block index so fully-future tiles reuse the previous
    # block (skipped by pl.when in the kernel) and are never re-DMA'd.
    if is_causal:
        def kv_map(b, qi_, ki):
            last_needed = (qi_ * tq + (tq - 1)) // tk
            return (b, jnp.minimum(ki, last_needed), 0)
    else:
        def kv_map(b, qi_, ki):
            return (b, ki, 0)

    # TODO(synk): for v7x-scale hidden*do, un-fuse / column-tile the output
    # projection (or single-buffer wo with pipeline_mode) to fit 64 MiB VMEM.
    # TODO(synk): raise K/V pipeline depth (pl.Buffered(3)) if profiling shows
    # exposed DMA for long Skv with small per-step compute.
    return pl.pallas_call(
        kernel,
        out_shape=jax.ShapeDtypeStruct((B, sq_pad, do_pad), out_dtype),
        grid_spec=pltpu.PrefetchScalarGridSpec(
            num_scalar_prefetch=0,
            # kv (reduction) axis last & "arbitrary"; B and q-tiles "parallel".
            grid=(B, sq_pad // tq, skv_pad // tk),
            in_specs=[
                pl.BlockSpec((1, tq, hidden), lambda b, qi_, ki: (b, qi_, 0)),
                pl.BlockSpec((1, tk, hidden2), kv_map),
                # constant index maps: out-proj weights DMA'd once, stay resident
                pl.BlockSpec((hidden, do_pad), lambda b, qi_, ki: (0, 0)),
                pl.BlockSpec((1, do_pad), lambda b, qi_, ki: (0, 0)),
            ],
            out_specs=pl.BlockSpec((1, tq, do_pad), lambda b, qi_, ki: (b, qi_, 0)),
            scratch_shapes=[
                pltpu.VMEM((tq, num_heads), jnp.float32),   # running max  m
                pltpu.VMEM((tq, num_heads), jnp.float32),   # running sum  l
                pltpu.VMEM((tq, hidden), jnp.float32),      # acc (= context)
            ],
        ),
        compiler_params=pltpu.CompilerParams(
            dimension_semantics=("parallel", "parallel", "arbitrary"),
            vmem_limit_bytes=_VMEM_LIMIT,
        ),
    )(q, kv, wo_p, bo_p)


# --------------------------------------------------------------------------- #
# Public wrapper                                                               #
# --------------------------------------------------------------------------- #
def custom_multihead_attention(query_input, key_value_input, params, *,
                               num_heads, is_causal=False,
                               compute_dtype=jnp.float32,
                               max_tq=128, max_tk=256):
    """Pallas implementation of CustomMultiheadAttention.forward.

    `compute_dtype=jnp.bfloat16` runs the MXU matmuls with bf16 operands
    (f32 accumulation, f32 softmax) for ~2x MXU throughput and half the DMA.
    `max_tq`/`max_tk` cap the flash-attention tile sizes (sweep per chip:
    larger on v5e/v6e's 128 MiB VMEM, smaller on v7x's 64 MiB).
    """
    # TODO(synk): key_padding_mask path not wired in (module default is None);
    # it would add another term to the flash-kernel bias (and needs a
    # fully-masked-row guard before enabling).
    B, Sq, Dq = query_input.shape
    _, Skv, Dkv = key_value_input.shape
    wq, bq, wk, bk, wv, bv, wo, bo = params
    hidden = wq.shape[1]
    head_dim = hidden // num_heads
    assert head_dim * num_heads == hidden
    scale = 1.0 / math.sqrt(head_dim)

    # Sequence padding / tile sizes (bf16 packs 16 sublanes per vreg).
    sub = 8 if jnp.dtype(compute_dtype).itemsize >= 4 else 16
    sq_pad, tq = _pad_and_tile(Sq, max_tq, sub)
    skv_pad, tk = _pad_and_tile(Skv, max_tk, sub)

    qi = query_input
    if sq_pad != Sq:
        qi = jnp.pad(qi, ((0, 0), (0, sq_pad - Sq), (0, 0)))
    kvi = key_value_input
    if skv_pad != Skv:
        kvi = jnp.pad(kvi, ((0, 0), (0, skv_pad - Skv), (0, 0)))

    # Fused K/V projection: one fat matmul on a concatenated (Dkv, 2*hidden)
    # weight halves activation DMA and per-step grid overhead on the kv path.
    w_kv = jnp.concatenate([wk, wv], axis=1)
    b_kv = jnp.concatenate([bk, bv], axis=1)

    # Batched projections over flattened (B*seq) rows; 1/sqrt(hd) folded into Q.
    Q = _linear(qi.reshape(B * sq_pad, Dq), wq, bq,
                scale=scale, compute_dtype=compute_dtype
                ).reshape(B, sq_pad, hidden)
    KV = _linear(kvi.reshape(B * skv_pad, Dkv), w_kv, b_kv,
                 scale=1.0, compute_dtype=compute_dtype
                 ).reshape(B, skv_pad, 2 * hidden)

    # Lane-dense output: pad the out-projection columns to a multiple of 128.
    Do = wo.shape[1]
    do_pad = _round_up(Do, 128)
    wo_p, bo_p = wo, bo
    if do_pad != Do:
        wo_p = jnp.pad(wo, ((0, 0), (0, do_pad - Do)))
        bo_p = jnp.pad(bo, ((0, 0), (0, do_pad - Do)))
    wo_p = wo_p.astype(compute_dtype)   # bias stays f32 (added after f32 acc)

    out = _flash_attention(Q, KV, wo_p, bo_p, num_heads=num_heads,
                           skv_true=Skv, is_causal=is_causal,
                           compute_dtype=compute_dtype,
                           out_dtype=query_input.dtype, tq=tq, tk=tk)
    return out[:, :Sq, :Do]


# --------------------------------------------------------------------------- #
# Reference + test harness                                                     #
# --------------------------------------------------------------------------- #
def _init_linear(key, in_dim, out_dim):
    # Deterministic init mimicking nn.Linear (uniform +/- 1/sqrt(in_dim)).
    k_w, k_b = jax.random.split(key)
    bound = 1.0 / math.sqrt(in_dim)
    w = jax.random.uniform(k_w, (in_dim, out_dim), jnp.float32, -bound, bound)
    b = jax.random.uniform(k_b, (1, out_dim), jnp.float32, -bound, bound)
    return w, b


def _reference(query_input, key_value_input, params, *, num_heads, is_causal=False):
    wq, bq, wk, bk, wv, bv, wo, bo = params
    B, Sq, _ = query_input.shape
    _, Skv, _ = key_value_input.shape
    hidden = wq.shape[1]
    hd = hidden // num_heads
    Q = query_input @ wq + bq
    K = key_value_input @ wk + bk
    V = key_value_input @ wv + bv
    Q = Q.reshape(B, Sq, num_heads, hd).transpose(0, 2, 1, 3)
    K = K.reshape(B, Skv, num_heads, hd).transpose(0, 2, 1, 3)
    V = V.reshape(B, Skv, num_heads, hd).transpose(0, 2, 1, 3)
    scores = jnp.einsum('bhqd,bhkd->bhqk', Q, K) / math.sqrt(hd)
    if is_causal:
        mask = jnp.triu(jnp.ones((Sq, Skv)), k=1)
        scores = scores + jnp.where(mask == 1, -jnp.inf, 0.0)
    attn = jax.nn.softmax(scores, axis=-1)
    out = jnp.einsum('bhqk,bhkd->bhqd', attn, V)
    out = out.transpose(0, 2, 1, 3).reshape(B, Sq, hidden)
    return out @ wo + bo


if __name__ == "__main__":
    B = 2
    query_seq_len = 8
    kv_seq_len = 16
    query_emb_dim = 32
    kv_emb_dim = 32
    hidden_dim = 64
    n_heads = 8            # matches the module spec's num_heads; head_dim = 8

    root = jax.random.PRNGKey(0)
    k_q, k_kv, k_wq, k_wk, k_wv, k_wo, k_q2, k_kv2 = jax.random.split(root, 8)

    query_input = jax.random.normal(k_q, (B, query_seq_len, query_emb_dim), jnp.float32)
    key_value_input = jax.random.normal(k_kv, (B, kv_seq_len, kv_emb_dim), jnp.float32)

    wq, bq = _init_linear(k_wq, query_emb_dim, hidden_dim)
    wk, bk = _init_linear(k_wk, kv_emb_dim, hidden_dim)
    wv, bv = _init_linear(k_wv, kv_emb_dim, hidden_dim)
    wo, bo = _init_linear(k_wo, hidden_dim, query_emb_dim)
    params = (wq, bq, wk, bk, wv, bv, wo, bo)

    # 1) f32 operands, no causal mask (module default path)
    fn = jax.jit(functools.partial(custom_multihead_attention,
                                   num_heads=n_heads, is_causal=False))
    out = jax.block_until_ready(fn(query_input, key_value_input, params))
    ref = _reference(query_input, key_value_input, params,
                     num_heads=n_heads, is_causal=False)
    assert out.shape == (B, query_seq_len, query_emb_dim)
    assert jnp.allclose(out, ref, atol=2e-2, rtol=2e-2), "f32 non-causal mismatch"

    # 2) f32 operands, causal
    fn_c = jax.jit(functools.partial(custom_multihead_attention,
                                     num_heads=n_heads, is_causal=True))
    out_c = jax.block_until_ready(fn_c(query_input, key_value_input, params))
    ref_c = _reference(query_input, key_value_input, params,
                       num_heads=n_heads, is_causal=True)
    assert jnp.allclose(out_c, ref_c, atol=2e-2, rtol=2e-2), "f32 causal mismatch"

    # 3) bf16 matmul operands (f32 softmax + f32 accumulation), looser tolerance
    fn_b = jax.jit(functools.partial(custom_multihead_attention,
                                     num_heads=n_heads, is_causal=False,
                                     compute_dtype=jnp.bfloat16))
    out_b = jax.block_until_ready(fn_b(query_input, key_value_input, params))
    assert jnp.allclose(out_b, ref, atol=1e-1, rtol=1e-1), "bf16 mismatch"

    # 4) causal + kv padding (Skv not a multiple of 8) exercises the padding
    #    mask gating on the last kv tile
    kv13 = key_value_input[:, :13, :]
    fn_p = jax.jit(functools.partial(custom_multihead_attention,
                                     num_heads=n_heads, is_causal=True))
    out_p = jax.block_until_ready(fn_p(query_input, kv13, params))
    ref_p = _reference(query_input, kv13, params,
                       num_heads=n_heads, is_causal=True)
    assert jnp.allclose(out_p, ref_p, atol=2e-2, rtol=2e-2), "padded causal mismatch"

    # 5) causal multi-tile case (small forced tiles) exercises causal tile
    #    skipping, the clamped K/V index_map and per-tile mask gating
    q32 = jax.random.normal(k_q2, (B, 32, query_emb_dim), jnp.float32)
    kv32 = jax.random.normal(k_kv2, (B, 32, kv_emb_dim), jnp.float32)
    fn_t = jax.jit(functools.partial(custom_multihead_attention,
                                     num_heads=n_heads, is_causal=True,
                                     max_tq=8, max_tk=8))
    out_t = jax.block_until_ready(fn_t(q32, kv32, params))
    ref_t = _reference(q32, kv32, params, num_heads=n_heads, is_causal=True)
    assert jnp.allclose(out_t, ref_t, atol=2e-2, rtol=2e-2), "tiled causal mismatch"

    print("KERNEL_OK")
</pallas_src>

<mosaic_0001>
module attributes {stable_mosaic.version = 11 : i64} {
  func.func @_linear_kernel_single(%arg0: i32, %arg1: i32, %arg2: i32, %arg3: memref<32x32xf32, #tpu.memory_space<vmem>>, %arg4: memref<32x128xf32, #tpu.memory_space<vmem>>, %arg5: memref<1x128xf32, #tpu.memory_space<vmem>>, %arg6: memref<32x128xf32, #tpu.memory_space<vmem>>) attributes {dimension_semantics = [#tpu.dimension_semantics<parallel>, #tpu.dimension_semantics<parallel>, #tpu.dimension_semantics<arbitrary>], iteration_bounds = array<i64: 1, 1, 1>, scalar_prefetch = 0 : i64, scratch_operands = 0 : i64, tpu.core_type = #tpu.core_type<tc>, window_params = [{transform_indices = @transform_0, window_bounds = array<i64: 32, 32>}, {transform_indices = @transform_1, window_bounds = array<i64: 32, 128>}, {transform_indices = @transform_2, window_bounds = array<i64: 1, 128>}, {transform_indices = @transform_3, window_bounds = array<i64: 32, 128>}]} {
    %c0 = arith.constant 0 : index
    %c0_0 = arith.constant 0 : index
    %0 = vector.load %arg3[%c0, %c0_0] : memref<32x32xf32, #tpu.memory_space<vmem>>, vector<32x32xf32>
    %c0_1 = arith.constant 0 : index
    %c0_2 = arith.constant 0 : index
    %1 = vector.load %arg4[%c0_1, %c0_2] : memref<32x128xf32, #tpu.memory_space<vmem>>, vector<32x128xf32>
    %cst = arith.constant dense<0.000000e+00> : vector<32x128xf32>
    %2 = tpu.matmul %0, %1, %cst {dimension_numbers = #tpu.dot_dimension_numbers<[1], [0], [0], [1], [0, 0, 1, 1], [], []>} : vector<32x32xf32>, vector<32x128xf32>, vector<32x128xf32> -> vector<32x128xf32>
    %c0_3 = arith.constant 0 : index
    %c0_4 = arith.constant 0 : index
    %3 = vector.load %arg5[%c0_3, %c0_4] : memref<1x128xf32, #tpu.memory_space<vmem>>, vector<1x128xf32>
    %4 = vector.broadcast %3 : vector<1x128xf32> to vector<32x128xf32>
    %5 = arith.addf %2, %4 : vector<32x128xf32>
    %c0_5 = arith.constant 0 : index
    %c0_6 = arith.constant 0 : index
    %6 = vector.load %arg6[%c0_5, %c0_6] : memref<32x128xf32, #tpu.memory_space<vmem>>, vector<32x128xf32>
    tpu.vector_store %arg6[%c0_5, %c0_6], %5 {strides = array<i32>} : memref<32x128xf32, #tpu.memory_space<vmem>>, vector<32x128xf32>,
    return
  }
  func.func @transform_0(%arg0: i32, %arg1: i32, %arg2: i32) -> (i32, i32) {
    %c0_i32 = arith.constant 0 : i32
    return %arg1, %arg2 : i32, i32
  }
  func.func @transform_1(%arg0: i32, %arg1: i32, %arg2: i32) -> (i32, i32) {
    %c0_i32 = arith.constant 0 : i32
    return %arg2, %arg0 : i32, i32
  }
  func.func @transform_2(%arg0: i32, %arg1: i32, %arg2: i32) -> (i32, i32) {
    %c0_i32 = arith.constant 0 : i32
    %c0_i32_0 = arith.constant 0 : i32
    return %c0_i32, %arg0 : i32, i32
  }
  func.func @transform_3(%arg0: i32, %arg1: i32, %arg2: i32) -> (i32, i32) {
    %c0_i32 = arith.constant 0 : i32
    return %arg1, %arg0 : i32, i32
  }
}

module attributes {stable_mosaic.version = 11 : i64} {
  func.func @_linear_kernel_single(%arg0: i32, %arg1: i32, %arg2: i32, %arg3: memref<16x32xf32, #tpu.memory_space<vmem>>, %arg4: memref<32x64xf32, #tpu.memory_space<vmem>>, %arg5: memref<1x64xf32, #tpu.memory_space<vmem>>, %arg6: memref<16x64xf32, #tpu.memory_space<vmem>>) attributes {dimension_semantics = [#tpu.dimension_semantics<parallel>, #tpu.dimension_semantics<parallel>, #tpu.dimension_semantics<arbitrary>], iteration_bounds = array<i64: 1, 1, 1>, scalar_prefetch = 0 : i64, scratch_operands = 0 : i64, tpu.core_type = #tpu.core_type<tc>, window_params = [{transform_indices = @transform_0, window_bounds = array<i64: 16, 32>}, {transform_indices = @transform_1, window_bounds = array<i64: 32, 64>}, {transform_indices = @transform_2, window_bounds = array<i64: 1, 64>}, {transform_indices = @transform_3, window_bounds = array<i64: 16, 64>}]} {
    %c0 = arith.constant 0 : index
    %c0_0 = arith.constant 0 : index
    %0 = vector.load %arg3[%c0, %c0_0] : memref<16x32xf32, #tpu.memory_space<vmem>>, vector<16x32xf32>
    %c0_1 = arith.constant 0 : index
    %c0_2 = arith.constant 0 : index
    %1 = vector.load %arg4[%c0_1, %c0_2] : memref<32x64xf32, #tpu.memory_space<vmem>>, vector<32x64xf32>
    %cst = arith.constant dense<0.000000e+00> : vector<16x64xf32>
    %2 = tpu.matmul %0, %1, %cst {dimension_numbers = #tpu.dot_dimension_numbers<[1], [0], [0], [1], [0, 0, 1, 1], [], []>} : vector<16x32xf32>, vector<32x64xf32>, vector<16x64xf32> -> vector<16x64xf32>
    %c0_3 = arith.constant 0 : index
    %c0_4 = arith.constant 0 : index
    %3 = vector.load %arg5[%c0_3, %c0_4] : memref<1x64xf32, #tpu.memory_space<vmem>>, vector<1x64xf32>
    %4 = vector.broadcast %3 : vector<1x64xf32> to vector<16x64xf32>
    %5 = arith.addf %2, %4 : vector<16x64xf32>
    %cst_5 = arith.constant 0.353553385 : f32
    %6 = vector.broadcast %cst_5 : f32 to vector<16x64xf32>
    %7 = arith.mulf %5, %6 : vector<16x64xf32>
    %c0_6 = arith.constant 0 : index
    %c0_7 = arith.constant 0 : index
    %8 = vector.load %arg6[%c0_6, %c0_7] : memref<16x64xf32, #tpu.memory_space<vmem>>, vector<16x64xf32>
    tpu.vector_store %arg6[%c0_6, %c0_7], %7 {strides = array<i32>} : memref<16x64xf32, #tpu.memory_space<vmem>>, vector<16x64xf32>,
    return
  }
  func.func @transform_0(%arg0: i32, %arg1: i32, %arg2: i32) -> (i32, i32) {
    %c0_i32 = arith.constant 0 : i32
    return %arg1, %arg2 : i32, i32
  }
  func.func @transform_1(%arg0: i32, %arg1: i32, %arg2: i32) -> (i32, i32) {
    %c0_i32 = arith.constant 0 : i32
    return %arg2, %arg0 : i32, i32
  }
  func.func @transform_2(%arg0: i32, %arg1: i32, %arg2: i32) -> (i32, i32) {
    %c0_i32 = arith.constant 0 : i32
    %c0_i32_0 = arith.constant 0 : i32
    return %c0_i32, %arg0 : i32, i32
  }
  func.func @transform_3(%arg0: i32, %arg1: i32, %arg2: i32) -> (i32, i32) {
    %c0_i32 = arith.constant 0 : i32
    return %arg1, %arg0 : i32, i32
  }
}

module attributes {stable_mosaic.version = 11 : i64} {
  func.func @_flash_attn_kernel(%arg0: i32, %arg1: i32, %arg2: i32, %arg3: memref<1x8x64xf32, #tpu.memory_space<vmem>>, %arg4: memref<1x16x128xf32, #tpu.memory_space<vmem>>, %arg5: memref<64x128xf32, #tpu.memory_space<vmem>>, %arg6: memref<1x128xf32, #tpu.memory_space<vmem>>, %arg7: memref<1x8x128xf32, #tpu.memory_space<vmem>>, %arg8: memref<8x8xf32, #tpu.memory_space<vmem>>, %arg9: memref<8x8xf32, #tpu.memory_space<vmem>>, %arg10: memref<8x64xf32, #tpu.memory_space<vmem>>) attributes {dimension_semantics = [#tpu.dimension_semantics<parallel>, #tpu.dimension_semantics<parallel>, #tpu.dimension_semantics<arbitrary>], iteration_bounds = array<i64: 2, 1, 1>, scalar_prefetch = 0 : i64, scratch_operands = 3 : i64, tpu.core_type = #tpu.core_type<tc>, window_params = [{transform_indices = @transform_0, window_bounds = array<i64: 1, 8, 64>}, {transform_indices = @transform_1, window_bounds = array<i64: 1, 16, 128>}, {pipeline_mode = #tpu.pipeline_mode<synchronous>, transform_indices = @transform_2, window_bounds = array<i64: 64, 128>}, {pipeline_mode = #tpu.pipeline_mode<synchronous>, transform_indices = @transform_3, window_bounds = array<i64: 1, 128>}, {transform_indices = @transform_4, window_bounds = array<i64: 1, 8, 128>}]} {
    %c0_i32 = arith.constant 0 : i32
    %0 = arith.cmpi eq, %arg2, %c0_i32 : i32
    %1 = arith.extui %0 : i1 to i32
    %c0_i32_0 = arith.constant 0 : i32
    %2 = arith.cmpi ne, %1, %c0_i32_0 : i32
    scf.if %2 {
      %cst_51 = arith.constant -1.000000e+30 : f32
      %203 = vector.broadcast %cst_51 : f32 to vector<8x8xf32>
      %c0_52 = arith.constant 0 : index
      %c0_53 = arith.constant 0 : index
      %204 = vector.load %arg8[%c0_52, %c0_53] : memref<8x8xf32, #tpu.memory_space<vmem>>, vector<8x8xf32>
      tpu.vector_store %arg8[%c0_52, %c0_53], %203 {strides = array<i32>} : memref<8x8xf32, #tpu.memory_space<vmem>>, vector<8x8xf32>,
      %cst_54 = arith.constant 0.000000e+00 : f32
      %205 = vector.broadcast %cst_54 : f32 to vector<8x8xf32>
      %c0_55 = arith.constant 0 : index
      %c0_56 = arith.constant 0 : index
      %206 = vector.load %arg9[%c0_55, %c0_56] : memref<8x8xf32, #tpu.memory_space<vmem>>, vector<8x8xf32>
      tpu.vector_store %arg9[%c0_55, %c0_56], %205 {strides = array<i32>} : memref<8x8xf32, #tpu.memory_space<vmem>>, vector<8x8xf32>,
      %cst_57 = arith.constant 0.000000e+00 : f32
      %207 = vector.broadcast %cst_57 : f32 to vector<8x64xf32>
      %c0_58 = arith.constant 0 : index
      %c0_59 = arith.constant 0 : index
      %208 = vector.load %arg10[%c0_58, %c0_59] : memref<8x64xf32, #tpu.memory_space<vmem>>, vector<8x64xf32>
      tpu.vector_store %arg10[%c0_58, %c0_59], %207 {strides = array<i32>} : memref<8x64xf32, #tpu.memory_space<vmem>>, vector<8x64xf32>,
    } else {
    }
    %c0 = arith.constant 0 : index
    %c0_1 = arith.constant 0 : index
    %c0_2 = arith.constant 0 : index
    %3 = vector.load %arg3[%c0, %c0_1, %c0_2] : memref<1x8x64xf32, #tpu.memory_space<vmem>>, vector<1x8x64xf32>
    %4 = vector.shape_cast %3 : vector<1x8x64xf32> to vector<8x64xf32>
    %c0_3 = arith.constant 0 : index
    %c0_4 = arith.constant 0 : index
    %c0_5 = arith.constant 0 : index
    %5 = vector.load %arg4[%c0_3, %c0_4, %c0_5] : memref<1x16x128xf32, #tpu.memory_space<vmem>>, vector<1x16x128xf32>
    %6 = vector.shape_cast %5 : vector<1x16x128xf32> to vector<16x128xf32>
    %c0_6 = arith.constant 0 : index
    %c0_7 = arith.constant 0 : index
    %7 = vector.load %arg8[%c0_6, %c0_7] : memref<8x8xf32, #tpu.memory_space<vmem>>, vector<8x8xf32>
    %c0_8 = arith.constant 0 : index
    %c0_9 = arith.constant 0 : index
    %8 = vector.load %arg9[%c0_8, %c0_9] : memref<8x8xf32, #tpu.memory_space<vmem>>, vector<8x8xf32>
    %c0_10 = arith.constant 0 : index
    %c0_11 = arith.constant 0 : index
    %9 = vector.load %arg10[%c0_10, %c0_11] : memref<8x64xf32, #tpu.memory_space<vmem>>, vector<8x64xf32>
    %10 = vector.extract_strided_slice %4 {offsets = [0, 0], sizes = [8, 8], strides = [1, 1]} : vector<8x64xf32> to vector<8x8xf32>
    %11 = vector.extract_strided_slice %6 {offsets = [0, 0], sizes = [16, 8], strides = [1, 1]} : vector<16x128xf32> to vector<16x8xf32>
    %12 = vector.extract_strided_slice %6 {offsets = [0, 64], sizes = [16, 8], strides = [1, 1]} : vector<16x128xf32> to vector<16x8xf32>
    %cst = arith.constant dense<0.000000e+00> : vector<8x16xf32>
    %13 = tpu.matmul %10, %11, %cst {dimension_numbers = #tpu.dot_dimension_numbers<[1], [1], [0], [0], [0, 0, 1, 0], [], []>} : vector<8x8xf32>, vector<16x8xf32>, vector<8x16xf32> -> vector<8x16xf32>
    %14 = vector.extract_strided_slice %7 {offsets = [0, 0], sizes = [8, 1], strides = [1, 1]} : vector<8x8xf32> to vector<8x1xf32>
    %cst_12 = arith.constant dense<0xFF800000> : vector<8xf32>
    %15 = vector.multi_reduction <maximumf>, %13, %cst_12 [1] : vector<8x16xf32> to vector<8xf32>
    %16 = vector.shape_cast %15 : vector<8xf32> to vector<8x1xf32>
    %17 = arith.maximumf %14, %16 : vector<8x1xf32>
    %18 = arith.subf %14, %17 : vector<8x1xf32>
    %19 = math.exp %18 : vector<8x1xf32>
    %20 = vector.broadcast %17 : vector<8x1xf32> to vector<8x16xf32>
    %21 = arith.subf %13, %20 : vector<8x16xf32>
    %22 = math.exp %21 : vector<8x16xf32>
    %23 = vector.extract_strided_slice %8 {offsets = [0, 0], sizes = [8, 1], strides = [1, 1]} : vector<8x8xf32> to vector<8x1xf32>
    %24 = arith.mulf %19, %23 : vector<8x1xf32>
    %cst_13 = arith.constant dense<0.000000e+00> : vector<8xf32>
    %25 = vector.multi_reduction <add>, %22, %cst_13 [1] : vector<8x16xf32> to vector<8xf32>
    %26 = vector.shape_cast %25 : vector<8xf32> to vector<8x1xf32>
    %27 = arith.addf %24, %26 : vector<8x1xf32>
    %cst_14 = arith.constant dense<0.000000e+00> : vector<8x8xf32>
    %28 = tpu.matmul %22, %12, %cst_14 {dimension_numbers = #tpu.dot_dimension_numbers<[1], [0], [0], [1], [0, 0, 1, 1], [], []>} : vector<8x16xf32>, vector<16x8xf32>, vector<8x8xf32> -> vector<8x8xf32>
    %29 = vector.extract_strided_slice %9 {offsets = [0, 0], sizes = [8, 8], strides = [1, 1]} : vector<8x64xf32> to vector<8x8xf32>
    %30 = vector.broadcast %19 : vector<8x1xf32> to vector<8x8xf32>
    %31 = arith.mulf %30, %29 : vector<8x8xf32>
    %32 = arith.addf %31, %28 : vector<8x8xf32>
    %33 = vector.extract_strided_slice %4 {offsets = [0, 8], sizes = [8, 8], strides = [1, 1]} : vector<8x64xf32> to vector<8x8xf32>
    %34 = vector.extract_strided_slice %6 {offsets = [0, 8], sizes = [16, 8], strides = [1, 1]} : vector<16x128xf32> to vector<16x8xf32>
    %35 = vector.extract_strided_slice %6 {offsets = [0, 72], sizes = [16, 8], strides = [1, 1]} : vector<16x128xf32> to vector<16x8xf32>
    %cst_15 = arith.constant dense<0.000000e+00> : vector<8x16xf32>
    %36 = tpu.matmul %33, %34, %cst_15 {dimension_numbers = #tpu.dot_dimension_numbers<[1], [1], [0], [0], [0, 0, 1, 0], [], []>} : vector<8x8xf32>, vector<16x8xf32>, vector<8x16xf32> -> vector<8x16xf32>
    %37 = vector.extract_strided_slice %7 {offsets = [0, 1], sizes = [8, 1], strides = [1, 1]} : vector<8x8xf32> to vector<8x1xf32>
    %cst_16 = arith.constant dense<0xFF800000> : vector<8xf32>
    %38 = vector.multi_reduction <maximumf>, %36, %cst_16 [1] : vector<8x16xf32> to vector<8xf32>
    %39 = vector.shape_cast %38 : vector<8xf32> to vector<8x1xf32>
    %40 = arith.maximumf %37, %39 : vector<8x1xf32>
    %41 = arith.subf %37, %40 : vector<8x1xf32>
    %42 = math.exp %41 : vector<8x1xf32>
    %43 = vector.broadcast %40 : vector<8x1xf32> to vector<8x16xf32>
    %44 = arith.subf %36, %43 : vector<8x16xf32>
    %45 = math.exp %44 : vector<8x16xf32>
    %46 = vector.extract_strided_slice %8 {offsets = [0, 1], sizes = [8, 1], strides = [1, 1]} : vector<8x8xf32> to vector<8x1xf32>
    %47 = arith.mulf %42, %46 : vector<8x1xf32>
    %cst_17 = arith.constant dense<0.000000e+00> : vector<8xf32>
    %48 = vector.multi_reduction <add>, %45, %cst_17 [1] : vector<8x16xf32> to vector<8xf32>
    %49 = vector.shape_cast %48 : vector<8xf32> to vector<8x1xf32>
    %50 = arith.addf %47, %49 : vector<8x1xf32>
    %cst_18 = arith.constant dense<0.000000e+00> : vector<8x8xf32>
    %51 = tpu.matmul %45, %35, %cst_18 {dimension_numbers = #tpu.dot_dimension_numbers<[1], [0], [0], [1], [0, 0, 1, 1], [], []>} : vector<8x16xf32>, vector<16x8xf32>, vector<8x8xf32> -> vector<8x8xf32>
    %52 = vector.extract_strided_slice %9 {offsets = [0, 8], sizes = [8, 8], strides = [1, 1]} : vector<8x64xf32> to vector<8x8xf32>
    %53 = vector.broadcast %42 : vector<8x1xf32> to vector<8x8xf32>
    %54 = arith.mulf %53, %52 : vector<8x8xf32>
    %55 = arith.addf %54, %51 : vector<8x8xf32>
    %56 = vector.extract_strided_slice %4 {offsets = [0, 16], sizes = [8, 8], strides = [1, 1]} : vector<8x64xf32> to vector<8x8xf32>
    %57 = vector.extract_strided_slice %6 {offsets = [0, 16], sizes = [16, 8], strides = [1, 1]} : vector<16x128xf32> to vector<16x8xf32>
    %58 = vector.extract_strided_slice %6 {offsets = [0, 80], sizes = [16, 8], strides = [1, 1]} : vector<16x128xf32> to vector<16x8xf32>
    %cst_19 = arith.constant dense<0.000000e+00> : vector<8x16xf32>
    %59 = tpu.matmul %56, %57, %cst_19 {dimension_numbers = #tpu.dot_dimension_numbers<[1], [1], [0], [0], [0, 0, 1, 0], [], []>} : vector<8x8xf32>, vector<16x8xf32>, vector<8x16xf32> -> vector<8x16xf32>
    %60 = vector.extract_strided_slice %7 {offsets = [0, 2], sizes = [8, 1], strides = [1, 1]} : vector<8x8xf32> to vector<8x1xf32>
    %cst_20 = arith.constant dense<0xFF800000> : vector<8xf32>
    %61 = vector.multi_reduction <maximumf>, %59, %cst_20 [1] : vector<8x16xf32> to vector<8xf32>
    %62 = vector.shape_cast %61 : vector<8xf32> to vector<8x1xf32>
    %63 = arith.maximumf %60, %62 : vector<8x1xf32>
    %64 = arith.subf %60, %63 : vector<8x1xf32>
    %65 = math.exp %64 : vector<8x1xf32>
    %66 = vector.broadcast %63 : vector<8x1xf32> to vector<8x16xf32>
    %67 = arith.subf %59, %66 : vector<8x16xf32>
    %68 = math.exp %67 : vector<8x16xf32>
    %69 = vector.extract_strided_slice %8 {offsets = [0, 2], sizes = [8, 1], strides = [1, 1]} : vector<8x8xf32> to vector<8x1xf32>
    %70 = arith.mulf %65, %69 : vector<8x1xf32>
    %cst_21 = arith.constant dense<0.000000e+00> : vector<8xf32>
    %71 = vector.multi_reduction <add>, %68, %cst_21 [1] : vector<8x16xf32> to vector<8xf32>
    %72 = vector.shape_cast %71 : vector<8xf32> to vector<8x1xf32>
    %73 = arith.addf %70, %72 : vector<8x1xf32>
    %cst_22 = arith.constant dense<0.000000e+00> : vector<8x8xf32>
    %74 = tpu.matmul %68, %58, %cst_22 {dimension_numbers = #tpu.dot_dimension_numbers<[1], [0], [0], [1], [0, 0, 1, 1], [], []>} : vector<8x16xf32>, vector<16x8xf32>, vector<8x8xf32> -> vector<8x8xf32>
    %75 = vector.extract_strided_slice %9 {offsets = [0, 16], sizes = [8, 8], strides = [1, 1]} : vector<8x64xf32> to vector<8x8xf32>
    %76 = vector.broadcast %65 : vector<8x1xf32> to vector<8x8xf32>
    %77 = arith.mulf %76, %75 : vector<8x8xf32>
    %78 = arith.addf %77, %74 : vector<8x8xf32>
    %79 = vector.extract_strided_slice %4 {offsets = [0, 24], sizes = [8, 8], strides = [1, 1]} : vector<8x64xf32> to vector<8x8xf32>
    %80 = vector.extract_strided_slice %6 {offsets = [0, 24], sizes = [16, 8], strides = [1, 1]} : vector<16x128xf32> to vector<16x8xf32>
    %81 = vector.extract_strided_slice %6 {offsets = [0, 88], sizes = [16, 8], strides = [1, 1]} : vector<16x128xf32> to vector<16x8xf32>
    %cst_23 = arith.constant dense<0.000000e+00> : vector<8x16xf32>
    %82 = tpu.matmul %79, %80, %cst_23 {dimension_numbers = #tpu.dot_dimension_numbers<[1], [1], [0], [0], [0, 0, 1, 0], [], []>} : vector<8x8xf32>, vector<16x8xf32>, vector<8x16xf32> -> vector<8x16xf32>
    %83 = vector.extract_strided_slice %7 {offsets = [0, 3], sizes = [8, 1], strides = [1, 1]} : vector<8x8xf32> to vector<8x1xf32>
    %cst_24 = arith.constant dense<0xFF800000> : vector<8xf32>
    %84 = vector.multi_reduction <maximumf>, %82, %cst_24 [1] : vector<8x16xf32> to vector<8xf32>
    %85 = vector.shape_cast %84 : vector<8xf32> to vector<8x1xf32>
    %86 = arith.maximumf %83, %85 : vector<8x1xf32>
    %87 = arith.subf %83, %86 : vector<8x1xf32>
    %88 = math.exp %87 : vector<8x1xf32>
    %89 = vector.broadcast %86 : vector<8x1xf32> to vector<8x16xf32>
    %90 = arith.subf %82, %89 : vector<8x16xf32>
    %91 = math.exp %90 : vector<8x16xf32>
    %92 = vector.extract_strided_slice %8 {offsets = [0, 3], sizes = [8, 1], strides = [1, 1]} : vector<8x8xf32> to vector<8x1xf32>
    %93 = arith.mulf %88, %92 : vector<8x1xf32>
    %cst_25 = arith.constant dense<0.000000e+00> : vector<8xf32>
    %94 = vector.multi_reduction <add>, %91, %cst_25 [1] : vector<8x16xf32> to vector<8xf32>
    %95 = vector.shape_cast %94 : vector<8xf32> to vector<8x1xf32>
    %96 = arith.addf %93, %95 : vector<8x1xf32>
    %cst_26 = arith.constant dense<0.000000e+00> : vector<8x8xf32>
    %97 = tpu.matmul %91, %81, %cst_26 {dimension_numbers = #tpu.dot_dimension_numbers<[1], [0], [0], [1], [0, 0, 1, 1], [], []>} : vector<8x16xf32>, vector<16x8xf32>, vector<8x8xf32> -> vector<8x8xf32>
    %98 = vector.extract_strided_slice %9 {offsets = [0, 24], sizes = [8, 8], strides = [1, 1]} : vector<8x64xf32> to vector<8x8xf32>
    %99 = vector.broadcast %88 : vector<8x1xf32> to vector<8x8xf32>
    %100 = arith.mulf %99, %98 : vector<8x8xf32>
    %101 = arith.addf %100, %97 : vector<8x8xf32>
    %102 = vector.extract_strided_slice %4 {offsets = [0, 32], sizes = [8, 8], strides = [1, 1]} : vector<8x64xf32> to vector<8x8xf32>
    %103 = vector.extract_strided_slice %6 {offsets = [0, 32], sizes = [16, 8], strides = [1, 1]} : vector<16x128xf32> to vector<16x8xf32>
    %104 = vector.extract_strided_slice %6 {offsets = [0, 96], sizes = [16, 8], strides = [1, 1]} : vector<16x128xf32> to vector<16x8xf32>
    %cst_27 = arith.constant dense<0.000000e+00> : vector<8x16xf32>
    %105 = tpu.matmul %102, %103, %cst_27 {dimension_numbers = #tpu.dot_dimension_numbers<[1], [1], [0], [0], [0, 0, 1, 0], [], []>} : vector<8x8xf32>, vector<16x8xf32>, vector<8x16xf32> -> vector<8x16xf32>
    %106 = vector.extract_strided_slice %7 {offsets = [0, 4], sizes = [8, 1], strides = [1, 1]} : vector<8x8xf32> to vector<8x1xf32>
    %cst_28 = arith.constant dense<0xFF800000> : vector<8xf32>
    %107 = vector.multi_reduction <maximumf>, %105, %cst_28 [1] : vector<8x16xf32> to vector<8xf32>
    %108 = vector.shape_cast %107 : vector<8xf32> to vector<8x1xf32>
    %109 = arith.maximumf %106, %108 : vector<8x1xf32>
    %110 = arith.subf %106, %109 : vector<8x1xf32>
    %111 = math.exp %110 : vector<8x1xf32>
    %112 = vector.broadcast %109 : vector<8x1xf32> to vector<8x16xf32>
    %113 = arith.subf %105, %112 : vector<8x16xf32>
    %114 = math.exp %113 : vector<8x16xf32>
    %115 = vector.extract_strided_slice %8 {offsets = [0, 4], sizes = [8, 1], strides = [1, 1]} : vector<8x8xf32> to vector<8x1xf32>
    %116 = arith.mulf %111, %115 : vector<8x1xf32>
    %cst_29 = arith.constant dense<0.000000e+00> : vector<8xf32>
    %117 = vector.multi_reduction <add>, %114, %cst_29 [1] : vector<8x16xf32> to vector<8xf32>
    %118 = vector.shape_cast %117 : vector<8xf32> to vector<8x1xf32>
    %119 = arith.addf %116, %118 : vector<8x1xf32>
    %cst_30 = arith.constant dense<0.000000e+00> : vector<8x8xf32>
    %120 = tpu.matmul %114, %104, %cst_30 {dimension_numbers = #tpu.dot_dimension_numbers<[1], [0], [0], [1], [0, 0, 1, 1], [], []>} : vector<8x16xf32>, vector<16x8xf32>, vector<8x8xf32> -> vector<8x8xf32>
    %121 = vector.extract_strided_slice %9 {offsets = [0, 32], sizes = [8, 8], strides = [1, 1]} : vector<8x64xf32> to vector<8x8xf32>
    %122 = vector.broadcast %111 : vector<8x1xf32> to vector<8x8xf32>
    %123 = arith.mulf %122, %121 : vector<8x8xf32>
    %124 = arith.addf %123, %120 : vector<8x8xf32>
    %125 = vector.extract_strided_slice %4 {offsets = [0, 40], sizes = [8, 8], strides = [1, 1]} : vector<8x64xf32> to vector<8x8xf32>
    %126 = vector.extract_strided_slice %6 {offsets = [0, 40], sizes = [16, 8], strides = [1, 1]} : vector<16x128xf32> to vector<16x8xf32>
    %127 = vector.extract_strided_slice %6 {offsets = [0, 104], sizes = [16, 8], strides = [1, 1]} : vector<16x128xf32> to vector<16x8xf32>
    %cst_31 = arith.constant dense<0.000000e+00> : vector<8x16xf32>
    %128 = tpu.matmul %125, %126, %cst_31 {dimension_numbers = #tpu.dot_dimension_numbers<[1], [1], [0], [0], [0, 0, 1, 0], [], []>} : vector<8x8xf32>, vector<16x8xf32>, vector<8x16xf32> -> vector<8x16xf32>
    %129 = vector.extract_strided_slice %7 {offsets = [0, 5], sizes = [8, 1], strides = [1, 1]} : vector<8x8xf32> to vector<8x1xf32>
    %cst_32 = arith.constant dense<0xFF800000> : vector<8xf32>
    %130 = vector.multi_reduction <maximumf>, %128, %cst_32 [1] : vector<8x16xf32> to vector<8xf32>
    %131 = vector.shape_cast %130 : vector<8xf32> to vector<8x1xf32>
    %132 = arith.maximumf %129, %131 : vector<8x1xf32>
    %133 = arith.subf %129, %132 : vector<8x1xf32>
    %134 = math.exp %133 : vector<8x1xf32>
    %135 = vector.broadcast %132 : vector<8x1xf32> to vector<8x16xf32>
    %136 = arith.subf %128, %135 : vector<8x16xf32>
    %137 = math.exp %136 : vector<8x16xf32>
    %138 = vector.extract_strided_slice %8 {offsets = [0, 5], sizes = [8, 1], strides = [1, 1]} : vector<8x8xf32> to vector<8x1xf32>
    %139 = arith.mulf %134, %138 : vector<8x1xf32>
    %cst_33 = arith.constant dense<0.000000e+00> : vector<8xf32>
    %140 = vector.multi_reduction <add>, %137, %cst_33 [1] : vector<8x16xf32> to vector<8xf32>
    %141 = vector.shape_cast %140 : vector<8xf32> to vector<8x1xf32>
    %142 = arith.addf %139, %141 : vector<8x1xf32>
    %cst_34 = arith.constant dense<0.000000e+00> : vector<8x8xf32>
    %143 = tpu.matmul %137, %127, %cst_34 {dimension_numbers = #tpu.dot_dimension_numbers<[1], [0], [0], [1], [0, 0, 1, 1], [], []>} : vector<8x16xf32>, vector<16x8xf32>, vector<8x8xf32> -> vector<8x8xf32>
    %144 = vector.extract_strided_slice %9 {offsets = [0, 40], sizes = [8, 8], strides = [1, 1]} : vector<8x64xf32> to vector<8x8xf32>
    %145 = vector.broadcast %134 : vector<8x1xf32> to vector<8x8xf32>
    %146 = arith.mulf %145, %144 : vector<8x8xf32>
    %147 = arith.addf %146, %143 : vector<8x8xf32>
    %148 = vector.extract_strided_slice %4 {offsets = [0, 48], sizes = [8, 8], strides = [1, 1]} : vector<8x64xf32> to vector<8x8xf32>
    %149 = vector.extract_strided_slice %6 {offsets = [0, 48], sizes = [16, 8], strides = [1, 1]} : vector<16x128xf32> to vector<16x8xf32>
    %150 = vector.extract_strided_slice %6 {offsets = [0, 112], sizes = [16, 8], strides = [1, 1]} : vector<16x128xf32> to vector<16x8xf32>
    %cst_35 = arith.constant dense<0.000000e+00> : vector<8x16xf32>
    %151 = tpu.matmul %148, %149, %cst_35 {dimension_numbers = #tpu.dot_dimension_numbers<[1], [1], [0], [0], [0, 0, 1, 0], [], []>} : vector<8x8xf32>, vector<16x8xf32>, vector<8x16xf32> -> vector<8x16xf32>
    %152 = vector.extract_strided_slice %7 {offsets = [0, 6], sizes = [8, 1], strides = [1, 1]} : vector<8x8xf32> to vector<8x1xf32>
    %cst_36 = arith.constant dense<0xFF800000> : vector<8xf32>
    %153 = vector.multi_reduction <maximumf>, %151, %cst_36 [1] : vector<8x16xf32> to vector<8xf32>
    %154 = vector.shape_cast %153 : vector<8xf32> to vector<8x1xf32>
    %155 = arith.maximumf %152, %154 : vector<8x1xf32>
    %156 = arith.subf %152, %155 : vector<8x1xf32>
    %157 = math.exp %156 : vector<8x1xf32>
    %158 = vector.broadcast %155 : vector<8x1xf32> to vector<8x16xf32>
    %159 = arith.subf %151, %158 : vector<8x16xf32>
    %160 = math.exp %159 : vector<8x16xf32>
    %161 = vector.extract_strided_slice %8 {offsets = [0, 6], sizes = [8, 1], strides = [1, 1]} : vector<8x8xf32> to vector<8x1xf32>
    %162 = arith.mulf %157, %161 : vector<8x1xf32>
    %cst_37 = arith.constant dense<0.000000e+00> : vector<8xf32>
    %163 = vector.multi_reduction <add>, %160, %cst_37 [1] : vector<8x16xf32> to vector<8xf32>
    %164 = vector.shape_cast %163 : vector<8xf32> to vector<8x1xf32>
    %165 = arith.addf %162, %164 : vector<8x1xf32>
    %cst_38 = arith.constant dense<0.000000e+00> : vector<8x8xf32>
    %166 = tpu.matmul %160, %150, %cst_38 {dimension_numbers = #tpu.dot_dimension_numbers<[1], [0], [0], [1], [0, 0, 1, 1], [], []>} : vector<8x16xf32>, vector<16x8xf32>, vector<8x8xf32> -> vector<8x8xf32>
    %167 = vector.extract_strided_slice %9 {offsets = [0, 48], sizes = [8, 8], strides = [1, 1]} : vector<8x64xf32> to vector<8x8xf32>
    %168 = vector.broadcast %157 : vector<8x1xf32> to vector<8x8xf32>
    %169 = arith.mulf %168, %167 : vector<8x8xf32>
    %170 = arith.addf %169, %166 : vector<8x8xf32>
    %171 = vector.extract_strided_slice %4 {offsets = [0, 56], sizes = [8, 8], strides = [1, 1]} : vector<8x64xf32> to vector<8x8xf32>
    %172 = vector.extract_strided_slice %6 {offsets = [0, 56], sizes = [16, 8], strides = [1, 1]} : vector<16x128xf32> to vector<16x8xf32>
    %173 = vector.extract_strided_slice %6 {offsets = [0, 120], sizes = [16, 8], strides = [1, 1]} : vector<16x128xf32> to vector<16x8xf32>
    %cst_39 = arith.constant dense<0.000000e+00> : vector<8x16xf32>
    %174 = tpu.matmul %171, %172, %cst_39 {dimension_numbers = #tpu.dot_dimension_numbers<[1], [1], [0], [0], [0, 0, 1, 0], [], []>} : vector<8x8xf32>, vector<16x8xf32>, vector<8x16xf32> -> vector<8x16xf32>
    %175 = vector.extract_strided_slice %7 {offsets = [0, 7], sizes = [8, 1], strides = [1, 1]} : vector<8x8xf32> to vector<8x1xf32>
    %cst_40 = arith.constant dense<0xFF800000> : vector<8xf32>
    %176 = vector.multi_reduction <maximumf>, %174, %cst_40 [1] : vector<8x16xf32> to vector<8xf32>
    %177 = vector.shape_cast %176 : vector<8xf32> to vector<8x1xf32>
    %178 = arith.maximumf %175, %177 : vector<8x1xf32>
    %179 = arith.subf %175, %178 : vector<8x1xf32>
    %180 = math.exp %179 : vector<8x1xf32>
    %181 = vector.broadcast %178 : vector<8x1xf32> to vector<8x16xf32>
    %182 = arith.subf %174, %181 : vector<8x16xf32>
    %183 = math.exp %182 : vector<8x16xf32>
    %184 = vector.extract_strided_slice %8 {offsets = [0, 7], sizes = [8, 1], strides = [1, 1]} : vector<8x8xf32> to vector<8x1xf32>
    %185 = arith.mulf %180, %184 : vector<8x1xf32>
    %cst_41 = arith.constant dense<0.000000e+00> : vector<8xf32>
    %186 = vector.multi_reduction <add>, %183, %cst_41 [1] : vector<8x16xf32> to vector<8xf32>
    %187 = vector.shape_cast %186 : vector<8xf32> to vector<8x1xf32>
    %188 = arith.addf %185, %187 : vector<8x1xf32>
    %cst_42 = arith.constant dense<0.000000e+00> : vector<8x8xf32>
    %189 = tpu.matmul %183, %173, %cst_42 {dimension_numbers = #tpu.dot_dimension_numbers<[1], [0], [0], [1], [0, 0, 1, 1], [], []>} : vector<8x16xf32>, vector<16x8xf32>, vector<8x8xf32> -> vector<8x8xf32>
    %190 = vector.extract_strided_slice %9 {offsets = [0, 56], sizes = [8, 8], strides = [1, 1]} : vector<8x64xf32> to vector<8x8xf32>
    %191 = vector.broadcast %180 : vector<8x1xf32> to vector<8x8xf32>
    %192 = arith.mulf %191, %190 : vector<8x8xf32>
    %193 = arith.addf %192, %189 : vector<8x8xf32>
    %194 = tpu.concatenate %17, %40, %63, %86, %109, %132, %155, %178 in 1 : vector<8x1xf32>, vector<8x1xf32>, vector<8x1xf32>, vector<8x1xf32>, vector<8x1xf32>, vector<8x1xf32>, vector<8x1xf32>, vector<8x1xf32> -> vector<8x8xf32>
    %c0_43 = arith.constant 0 : index
    %c0_44 = arith.constant 0 : index
    %195 = vector.load %arg8[%c0_43, %c0_44] : memref<8x8xf32, #tpu.memory_space<vmem>>, vector<8x8xf32>
    tpu.vector_store %arg8[%c0_43, %c0_44], %194 {strides = array<i32>} : memref<8x8xf32, #tpu.memory_space<vmem>>, vector<8x8xf32>,
    %196 = tpu.concatenate %27, %50, %73, %96, %119, %142, %165, %188 in 1 : vector<8x1xf32>, vector<8x1xf32>, vector<8x1xf32>, vector<8x1xf32>, vector<8x1xf32>, vector<8x1xf32>, vector<8x1xf32>, vector<8x1xf32> -> vector<8x8xf32>
    %c0_45 = arith.constant 0 : index
    %c0_46 = arith.constant 0 : index
    %197 = vector.load %arg9[%c0_45, %c0_46] : memref<8x8xf32, #tpu.memory_space<vmem>>, vector<8x8xf32>
    tpu.vector_store %arg9[%c0_45, %c0_46], %196 {strides = array<i32>} : memref<8x8xf32, #tpu.memory_space<vmem>>, vector<8x8xf32>,
    %198 = tpu.concatenate %32, %55, %78, %101, %124, %147, %170, %193 in 1 : vector<8x8xf32>, vector<8x8xf32>, vector<8x8xf32>, vector<8x8xf32>, vector<8x8xf32>, vector<8x8xf32>, vector<8x8xf32>, vector<8x8xf32> -> vector<8x64xf32>
    %c0_47 = arith.constant 0 : index
    %c0_48 = arith.constant 0 : index
    %199 = vector.load %arg10[%c0_47, %c0_48] : memref<8x64xf32, #tpu.memory_space<vmem>>, vector<8x64xf32>
    tpu.vector_store %arg10[%c0_47, %c0_48], %198 {strides = array<i32>} : memref<8x64xf32, #tpu.memory_space<vmem>>, vector<8x64xf32>,
    %c0_i32_49 = arith.constant 0 : i32
    %200 = arith.cmpi eq, %arg2, %c0_i32_49 : i32
    %201 = arith.extui %200 : i1 to i32
    %c0_i32_50 = arith.constant 0 : i32
    %202 = arith.cmpi ne, %201, %c0_i32_50 : i32
    scf.if %202 {
      %c0_51 = arith.constant 0 : index
      %c0_52 = arith.constant 0 : index
      %203 = vector.load %arg9[%c0_51, %c0_52] : memref<8x8xf32, #tpu.memory_space<vmem>>, vector<8x8xf32>
      %204 = tpu.reciprocal %203 {approx = true} : vector<8x8xf32> -> vector<8x8xf32>
      %c0_53 = arith.constant 0 : index
      %c0_54 = arith.constant 0 : index
      %205 = vector.load %arg10[%c0_53, %c0_54] : memref<8x64xf32, #tpu.memory_space<vmem>>, vector<8x64xf32>
      %206 = vector.extract_strided_slice %205 {offsets = [0, 0], sizes = [8, 8], strides = [1, 1]} : vector<8x64xf32> to vector<8x8xf32>
      %207 = vector.extract_strided_slice %204 {offsets = [0, 0], sizes = [8, 1], strides = [1, 1]} : vector<8x8xf32> to vector<8x1xf32>
      %208 = vector.broadcast %207 : vector<8x1xf32> to vector<8x8xf32>
      %209 = arith.mulf %206, %208 : vector<8x8xf32>
      %210 = vector.extract_strided_slice %205 {offsets = [0, 8], sizes = [8, 8], strides = [1, 1]} : vector<8x64xf32> to vector<8x8xf32>
      %211 = vector.extract_strided_slice %204 {offsets = [0, 1], sizes = [8, 1], strides = [1, 1]} : vector<8x8xf32> to vector<8x1xf32>
      %212 = vector.broadcast %211 : vector<8x1xf32> to vector<8x8xf32>
      %213 = arith.mulf %210, %212 : vector<8x8xf32>
      %214 = vector.extract_strided_slice %205 {offsets = [0, 16], sizes = [8, 8], strides = [1, 1]} : vector<8x64xf32> to vector<8x8xf32>
      %215 = vector.extract_strided_slice %204 {offsets = [0, 2], sizes = [8, 1], strides = [1, 1]} : vector<8x8xf32> to vector<8x1xf32>
      %216 = vector.broadcast %215 : vector<8x1xf32> to vector<8x8xf32>
      %217 = arith.mulf %214, %216 : vector<8x8xf32>
      %218 = vector.extract_strided_slice %205 {offsets = [0, 24], sizes = [8, 8], strides = [1, 1]} : vector<8x64xf32> to vector<8x8xf32>
      %219 = vector.extract_strided_slice %204 {offsets = [0, 3], sizes = [8, 1], strides = [1, 1]} : vector<8x8xf32> to vector<8x1xf32>
      %220 = vector.broadcast %219 : vector<8x1xf32> to vector<8x8xf32>
      %221 = arith.mulf %218, %220 : vector<8x8xf32>
      %222 = vector.extract_strided_slice %205 {offsets = [0, 32], sizes = [8, 8], strides = [1, 1]} : vector<8x64xf32> to vector<8x8xf32>
      %223 = vector.extract_strided_slice %204 {offsets = [0, 4], sizes = [8, 1], strides = [1, 1]} : vector<8x8xf32> to vector<8x1xf32>
      %224 = vector.broadcast %223 : vector<8x1xf32> to vector<8x8xf32>
      %225 = arith.mulf %222, %224 : vector<8x8xf32>
      %226 = vector.extract_strided_slice %205 {offsets = [0, 40], sizes = [8, 8], strides = [1, 1]} : vector<8x64xf32> to vector<8x8xf32>
      %227 = vector.extract_strided_slice %204 {offsets = [0, 5], sizes = [8, 1], strides = [1, 1]} : vector<8x8xf32> to vector<8x1xf32>
      %228 = vector.broadcast %227 : vector<8x1xf32> to vector<8x8xf32>
      %229 = arith.mulf %226, %228 : vector<8x8xf32>
      %230 = vector.extract_strided_slice %205 {offsets = [0, 48], sizes = [8, 8], strides = [1, 1]} : vector<8x64xf32> to vector<8x8xf32>
      %231 = vector.extract_strided_slice %204 {offsets = [0, 6], sizes = [8, 1], strides = [1, 1]} : vector<8x8xf32> to vector<8x1xf32>
      %232 = vector.broadcast %231 : vector<8x1xf32> to vector<8x8xf32>
      %233 = arith.mulf %230, %232 : vector<8x8xf32>
      %234 = vector.extract_strided_slice %205 {offsets = [0, 56], sizes = [8, 8], strides = [1, 1]} : vector<8x64xf32> to vector<8x8xf32>
      %235 = vector.extract_strided_slice %204 {offsets = [0, 7], sizes = [8, 1], strides = [1, 1]} : vector<8x8xf32> to vector<8x1xf32>
      %236 = vector.broadcast %235 : vector<8x1xf32> to vector<8x8xf32>
      %237 = arith.mulf %234, %236 : vector<8x8xf32>
      %238 = tpu.concatenate %209, %213, %217, %221, %225, %229, %233, %237 in 1 : vector<8x8xf32>, vector<8x8xf32>, vector<8x8xf32>, vector<8x8xf32>, vector<8x8xf32>, vector<8x8xf32>, vector<8x8xf32>, vector<8x8xf32> -> vector<8x64xf32>
      %c0_55 = arith.constant 0 : index
      %c0_56 = arith.constant 0 : index
      %239 = vector.load %arg5[%c0_55, %c0_56] : memref<64x128xf32, #tpu.memory_space<vmem>>, vector<64x128xf32>
      %cst_57 = arith.constant dense<0.000000e+00> : vector<8x128xf32>
      %240 = tpu.matmul %238, %239, %cst_57 {dimension_numbers = #tpu.dot_dimension_numbers<[1], [0], [0], [1], [0, 0, 1, 1], [], []>} : vector<8x64xf32>, vector<64x128xf32>, vector<8x128xf32> -> vector<8x128xf32>
      %c0_58 = arith.constant 0 : index
      %c0_59 = arith.constant 0 : index
      %241 = vector.load %arg6[%c0_58, %c0_59] : memref<1x128xf32, #tpu.memory_space<vmem>>, vector<1x128xf32>
      %242 = vector.broadcast %241 : vector<1x128xf32> to vector<8x128xf32>
      %243 = arith.addf %240, %242 : vector<8x128xf32>
      %c0_60 = arith.constant 0 : index
      %c0_61 = arith.constant 0 : index
      %c0_62 = arith.constant 0 : index
      %244 = vector.load %arg7[%c0_60, %c0_61, %c0_62] : memref<1x8x128xf32, #tpu.memory_space<vmem>>, vector<1x8x128xf32>
      %245 = vector.shape_cast %244 : vector<1x8x128xf32> to vector<8x128xf32>
      %246 = vector.shape_cast %243 : vector<8x128xf32> to vector<1x8x128xf32>
      tpu.vector_store %arg7[%c0_60, %c0_61, %c0_62], %246 {strides = array<i32>} : memref<1x8x128xf32, #tpu.memory_space<vmem>>, vector<1x8x128xf32>,
    } else {
    }
    return
  }
  func.func @transform_0(%arg0: i32, %arg1: i32, %arg2: i32) -> (i32, i32, i32) {
    %c0_i32 = arith.constant 0 : i32
    %c0_i32_0 = arith.constant 0 : i32
    return %arg0, %arg1, %c0_i32 : i32, i32, i32
  }
  func.func @transform_1(%arg0: i32, %arg1: i32, %arg2: i32) -> (i32, i32, i32) {
    %c0_i32 = arith.constant 0 : i32
    %c0_i32_0 = arith.constant 0 : i32
    return %arg0, %arg2, %c0_i32 : i32, i32, i32
  }
  func.func @transform_2(%arg0: i32, %arg1: i32, %arg2: i32) -> (i32, i32) {
    %c0_i32 = arith.constant 0 : i32
    %c0_i32_0 = arith.constant 0 : i32
    %c0_i32_1 = arith.constant 0 : i32
    return %c0_i32, %c0_i32_0 : i32, i32
  }
  func.func @transform_3(%arg0: i32, %arg1: i32, %arg2: i32) -> (i32, i32) {
    %c0_i32 = arith.constant 0 : i32
    %c0_i32_0 = arith.constant 0 : i32
    %c0_i32_1 = arith.constant 0 : i32
    return %c0_i32, %c0_i32_0 : i32, i32
  }
  func.func @transform_4(%arg0: i32, %arg1: i32, %arg2: i32) -> (i32, i32, i32) {
    %c0_i32 = arith.constant 0 : i32
    %c0_i32_0 = arith.constant 0 : i32
    return %arg0, %arg1, %c0_i32 : i32, i32, i32
  }
}

</mosaic_0001>

<llo_original>
// kernel: custom_multihead_attention.4
$region0: #{custom_multihead_attention.4}
  #allocation0 [shape = 'u32[]', space=smem, size = 0x4, offset = 0x4, fixed_abs, tag = 'smem constant byte address 0x4 - core index']
  #allocation1 [shape = 'u32[144,128]{1,0:T(1,128)}', space=vmem, size = 0x12000, scoped, tag = 'internal scratch']
  %s0 = inlined_call_operand.vmem [shape: f32[32,32], index: 0, kind: input, shape index: {}]
  %s1 = inlined_call_operand.vmem [shape: f32[32,128], index: 1, kind: input, shape index: {}]
  %s2 = inlined_call_operand.vmem [shape: f32[1,128], index: 2, kind: input, shape index: {}]
  %s3 = inlined_call_operand.vmem [shape: f32[32,128], index: 3, kind: output, shape index: {}]
  %s4 = sld [smem:[#allocation0]]
  $region22: #{custom_multihead_attention.4} parent=0
    _
  %s6 = ssub.s32 1, %s4
  %s7 = scalar_select 0, %s6, %s4
  // Predicated region
  $region2: #{custom_multihead_attention.4} parent=0 // pred_check
    _
  $region3: #{custom_multihead_attention.4} parent=0 // pred_check_branch
    %9 = sbr.rel (0) target = $region5
  $region4: #{custom_multihead_attention.4} parent=0 // pred_region
    _
  $region5: #{custom_multihead_attention.4} parent=0 // pred_fallthru
    _
  // Predicated region
  $region6: #{custom_multihead_attention.4} parent=0 // pred_check
    _
  $region7: #{custom_multihead_attention.4} parent=0 // pred_check_branch
    %11 = sbr.rel (0) target = $region9
  $region8: #{custom_multihead_attention.4} parent=0 // pred_region
    _
  $region9: #{custom_multihead_attention.4} parent=0 // pred_fallthru
    _
  // Predicated region
  $region10: #{custom_multihead_attention.4} parent=0 // pred_check
    _
  $region11: #{custom_multihead_attention.4} parent=0 // pred_check_branch
    %13 = sbr.rel (0) target = $region13
  $region12: #{custom_multihead_attention.4} parent=0 // pred_region
    _
  $region13: #{custom_multihead_attention.4} parent=0 // pred_fallthru
    _
  %v14 = vld [vmem:[%s0] sm:$0xff]
  %v15 = vld [vmem:[%s0 + $0x8] sm:$0xff]
  %v16 = vld [vmem:[%s0 + $0x10] sm:$0xff]
  %v17 = vld [vmem:[%s0 + $0x18] sm:$0xff]
  %v18 = vld [vmem:[%s1] sm:$0xff]
  %v19 = vld [vmem:[%s1 + $0x8] sm:$0xff]
  %v20 = vld [vmem:[%s1 + $0x10] sm:$0xff]
  %v21 = vld [vmem:[%s1 + $0x18] sm:$0xff]
  %v22 = vld [vmem:[%s2] sm:$0x1]
  %v24 = vlaneseq
  %v25 = vshrl.u32 %v24, 7
  %v26 = vsub.s32 0, %v25
  %v27 = vrot.slane %v22, %v26
  %vm29 = vcmask 261120
  %v31 = vsel %vm29, %v14, 0
  %v34 = vsel %vm29, %v15, 0
  %v37 = vsel %vm29, %v16, 0
  %v40 = vsel %vm29, %v17, 0
  %42 = vmatprep.subr.mxu0 0.0
  %43 = vmatpush1.msra.mxu0 0.0
  %44 = vmatprep.subr.mxu0 0.0
  %45 = vmatpush1.msra.mxu0 0.0
  %46 = vmatprep.subr.mxu0 0.0
  %47 = vmatpush1.msra.mxu0 0.0
  %48 = vmatprep.subr.mxu0 0.0
  %49 = vmatpush1.msra.mxu0 0.0
  %50 = vmatprep.subr.mxu0 0.0
  %51 = vmatpush1.msra.mxu0 0.0
  %52 = vmatprep.subr.mxu0 0.0
  %53 = vmatpush1.msra.mxu0 0.0
  %54 = vmatprep.subr.mxu0 0.0
  %55 = vmatpush1.msra.mxu0 0.0
  %56 = vmatprep.subr.mxu0 0.0
  %57 = vmatpush1.msra.mxu0 0.0
  %58 = vmatprep.subr.mxu0 0.0
  %59 = vmatpush1.msra.mxu0 0.0
  %60 = vmatprep.subr.mxu0 0.0
  %61 = vmatpush1.msra.mxu0 0.0
  %62 = vmatprep.subr.mxu0 0.0
  %63 = vmatpush1.msra.mxu0 0.0
  %64 = vmatprep.subr.mxu0 0.0
  %65 = vmatpush1.msra.mxu0 0.0
  %66 = vmatprep.subr.mxu0 0.0
  %67 = vmatpush1.msra.mxu0 %v21
  %68 = vmatprep.subr.mxu0 0.0
  %69 = vmatpush1.msra.mxu0 %v20
  %70 = vmatprep.subr.mxu0 0.0
  %71 = vmatpush1.msra.mxu0 %v19
  %72 = vmatprep.subr.mxu0 0.0
  %73 = vmatpush1.msra.mxu0 %v18
  %74 = vmatprep.subr.mxu0 0.0
  %75 = vmatpush2.msra.mxu0 0.0
  %76 = vmatprep.subr.mxu0 0.0
  %77 = vmatpush2.msra.mxu0 0.0
  %78 = vmatprep.subr.mxu0 0.0
  %79 = vmatpush2.msra.mxu0 0.0
  %80 = vmatprep.subr.mxu0 0.0
  %81 = vmatpush2.msra.mxu0 0.0
  %82 = vmatprep.subr.mxu0 0.0
  %83 = vmatpush2.msra.mxu0 0.0
  %84 = vmatprep.subr.mxu0 0.0
  %85 = vmatpush2.msra.mxu0 0.0
  %86 = vmatprep.subr.mxu0 0.0
  %87 = vmatpush2.msra.mxu0 0.0
  %88 = vmatprep.subr.mxu0 0.0
  %89 = vmatpush2.msra.mxu0 0.0
  %90 = vmatprep.subr.mxu0 0.0
  %91 = vmatpush2.msra.mxu0 0.0
  %92 = vmatprep.subr.mxu0 0.0
  %93 = vmatpush2.msra.mxu0 0.0
  %94 = vmatprep.subr.mxu0 0.0
  %95 = vmatpush2.msra.mxu0 0.0
  %96 = vmatprep.subr.mxu0 0.0
  %97 = vmatpush2.msra.mxu0 0.0
  %98 = vmatprep.subr.mxu0 0.0
  %99 = vmatpush2.msra.mxu0 0.0
  %100 = vmatprep.subr.mxu0 0.0
  %101 = vmatpush2.msra.mxu0 0.0
  %102 = vmatprep.subr.mxu0 0.0
  %103 = vmatpush2.msra.mxu0 0.0
  %104 = vmatprep.subr.mxu0 0.0
  %105 = vmatpush2.msra.mxu0 0.0
  %106 = vmatprep.mubr.f32.mxu0 0.0
  %107 = vmatmul.mubr.f32.gmra.mxu0 %v31
  %v108 = vpop.f32.mrf.mxu0
  %v109 = vadd.f32 %v27, %v108
  %v110 = vpop.f32.mrf.mxu0
  %111 = vmatprep.mubr.f32.mxu0 0.0
  %112 = vmatmul.mubr.f32.gmra.mxu0 %v34
  %v113 = vpop.f32.mrf.mxu0
  %v114 = vadd.f32 %v27, %v113
  %v115 = vpop.f32.mrf.mxu0
  %116 = vmatprep.mubr.f32.mxu0 0.0
  %117 = vmatmul.mubr.f32.gmra.mxu0 %v37
  %v118 = vpop.f32.mrf.mxu0
  %v119 = vadd.f32 %v27, %v118
  %v120 = vpop.f32.mrf.mxu0
  %121 = vmatprep.mubr.f32.mxu0 0.0
  %122 = vmatmul.mubr.f32.gmra.mxu0 %v40
  %v123 = vpop.f32.mrf.mxu0
  %v124 = vadd.f32 %v27, %v123
  %v125 = vpop.f32.mrf.mxu0
  %126 = vdwg.mxu0
  %127 = vst [vmem:[%s3] sm:$0xff] %v109
  %128 = vst [vmem:[%s3 + $0x8] sm:$0xff] %v114
  %129 = vst [vmem:[%s3 + $0x10] sm:$0xff] %v119
  %130 = vst [vmem:[%s3 + $0x18] sm:$0xff] %v124
  // Predicated region
  $region14: #{custom_multihead_attention.4} parent=0 // pred_check
    _
  $region15: #{custom_multihead_attention.4} parent=0 // pred_check_branch
    %132 = sbr.rel (0) target = $region17
  $region16: #{custom_multihead_attention.4} parent=0 // pred_region
    _
  $region17: #{custom_multihead_attention.4} parent=0 // pred_fallthru
    _
  // Predicated region
  $region18: #{custom_multihead_attention.4} parent=0 // pred_check
    _
  $region19: #{custom_multihead_attention.4} parent=0 // pred_check_branch
    %134 = sbr.rel (0) target = $region21
  $region20: #{custom_multihead_attention.4} parent=0 // pred_region
    _
  $region21: #{custom_multihead_attention.4} parent=0 // pred_fallthru
    _

// kernel: custom_multihead_attention.3
$region0: #{custom_multihead_attention.3}
  #allocation0 [shape = 'u32[]', space=smem, size = 0x4, offset = 0x4, fixed_abs, tag = 'smem constant byte address 0x4 - core index']
  #allocation1 [shape = 'u32[144,128]{1,0:T(1,128)}', space=vmem, size = 0x12000, scoped, tag = 'internal scratch']
  %s0 = inlined_call_operand.vmem [shape: f32[16,32], index: 0, kind: input, shape index: {}]
  %s1 = inlined_call_operand.vmem [shape: f32[32,64], index: 1, kind: input, shape index: {}]
  %s2 = inlined_call_operand.vmem [shape: f32[1,64], index: 2, kind: input, shape index: {}]
  %s3 = inlined_call_operand.vmem [shape: f32[16,64], index: 3, kind: output, shape index: {}]
  %s4 = sld [smem:[#allocation0]]
  $region22: #{custom_multihead_attention.3} parent=0
    _
  %s6 = ssub.s32 1, %s4
  %s7 = scalar_select 0, %s6, %s4
  // Predicated region
  $region2: #{custom_multihead_attention.3} parent=0 // pred_check
    _
  $region3: #{custom_multihead_attention.3} parent=0 // pred_check_branch
    %9 = sbr.rel (0) target = $region5
  $region4: #{custom_multihead_attention.3} parent=0 // pred_region
    _
  $region5: #{custom_multihead_attention.3} parent=0 // pred_fallthru
    _
  // Predicated region
  $region6: #{custom_multihead_attention.3} parent=0 // pred_check
    _
  $region7: #{custom_multihead_attention.3} parent=0 // pred_check_branch
    %11 = sbr.rel (0) target = $region9
  $region8: #{custom_multihead_attention.3} parent=0 // pred_region
    _
  $region9: #{custom_multihead_attention.3} parent=0 // pred_fallthru
    _
  // Predicated region
  $region10: #{custom_multihead_attention.3} parent=0 // pred_check
    _
  $region11: #{custom_multihead_attention.3} parent=0 // pred_check_branch
    %13 = sbr.rel (0) target = $region13
  $region12: #{custom_multihead_attention.3} parent=0 // pred_region
    _
  $region13: #{custom_multihead_attention.3} parent=0 // pred_fallthru
    _
  %v14 = vld [vmem:[%s0] sm:$0xff]
  %v15 = vld [vmem:[%s0 + $0x8] sm:$0xff]
  %v16 = vld [vmem:[%s1] sm:$0xff]
  %v17 = vld [vmem:[%s1 + $0x8] sm:$0xff]
  %v18 = vld [vmem:[%s1 + $0x10] sm:$0xff]
  %v19 = vld [vmem:[%s1 + $0x18] sm:$0xff]
  %v20 = vld [vmem:[%s2] sm:$0x1]
  %v22 = vlaneseq
  %v23 = vshrl.u32 %v22, 7
  %v24 = vsub.s32 0, %v23
  %v25 = vrot.slane %v20, %v24
  %vm27 = vcmask 261120
  %v29 = vsel %vm27, %v14, 0
  %v32 = vsel %vm27, %v15, 0
  %34 = vmatprep.subr.mxu0 0.0
  %35 = vmatpush1.msra.mxu0 0.0
  %36 = vmatprep.subr.mxu0 0.0
  %37 = vmatpush1.msra.mxu0 0.0
  %38 = vmatprep.subr.mxu0 0.0
  %39 = vmatpush1.msra.mxu0 0.0
  %40 = vmatprep.subr.mxu0 0.0
  %41 = vmatpush1.msra.mxu0 0.0
  %42 = vmatprep.subr.mxu0 0.0
  %43 = vmatpush1.msra.mxu0 0.0
  %44 = vmatprep.subr.mxu0 0.0
  %45 = vmatpush1.msra.mxu0 0.0
  %46 = vmatprep.subr.mxu0 0.0
  %47 = vmatpush1.msra.mxu0 0.0
  %48 = vmatprep.subr.mxu0 0.0
  %49 = vmatpush1.msra.mxu0 0.0
  %50 = vmatprep.subr.mxu0 0.0
  %51 = vmatpush1.msra.mxu0 0.0
  %52 = vmatprep.subr.mxu0 0.0
  %53 = vmatpush1.msra.mxu0 0.0
  %54 = vmatprep.subr.mxu0 0.0
  %55 = vmatpush1.msra.mxu0 0.0
  %56 = vmatprep.subr.mxu0 0.0
  %57 = vmatpush1.msra.mxu0 0.0
  %58 = vmatprep.subr.mxu0 0.0
  %59 = vmatpush1.msra.mxu0 %v19
  %60 = vmatprep.subr.mxu0 0.0
  %61 = vmatpush1.msra.mxu0 %v18
  %62 = vmatprep.subr.mxu0 0.0
  %63 = vmatpush1.msra.mxu0 %v17
  %64 = vmatprep.subr.mxu0 0.0
  %65 = vmatpush1.msra.mxu0 %v16
  %66 = vmatprep.subr.mxu0 0.0
  %67 = vmatpush2.msra.mxu0 0.0
  %68 = vmatprep.subr.mxu0 0.0
  %69 = vmatpush2.msra.mxu0 0.0
  %70 = vmatprep.subr.mxu0 0.0
  %71 = vmatpush2.msra.mxu0 0.0
  %72 = vmatprep.subr.mxu0 0.0
  %73 = vmatpush2.msra.mxu0 0.0
  %74 = vmatprep.subr.mxu0 0.0
  %75 = vmatpush2.msra.mxu0 0.0
  %76 = vmatprep.subr.mxu0 0.0
  %77 = vmatpush2.msra.mxu0 0.0
  %78 = vmatprep.subr.mxu0 0.0
  %79 = vmatpush2.msra.mxu0 0.0
  %80 = vmatprep.subr.mxu0 0.0
  %81 = vmatpush2.msra.mxu0 0.0
  %82 = vmatprep.subr.mxu0 0.0
  %83 = vmatpush2.msra.mxu0 0.0
  %84 = vmatprep.subr.mxu0 0.0
  %85 = vmatpush2.msra.mxu0 0.0
  %86 = vmatprep.subr.mxu0 0.0
  %87 = vmatpush2.msra.mxu0 0.0
  %88 = vmatprep.subr.mxu0 0.0
  %89 = vmatpush2.msra.mxu0 0.0
  %90 = vmatprep.subr.mxu0 0.0
  %91 = vmatpush2.msra.mxu0 0.0
  %92 = vmatprep.subr.mxu0 0.0
  %93 = vmatpush2.msra.mxu0 0.0
  %94 = vmatprep.subr.mxu0 0.0
  %95 = vmatpush2.msra.mxu0 0.0
  %96 = vmatprep.subr.mxu0 0.0
  %97 = vmatpush2.msra.mxu0 0.0
  %98 = vmatprep.mubr.f32.mxu0 0.0
  %99 = vmatmul.mubr.f32.gmra.mxu0 %v29
  %v100 = vpop.f32.mrf.mxu0
  %v101 = vadd.f32 %v25, %v100
  %v102 = vpop.f32.mrf.mxu0
  %103 = vmatprep.mubr.f32.mxu0 0.0
  %104 = vmatmul.mubr.f32.gmra.mxu0 %v32
  %v105 = vpop.f32.mrf.mxu0
  %v106 = vadd.f32 %v25, %v105
  %v107 = vpop.f32.mrf.mxu0
  %108 = vdwg.mxu0
  %v109 = vmul.f32 %v101, 0.35355338
  %v110 = vmul.f32 %v106, 0.35355338
  %vm111 = vcmask 523264
  %112 = vst.msk [vmem:[%s3] sm:$0xff] %vm111, %v109
  %113 = vst.msk [vmem:[%s3 + $0x8] sm:$0xff] %vm111, %v110
  // Predicated region
  $region14: #{custom_multihead_attention.3} parent=0 // pred_check
    _
  $region15: #{custom_multihead_attention.3} parent=0 // pred_check_branch
    %115 = sbr.rel (0) target = $region17
  $region16: #{custom_multihead_attention.3} parent=0 // pred_region
    _
  $region17: #{custom_multihead_attention.3} parent=0 // pred_fallthru
    _
  // Predicated region
  $region18: #{custom_multihead_attention.3} parent=0 // pred_check
    _
  $region19: #{custom_multihead_attention.3} parent=0 // pred_check_branch
    %117 = sbr.rel (0) target = $region21
  $region20: #{custom_multihead_attention.3} parent=0 // pred_region
    _
  $region21: #{custom_multihead_attention.3} parent=0 // pred_fallthru
    _

// kernel: custom_multihead_attention.5
$region0: #{custom_multihead_attention.5}
  #allocation0 [shape = 'u32[]', space=smem, size = 0x4, offset = 0x4, fixed_abs, tag = 'smem constant byte address 0x4 - core index']
  #allocation1 [shape = 'u32[144,128]{1,0:T(1,128)}', space=vmem, size = 0x12000, scoped, tag = 'internal scratch']
  #allocation2 [shape = 'f32[8,8]{1,0:T(8,128)}', space=vmem, size = 0x1000, scoped, tag = 'scratch operand']
  #allocation3 [shape = 'f32[8,8]{1,0:T(8,128)}', space=vmem, size = 0x1000, scoped, tag = 'scratch operand']
  #allocation4 [shape = 'f32[8,64]{1,0:T(8,128)}', space=vmem, size = 0x1000, scoped, tag = 'scratch operand']
  %s0 = inlined_call_operand.vmem [shape: f32[2,8,64], index: 0, kind: input, shape index: {}]
  %s1 = inlined_call_operand.vmem [shape: f32[2,16,128], index: 1, kind: input, shape index: {}]
  %s2 = inlined_call_operand.vmem [shape: f32[64,128], index: 2, kind: input, shape index: {}]
  %s3 = inlined_call_operand.vmem [shape: f32[1,128], index: 3, kind: input, shape index: {}]
  %s4 = inlined_call_operand.hbm [shape: f32[2,8,128], index: 4, kind: output, shape index: {}]
  %s5 = sld [smem:[#allocation0]]
  $region57: #{custom_multihead_attention.5} parent=0
    _
  %s7 = ssub.s32 1, %s5
  %s8 = scalar_select 0, %s7, %s5
  $region1: #{custom_multihead_attention.5} parent=0
    #allocation5 [shape = 'u8[8192]{0}', space=vmem, size = 0x2000, scoped, tag = 'output window, operand 0']
    #allocation6 [shape = 's32[2]{0}', space=sflag, size = 0x8, scoped, tag = 'scoped memory for custom_multihead_attention.5']
    %9 = vsyncpa [#allocation6], 0
    %s10 = scalar_lea.sflag [#allocation6], 1
    %11 = vsyncpa %s10, 0
    loop: start=0, step=1, limit=4
    $region2: #{custom_multihead_attention.5} parent=1 // loop_pre_header
      _
    $region3: #{custom_multihead_attention.5} parent=1 // loop_header
      %s13 = sphi 0, %s17
      %p14 = scmp.ge.s32.totalorder %s13, 4
      %s20 = sphi 0, %s39
      %s21 = sphi 0, %s35
      %s22 = sphi 0, %s31
      %s23 = sphi 0, %s20
      %s24 = sphi 0, %s21
      %s25 = sphi 0, %s22
      %s26 = sphi 0, %s23
      %s27 = sphi 0, %s24
      %s28 = sphi 0, %s25
      %s44 = sphi 0, %s46
      %s47 = sphi 0, %s44
      %s48 = sphi 0, %s47
      %s64 = sphi 0, %s48
      %s72 = sphi 0, %s74
      %s75 = sphi 0, %s72
      %s76 = sphi 0, %s75
      %s92 = sphi 0, %s76
      %s96 = sphi 0, %s96
      %s98 = sphi 0, %s96
      %s99 = sphi 0, %s98
      %s113 = sphi 0, %s99
      %s117 = sphi 0, %s117
      %s119 = sphi 0, %s117
      %s120 = sphi 0, %s119
      %s134 = sphi 0, %s120
      %s142 = sphi 0, %s144
      %s145 = sphi 0, %s142
      %s146 = sphi 0, %s145
      %s162 = sphi 0, %s146
    $region4: #{custom_multihead_attention.5} parent=1 // loop_header_branch
      %16 = sbr.rel (%p14) target = $region8
    $region5: #{custom_multihead_attention.5} parent=1 // loop_body
      %s18 = ssub.s32 %s13, 1
      %s19 = ssub.s32 %s13, 2
      %s29 = sadd.s32 1, %s22
      %p30 = scmp.ge.s32.totalorder %s29, 1
      %s31 = scalar_select %p30, 0, %s29
      %s32 = sadd.s32 1, %s21
      %s33 = scalar_select %p30, %s32, %s21
      %p34 = scmp.ge.s32.totalorder %s33, 1
      %s35 = scalar_select %p34, 0, %s33
      %s36 = sadd.s32 1, %s20
      %s37 = scalar_select %p34, %s36, %s20
      %p38 = scmp.ge.s32.totalorder %s37, 2
      %s39 = scalar_select %p38, 0, %s37
      %s40 = ssub.s32 %s20, %s39
      %s41 = ssub.s32 %s21, %s35
      %s42 = sor.u32 %s40, %s41
      %p43 = scmp.eq.s32.totalorder %s42, 0
      %s45 = sadd.s32 %s44, 1
      %s46 = scalar_select %p43, %s44, %s45
      %p49 = pneg %p43
      %p50 = scmp.eq.s32.totalorder %s13, 1
      %p51 = por %p49, %p50
      %p52 = scmp.ne.s32.totalorder %s44, %s47
      %p53 = scmp.eq.s32.totalorder %s13, 0
      %p54 = por %p52, %p53
      %p55 = scmp.ne.s32.totalorder %s44, %s47
      %p56 = scmp.eq.s32.totalorder %s18, 1
      %p57 = por %p55, %p56
      %p58 = scmp.ne.s32.totalorder %s47, %s48
      %p59 = scmp.eq.s32.totalorder %s18, 0
      %p60 = por %p58, %p59
      %p61 = scmp.ne.s32.totalorder %s47, %s48
      %p62 = scmp.eq.s32.totalorder %s19, 1
      %p63 = por %p61, %p62
      %p65 = scmp.ne.s32.totalorder %s48, %s64
      %p66 = scmp.eq.s32.totalorder %s19, 0
      %p67 = por %p65, %p66
      %s68 = ssub.s32 %s20, %s39
      %s69 = ssub.s32 %s22, %s31
      %s70 = sor.u32 %s68, %s69
      %p71 = scmp.eq.s32.totalorder %s70, 0
      %s73 = sadd.s32 %s72, 1
      %s74 = scalar_select %p71, %s72, %s73
      %p77 = pneg %p71
      %p78 = scmp.eq.s32.totalorder %s13, 1
      %p79 = por %p77, %p78
      %p80 = scmp.ne.s32.totalorder %s72, %s75
      %p81 = scmp.eq.s32.totalorder %s13, 0
      %p82 = por %p80, %p81
      %p83 = scmp.ne.s32.totalorder %s72, %s75
      %p84 = scmp.eq.s32.totalorder %s18, 1
      %p85 = por %p83, %p84
      %p86 = scmp.ne.s32.totalorder %s75, %s76
      %p87 = scmp.eq.s32.totalorder %s18, 0
      %p88 = por %p86, %p87
      %p89 = scmp.ne.s32.totalorder %s75, %s76
      %p90 = scmp.eq.s32.totalorder %s19, 1
      %p91 = por %p89, %p90
      %p93 = scmp.ne.s32.totalorder %s76, %s92
      %p94 = scmp.eq.s32.totalorder %s19, 0
      %p95 = por %p93, %p94
      %s97 = sadd.s32 %s96, 1
      %p100 = scmp.eq.s32.totalorder %s13, 1
      %p101 = scmp.ne.s32.totalorder %s96, %s98
      %p102 = scmp.eq.s32.totalorder %s13, 0
      %p103 = por %p101, %p102
      %p104 = scmp.ne.s32.totalorder %s96, %s98
      %p105 = scmp.eq.s32.totalorder %s18, 1
      %p106 = por %p104, %p105
      %p107 = scmp.ne.s32.totalorder %s98, %s99
      %p108 = scmp.eq.s32.totalorder %s18, 0
      %p109 = por %p107, %p108
      %p110 = scmp.ne.s32.totalorder %s98, %s99
      %p111 = scmp.eq.s32.totalorder %s19, 1
      %p112 = por %p110, %p111
      %p114 = scmp.ne.s32.totalorder %s99, %s113
      %p115 = scmp.eq.s32.totalorder %s19, 0
      %p116 = por %p114, %p115
      %s118 = sadd.s32 %s117, 1
      %p121 = scmp.eq.s32.totalorder %s13, 1
      %p122 = scmp.ne.s32.totalorder %s117, %s119
      %p123 = scmp.eq.s32.totalorder %s13, 0
      %p124 = por %p122, %p123
      %p125 = scmp.ne.s32.totalorder %s117, %s119
      %p126 = scmp.eq.s32.totalorder %s18, 1
      %p127 = por %p125, %p126
      %p128 = scmp.ne.s32.totalorder %s119, %s120
      %p129 = scmp.eq.s32.totalorder %s18, 0
      %p130 = por %p128, %p129
      %p131 = scmp.ne.s32.totalorder %s119, %s120
      %p132 = scmp.eq.s32.totalorder %s19, 1
      %p133 = por %p131, %p132
      %p135 = scmp.ne.s32.totalorder %s120, %s134
      %p136 = scmp.eq.s32.totalorder %s19, 0
      %p137 = por %p135, %p136
      %s138 = ssub.s32 %s20, %s39
      %s139 = ssub.s32 %s21, %s35
      %s140 = sor.u32 %s138, %s139
      %p141 = scmp.eq.s32.totalorder %s140, 0
      %s143 = sadd.s32 %s142, 1
      %s144 = scalar_select %p141, %s142, %s143
      %p147 = pneg %p141
      %p148 = scmp.eq.s32.totalorder %s13, 1
      %p149 = por %p147, %p148
      %p150 = scmp.ne.s32.totalorder %s142, %s145
      %p151 = scmp.eq.s32.totalorder %s13, 0
      %p152 = por %p150, %p151
      %p153 = scmp.ne.s32.totalorder %s142, %s145
      %p154 = scmp.eq.s32.totalorder %s18, 1
      %p155 = por %p153, %p154
      %p156 = scmp.ne.s32.totalorder %s145, %s146
      %p157 = scmp.eq.s32.totalorder %s18, 0
      %p158 = por %p156, %p157
      %p159 = scmp.ne.s32.totalorder %s145, %s146
      %p160 = scmp.eq.s32.totalorder %s19, 1
      %p161 = por %p159, %p160
      %p163 = scmp.ne.s32.totalorder %s146, %s162
      %p164 = scmp.eq.s32.totalorder %s19, 0
      %p165 = por %p163, %p164
      %p166 = scmp.le.s32.totalorder 1, %s13
      %p167 = scmp.lt.s32.totalorder %s13, 3
      %p168 = pnand %p166, %p167
      %p169 = pneg %p168
      // Predicated region
      $region9: #{custom_multihead_attention.5} parent=5 // pred_check
        _
      $region10: #{custom_multihead_attention.5} parent=5 // pred_check_branch
        %171 = sbr.rel (%p168) target = $region12
      $region11: #{custom_multihead_attention.5} parent=5 // pred_region
        %s172 = ssub.s32 %s13, 1
        // Predicated region
        $region13: #{custom_multihead_attention.5} parent=11 // pred_check
          %p173 = pneg %p109
        $region14: #{custom_multihead_attention.5} parent=11 // pred_check_branch
          %175 = sbr.rel (%p173) target = $region16
        $region15: #{custom_multihead_attention.5} parent=11 // pred_region
          _
        $region16: #{custom_multihead_attention.5} parent=11 // pred_fallthru
          _
        // Predicated region
        $region17: #{custom_multihead_attention.5} parent=11 // pred_check
          %p176 = pneg %p130
        $region18: #{custom_multihead_attention.5} parent=11 // pred_check_branch
          %178 = sbr.rel (%p176) target = $region20
        $region19: #{custom_multihead_attention.5} parent=11 // pred_region
          _
        $region20: #{custom_multihead_attention.5} parent=11 // pred_fallthru
          _
      $region12: #{custom_multihead_attention.5} parent=5 // pred_fallthru
        _
      %p179 = scmp.lt.s32.totalorder %s13, 2
      // Predicated region
      $region21: #{custom_multihead_attention.5} parent=5 // pred_check
        %p180 = pneg %p179
      $region22: #{custom_multihead_attention.5} parent=5 // pred_check_branch
        %182 = sbr.rel (%p180) target = $region24
      $region23: #{custom_multihead_attention.5} parent=5 // pred_region
        // Predicated region
        $region25: #{custom_multihead_attention.5} parent=23 // pred_check
          %p183 = pneg %p54
        $region26: #{custom_multihead_attention.5} parent=23 // pred_check_branch
          %185 = sbr.rel (%p183) target = $region28
        $region27: #{custom_multihead_attention.5} parent=23 // pred_region
          %p186 = scmp.lt.s32.totalorder %s20, 1
          %s187 = scalar_select %p186, %s20, 1
          %p188 = scmp.lt.s32.totalorder %s21, 0
          %s189 = scalar_select %p188, %s21, 0
          %s190 = sadd.s32 %s189, %s187
          %s191 = smul.addr %s190, 8
          %s192 = scalar_lea.vmem %s0, %s191
        $region28: #{custom_multihead_attention.5} parent=23 // pred_fallthru
          _
        // Predicated region
        $region29: #{custom_multihead_attention.5} parent=23 // pred_check
          %p193 = pneg %p82
        $region30: #{custom_multihead_attention.5} parent=23 // pred_check_branch
          %195 = sbr.rel (%p193) target = $region32
        $region31: #{custom_multihead_attention.5} parent=23 // pred_region
          %s196 = smul.u32 2, %s22
          %p197 = scmp.lt.s32.totalorder %s20, 1
          %s198 = scalar_select %p197, %s20, 1
          %p199 = scmp.lt.s32.totalorder %s196, 1
          %s200 = scalar_select %p199, %s196, 1
          %s201 = smul.addr %s198, 2
          %s202 = sadd.s32 %s200, %s201
          %s203 = smul.addr %s202, 8
          %s204 = scalar_lea.vmem %s1, %s203
          %s205 = smul.u32 2, %s22
        $region32: #{custom_multihead_attention.5} parent=23 // pred_fallthru
          _
      $region24: #{custom_multihead_attention.5} parent=5 // pred_fallthru
        _
      %p206 = scmp.le.s32.totalorder 1, %s13
      %p207 = scmp.lt.s32.totalorder %s13, 3
      %p208 = pnand %p206, %p207
      %p209 = pneg %p208
      // Predicated region
      $region33: #{custom_multihead_attention.5} parent=5 // pred_check
        _
      $region34: #{custom_multihead_attention.5} parent=5 // pred_check_branch
        %211 = sbr.rel (%p208) target = $region36
      $region35: #{custom_multihead_attention.5} parent=5 // pred_region
        %s212 = ssub.s32 %s13, 1
        %p213 = scmp.lt.s32.totalorder %s23, 1
        %s214 = scalar_select %p213, %s23, 1
        %p215 = scmp.lt.s32.totalorder %s24, 0
        %s216 = scalar_select %p215, %s24, 0
        %s217 = sadd.s32 %s216, %s214
        %s218 = smul.addr %s217, 8
        %s219 = scalar_lea.vmem %s0, %s218
        %p220 = pneg %p60
        %p221 = pneg %p57
        %s222 = smul.u32 2, %s25
        %p223 = scmp.lt.s32.totalorder %s23, 1
        %s224 = scalar_select %p223, %s23, 1
        %p225 = scmp.lt.s32.totalorder %s222, 1
        %s226 = scalar_select %p225, %s222, 1
        %s227 = smul.addr %s224, 2
        %s228 = sadd.s32 %s226, %s227
        %s229 = smul.addr %s228, 8
        %s230 = scalar_lea.vmem %s1, %s229
        %p231 = pneg %p88
        %p232 = pneg %p85
        %p233 = pneg %p109
        %p234 = pneg %p106
        %p235 = pneg %p130
        %p236 = pneg %p127
        %p237 = pneg %p158
        %p238 = pneg %p155
        %s239 = sand.u32 %s145, 1
        %s240 = scalar_lea.sflag [#allocation6], %s239
        %s241 = sand.u32 %s145, 1
        %s242 = smul.addr %s241, 8
        %s243 = scalar_lea.vmem [#allocation5], %s242
        %p244 = scmp.lt.s32.totalorder %s23, 1
        %s245 = scalar_select %p244, %s23, 1
        %p246 = scmp.lt.s32.totalorder %s24, 0
        %s247 = scalar_select %p246, %s24, 0
        %s248 = sadd.s32 %s247, %s245
        %s249 = smul.addr %s248, 8
        %s250 = scalar_lea.vmem %s0, %s249
        %s251 = smul.u32 2, %s25
        %p252 = scmp.lt.s32.totalorder %s23, 1
        %s253 = scalar_select %p252, %s23, 1
        %p254 = scmp.lt.s32.totalorder %s251, 1
        %s255 = scalar_select %p254, %s251, 1
        %s256 = smul.addr %s253, 2
        %s257 = sadd.s32 %s255, %s256
        %s258 = smul.addr %s257, 8
        %s259 = scalar_lea.vmem %s1, %s258
        %s260 = smul.u32 2, %s25
        %p261 = scmp.eq.s32.totalorder %s25, 0
        // Predicated region
        $region37: #{custom_multihead_attention.5} parent=35 // pred_check
          %p262 = pneg %p261
        $region38: #{custom_multihead_attention.5} parent=35 // pred_check_branch
          %264 = sbr.rel (%p262) target = $region40
        $region39: #{custom_multihead_attention.5} parent=35 // pred_region
          %vm265 = vcmask 64512
          %266 = vst.msk [vmem:[#allocation2] sm:$0xff] %vm265, -1e+30
          %267 = vst.msk [vmem:[#allocation3] sm:$0xff] %vm265, 0.0
          %vm268 = vcmask 523264
          %269 = vst.msk [vmem:[#allocation4] sm:$0xff] %vm268, 0.0
        $region40: #{custom_multihead_attention.5} parent=35 // pred_fallthru
          _
        %v270 = vld [vmem:[%s250] sm:$0xff]
        %v271 = vld [vmem:[%s259] sm:$0xff]
        %v272 = vld [vmem:[%s259 + $0x8] sm:$0xff]
        %v273 = vld [vmem:[#allocation2] sm:$0xff]
        %v274 = vld [vmem:[#allocation3] sm:$0xff]
        %v275 = vld [vmem:[#allocation4] sm:$0xff]
        %vm276 = vcmask 64512
        %v278 = vsel %vm276, %v270, 0
        %v281 = vsel %vm276, %v271, 0
        %v284 = vsel %vm276, %v272, 0
        %286 = vmatprep.subr.mxu0 0.0
        %287 = vmatpush1.xpose.msra.mxu0 0.0
        %288 = vmatprep.subr.mxu0 0.0
        %289 = vmatpush1.xpose.msra.mxu0 0.0
        %290 = vmatprep.subr.mxu0 0.0
        %291 = vmatpush1.xpose.msra.mxu0 0.0
        %292 = vmatprep.subr.mxu0 0.0
        %293 = vmatpush1.xpose.msra.mxu0 0.0
        %294 = vmatprep.subr.mxu0 0.0
        %295 = vmatpush1.xpose.msra.mxu0 0.0
        %296 = vmatprep.subr.mxu0 0.0
        %297 = vmatpush1.xpose.msra.mxu0 0.0
        %298 = vmatprep.subr.mxu0 0.0
        %299 = vmatpush1.xpose.msra.mxu0 0.0
        %300 = vmatprep.subr.mxu0 0.0
        %301 = vmatpush1.xpose.msra.mxu0 0.0
        %302 = vmatprep.subr.mxu0 0.0
        %303 = vmatpush1.xpose.msra.mxu0 0.0
        %304 = vmatprep.subr.mxu0 0.0
        %305 = vmatpush1.xpose.msra.mxu0 0.0
        %306 = vmatprep.subr.mxu0 0.0
        %307 = vmatpush1.xpose.msra.mxu0 0.0
        %308 = vmatprep.subr.mxu0 0.0
        %309 = vmatpush1.xpose.msra.mxu0 0.0
        %310 = vmatprep.subr.mxu0 0.0
        %311 = vmatpush1.xpose.msra.mxu0 0.0
        %312 = vmatprep.subr.mxu0 0.0
        %313 = vmatpush1.xpose.msra.mxu0 0.0
        %314 = vmatprep.subr.mxu0 0.0
        %315 = vmatpush1.xpose.msra.mxu0 %v284
        %316 = vmatprep.subr.mxu0 0.0
        %317 = vmatpush1.xpose.msra.mxu0 %v281
        %318 = vmatprep.subr.mxu0 0.0
        %319 = vmatpush2.xpose.msra.mxu0 0.0
        %320 = vmatprep.subr.mxu0 0.0
        %321 = vmatpush2.xpose.msra.mxu0 0.0
        %322 = vmatprep.subr.mxu0 0.0
        %323 = vmatpush2.xpose.msra.mxu0 0.0
        %324 = vmatprep.subr.mxu0 0.0
        %325 = vmatpush2.xpose.msra.mxu0 0.0
        %326 = vmatprep.subr.mxu0 0.0
        %327 = vmatpush2.xpose.msra.mxu0 0.0
        %328 = vmatprep.subr.mxu0 0.0
        %329 = vmatpush2.xpose.msra.mxu0 0.0
        %330 = vmatprep.subr.mxu0 0.0
        %331 = vmatpush2.xpose.msra.mxu0 0.0
        %332 = vmatprep.subr.mxu0 0.0
        %333 = vmatpush2.xpose.msra.mxu0 0.0
        %334 = vmatprep.subr.mxu0 0.0
        %335 = vmatpush2.xpose.msra.mxu0 0.0
        %336 = vmatprep.subr.mxu0 0.0
        %337 = vmatpush2.xpose.msra.mxu0 0.0
        %338 = vmatprep.subr.mxu0 0.0
        %339 = vmatpush2.xpose.msra.mxu0 0.0
        %340 = vmatprep.subr.mxu0 0.0
        %341 = vmatpush2.xpose.msra.mxu0 0.0
        %342 = vmatprep.subr.mxu0 0.0
        %343 = vmatpush2.xpose.msra.mxu0 0.0
        %344 = vmatprep.subr.mxu0 0.0
        %345 = vmatpush2.xpose.msra.mxu0 0.0
        %346 = vmatprep.subr.mxu0 0.0
        %347 = vmatpush2.xpose.msra.mxu0 0.0
        %348 = vmatprep.subr.mxu0 0.0
        %349 = vmatpush2.xpose.msra.mxu0 0.0
        %350 = vmatprep.mubr.f32.mxu0 0.0
        %351 = vmatmul.mubr.f32.gmra.mxu0 %v278
        %v352 = vpop.f32.mrf.mxu0
        %v353 = vadd.f32 0.0, %v352
        %v354 = vpop.f32.mrf.mxu0
        %355 = vdwg.mxu0
        %vm356 = vcmask 130048
        %v357 = vsel %vm356, %v353, -inf
        %358 = vmax.xlane.f32.xlu0 %v357
        %v359 = vpop.xlane.xlu0 %358
        %v360 = vmax.f32 %v273, %v359
        %v361 = vsub.f32 %v273, %v360
        %v362 = vmul.f32 %v361, 1.442695
        %v363 = vpow.pop %v362
        %365 = vset.pattern.permute.xlu0 0
        %366 = vperm.xlu0 %365, %v360
        %v367 = vpop.permute.xlu0 %366
        %v369 = vsub.f32 %v353, %v367
        %v370 = vmul.f32 %v369, 1.442695
        %v371 = vpow.pop %v370
        %v372 = vmul.f32 %v363, %v274
        %v373 = vsel %vm356, %v371, 0.0
        %374 = vadd.xlane.f32.xlu0 %v373
        %v375 = vpop.xlane.xlu0 %374
        %v376 = vadd.f32 %v372, %v375
        %377 = vrot.lane.b32.xlu0 %v271, 64
        %v378 = vpop.permute.xlu0 %377
        %379 = vrot.lane.b32.xlu0 %v272, 64
        %v380 = vpop.permute.xlu0 %379
        %v384 = vsel %vm356, %v371, 0
        %386 = vmatprep.subr.mxu0 0.0
        %387 = vmatpush1.msra.mxu0 0.0
        %388 = vmatprep.subr.mxu0 0.0
        %389 = vmatpush1.msra.mxu0 0.0
        %390 = vmatprep.subr.mxu0 0.0
        %391 = vmatpush1.msra.mxu0 0.0
        %392 = vmatprep.subr.mxu0 0.0
        %393 = vmatpush1.msra.mxu0 0.0
        %394 = vmatprep.subr.mxu0 0.0
        %395 = vmatpush1.msra.mxu0 0.0
        %396 = vmatprep.subr.mxu0 0.0
        %397 = vmatpush1.msra.mxu0 0.0
        %398 = vmatprep.subr.mxu0 0.0
        %399 = vmatpush1.msra.mxu0 0.0
        %400 = vmatprep.subr.mxu0 0.0
        %401 = vmatpush1.msra.mxu0 0.0
        %402 = vmatprep.subr.mxu0 0.0
        %403 = vmatpush1.msra.mxu0 0.0
        %404 = vmatprep.subr.mxu0 0.0
        %405 = vmatpush1.msra.mxu0 0.0
        %406 = vmatprep.subr.mxu0 0.0
        %407 = vmatpush1.msra.mxu0 0.0
        %408 = vmatprep.subr.mxu0 0.0
        %409 = vmatpush1.msra.mxu0 0.0
        %410 = vmatprep.subr.mxu0 0.0
        %411 = vmatpush1.msra.mxu0 0.0
        %412 = vmatprep.subr.mxu0 0.0
        %413 = vmatpush1.msra.mxu0 0.0
        %414 = vmatprep.subr.mxu0 0.0
        %415 = vmatpush1.msra.mxu0 %v380
        %416 = vmatprep.subr.mxu0 0.0
        %417 = vmatpush1.msra.mxu0 %v378
        %418 = vmatprep.subr.mxu0 0.0
        %419 = vmatpush2.msra.mxu0 0.0
        %420 = vmatprep.subr.mxu0 0.0
        %421 = vmatpush2.msra.mxu0 0.0
        %422 = vmatprep.subr.mxu0 0.0
        %423 = vmatpush2.msra.mxu0 0.0
        %424 = vmatprep.subr.mxu0 0.0
        %425 = vmatpush2.msra.mxu0 0.0
        %426 = vmatprep.subr.mxu0 0.0
        %427 = vmatpush2.msra.mxu0 0.0
        %428 = vmatprep.subr.mxu0 0.0
        %429 = vmatpush2.msra.mxu0 0.0
        %430 = vmatprep.subr.mxu0 0.0
        %431 = vmatpush2.msra.mxu0 0.0
        %432 = vmatprep.subr.mxu0 0.0
        %433 = vmatpush2.msra.mxu0 0.0
        %434 = vmatprep.subr.mxu0 0.0
        %435 = vmatpush2.msra.mxu0 0.0
        %436 = vmatprep.subr.mxu0 0.0
        %437 = vmatpush2.msra.mxu0 0.0
        %438 = vmatprep.subr.mxu0 0.0
        %439 = vmatpush2.msra.mxu0 0.0
        %440 = vmatprep.subr.mxu0 0.0
        %441 = vmatpush2.msra.mxu0 0.0
        %442 = vmatprep.subr.mxu0 0.0
        %443 = vmatpush2.msra.mxu0 0.0
        %444 = vmatprep.subr.mxu0 0.0
        %445 = vmatpush2.msra.mxu0 0.0
        %446 = vmatprep.subr.mxu0 0.0
        %447 = vmatpush2.msra.mxu0 0.0
        %448 = vmatprep.subr.mxu0 0.0
        %449 = vmatpush2.msra.mxu0 0.0
        %450 = vmatprep.mubr.f32.mxu0 0.0
        %451 = vmatmul.mubr.f32.gmra.mxu0 %v384
        %v452 = vpop.f32.mrf.mxu0
        %v453 = vadd.f32 0.0, %v452
        %v454 = vpop.f32.mrf.mxu0
        %455 = vdwg.mxu0
        %457 = vset.pattern.permute.xlu0 0
        %458 = vperm.xlu0 %457, %v363
        %v459 = vpop.permute.xlu0 %458
        %v461 = vmul.f32 %v459, %v275
        %v462 = vadd.f32 %v461, %v453
        %463 = vrot.lane.b32.xlu0 %v270, 120
        %v464 = vpop.permute.xlu0 %463
        %465 = vrot.lane.b32.xlu0 %v271, 120
        %v466 = vpop.permute.xlu0 %465
        %467 = vrot.lane.b32.xlu0 %v272, 120
        %v468 = vpop.permute.xlu0 %467
        %v469 = vsel %vm276, %v464, 0
        %v471 = vsel %vm276, %v466, 0
        %v473 = vsel %vm276, %v468, 0
        %475 = vmatprep.subr.mxu0 0.0
        %476 = vmatpush1.xpose.msra.mxu0 0.0
        %477 = vmatprep.subr.mxu0 0.0
        %478 = vmatpush1.xpose.msra.mxu0 0.0
        %479 = vmatprep.subr.mxu0 0.0
        %480 = vmatpush1.xpose.msra.mxu0 0.0
        %481 = vmatprep.subr.mxu0 0.0
        %482 = vmatpush1.xpose.msra.mxu0 0.0
        %483 = vmatprep.subr.mxu0 0.0
        %484 = vmatpush1.xpose.msra.mxu0 0.0
        %485 = vmatprep.subr.mxu0 0.0
        %486 = vmatpush1.xpose.msra.mxu0 0.0
        %487 = vmatprep.subr.mxu0 0.0
        %488 = vmatpush1.xpose.msra.mxu0 0.0
        %489 = vmatprep.subr.mxu0 0.0
        %490 = vmatpush1.xpose.msra.mxu0 0.0
        %491 = vmatprep.subr.mxu0 0.0
        %492 = vmatpush1.xpose.msra.mxu0 0.0
        %493 = vmatprep.subr.mxu0 0.0
        %494 = vmatpush1.xpose.msra.mxu0 0.0
        %495 = vmatprep.subr.mxu0 0.0
        %496 = vmatpush1.xpose.msra.mxu0 0.0
        %497 = vmatprep.subr.mxu0 0.0
        %498 = vmatpush1.xpose.msra.mxu0 0.0
        %499 = vmatprep.subr.mxu0 0.0
        %500 = vmatpush1.xpose.msra.mxu0 0.0
        %501 = vmatprep.subr.mxu0 0.0
        %502 = vmatpush1.xpose.msra.mxu0 0.0
        %503 = vmatprep.subr.mxu0 0.0
        %504 = vmatpush1.xpose.msra.mxu0 %v473
        %505 = vmatprep.subr.mxu0 0.0
        %506 = vmatpush1.xpose.msra.mxu0 %v471
        %507 = vmatprep.subr.mxu0 0.0
        %508 = vmatpush2.xpose.msra.mxu0 0.0
        %509 = vmatprep.subr.mxu0 0.0
        %510 = vmatpush2.xpose.msra.mxu0 0.0
        %511 = vmatprep.subr.mxu0 0.0
        %512 = vmatpush2.xpose.msra.mxu0 0.0
        %513 = vmatprep.subr.mxu0 0.0
        %514 = vmatpush2.xpose.msra.mxu0 0.0
        %515 = vmatprep.subr.mxu0 0.0
        %516 = vmatpush2.xpose.msra.mxu0 0.0
        %517 = vmatprep.subr.mxu0 0.0
        %518 = vmatpush2.xpose.msra.mxu0 0.0
        %519 = vmatprep.subr.mxu0 0.0
        %520 = vmatpush2.xpose.msra.mxu0 0.0
        %521 = vmatprep.subr.mxu0 0.0
        %522 = vmatpush2.xpose.msra.mxu0 0.0
        %523 = vmatprep.subr.mxu0 0.0
        %524 = vmatpush2.xpose.msra.mxu0 0.0
        %525 = vmatprep.subr.mxu0 0.0
        %526 = vmatpush2.xpose.msra.mxu0 0.0
        %527 = vmatprep.subr.mxu0 0.0
        %528 = vmatpush2.xpose.msra.mxu0 0.0
        %529 = vmatprep.subr.mxu0 0.0
        %530 = vmatpush2.xpose.msra.mxu0 0.0
        %531 = vmatprep.subr.mxu0 0.0
        %532 = vmatpush2.xpose.msra.mxu0 0.0
        %533 = vmatprep.subr.mxu0 0.0
        %534 = vmatpush2.xpose.msra.mxu0 0.0
        %535 = vmatprep.subr.mxu0 0.0
        %536 = vmatpush2.xpose.msra.mxu0 0.0
        %537 = vmatprep.subr.mxu0 0.0
        %538 = vmatpush2.xpose.msra.mxu0 0.0
        %539 = vmatprep.mubr.f32.mxu0 0.0
        %540 = vmatmul.mubr.f32.gmra.mxu0 %v469
        %v541 = vpop.f32.mrf.mxu0
        %v542 = vadd.f32 0.0, %v541
        %v543 = vpop.f32.mrf.mxu0
        %544 = vdwg.mxu0
        %v545 = vsel %vm356, %v542, -inf
        %546 = vmax.xlane.f32.xlu0 %v545
        %v547 = vpop.xlane.xlu0 %546
        %v548 = vmax.f32 %v273, %v547
        %v549 = vsub.f32 %v273, %v548
        %v550 = vmul.f32 %v549, 1.442695
        %v551 = vpow.pop %v550
        %553 = vset.pattern.permute.xlu0 1
        %554 = vperm.xlu0 %553, %v548
        %v555 = vpop.permute.xlu0 %554
        %v557 = vsub.f32 %v542, %v555
        %v558 = vmul.f32 %v557, 1.442695
        %v559 = vpow.pop %v558
        %v560 = vmul.f32 %v551, %v274
        %v561 = vsel %vm356, %v559, 0.0
        %562 = vadd.xlane.f32.xlu0 %v561
        %v563 = vpop.xlane.xlu0 %562
        %v564 = vadd.f32 %v560, %v563
        %565 = vrot.lane.b32.xlu0 %v271, 56
        %v566 = vpop.permute.xlu0 %565
        %567 = vrot.lane.b32.xlu0 %v272, 56
        %v568 = vpop.permute.xlu0 %567
        %v572 = vsel %vm356, %v559, 0
        %574 = vmatprep.subr.mxu0 0.0
        %575 = vmatpush1.msra.mxu0 0.0
        %576 = vmatprep.subr.mxu0 0.0
        %577 = vmatpush1.msra.mxu0 0.0
        %578 = vmatprep.subr.mxu0 0.0
        %579 = vmatpush1.msra.mxu0 0.0
        %580 = vmatprep.subr.mxu0 0.0
        %581 = vmatpush1.msra.mxu0 0.0
        %582 = vmatprep.subr.mxu0 0.0
        %583 = vmatpush1.msra.mxu0 0.0
        %584 = vmatprep.subr.mxu0 0.0
        %585 = vmatpush1.msra.mxu0 0.0
        %586 = vmatprep.subr.mxu0 0.0
        %587 = vmatpush1.msra.mxu0 0.0
        %588 = vmatprep.subr.mxu0 0.0
        %589 = vmatpush1.msra.mxu0 0.0
        %590 = vmatprep.subr.mxu0 0.0
        %591 = vmatpush1.msra.mxu0 0.0
        %592 = vmatprep.subr.mxu0 0.0
        %593 = vmatpush1.msra.mxu0 0.0
        %594 = vmatprep.subr.mxu0 0.0
        %595 = vmatpush1.msra.mxu0 0.0
        %596 = vmatprep.subr.mxu0 0.0
        %597 = vmatpush1.msra.mxu0 0.0
        %598 = vmatprep.subr.mxu0 0.0
        %599 = vmatpush1.msra.mxu0 0.0
        %600 = vmatprep.subr.mxu0 0.0
        %601 = vmatpush1.msra.mxu0 0.0
        %602 = vmatprep.subr.mxu0 0.0
        %603 = vmatpush1.msra.mxu0 %v568
        %604 = vmatprep.subr.mxu0 0.0
        %605 = vmatpush1.msra.mxu0 %v566
        %606 = vmatprep.subr.mxu0 0.0
        %607 = vmatpush2.msra.mxu0 0.0
        %608 = vmatprep.subr.mxu0 0.0
        %609 = vmatpush2.msra.mxu0 0.0
        %610 = vmatprep.subr.mxu0 0.0
        %611 = vmatpush2.msra.mxu0 0.0
        %612 = vmatprep.subr.mxu0 0.0
        %613 = vmatpush2.msra.mxu0 0.0
        %614 = vmatprep.subr.mxu0 0.0
        %615 = vmatpush2.msra.mxu0 0.0
        %616 = vmatprep.subr.mxu0 0.0
        %617 = vmatpush2.msra.mxu0 0.0
        %618 = vmatprep.subr.mxu0 0.0
        %619 = vmatpush2.msra.mxu0 0.0
        %620 = vmatprep.subr.mxu0 0.0
        %621 = vmatpush2.msra.mxu0 0.0
        %622 = vmatprep.subr.mxu0 0.0
        %623 = vmatpush2.msra.mxu0 0.0
        %624 = vmatprep.subr.mxu0 0.0
        %625 = vmatpush2.msra.mxu0 0.0
        %626 = vmatprep.subr.mxu0 0.0
        %627 = vmatpush2.msra.mxu0 0.0
        %628 = vmatprep.subr.mxu0 0.0
        %629 = vmatpush2.msra.mxu0 0.0
        %630 = vmatprep.subr.mxu0 0.0
        %631 = vmatpush2.msra.mxu0 0.0
        %632 = vmatprep.subr.mxu0 0.0
        %633 = vmatpush2.msra.mxu0 0.0
        %634 = vmatprep.subr.mxu0 0.0
        %635 = vmatpush2.msra.mxu0 0.0
        %636 = vmatprep.subr.mxu0 0.0
        %637 = vmatpush2.msra.mxu0 0.0
        %638 = vmatprep.mubr.f32.mxu0 0.0
        %639 = vmatmul.mubr.f32.gmra.mxu0 %v572
        %v640 = vpop.f32.mrf.mxu0
        %v641 = vadd.f32 0.0, %v640
        %v642 = vpop.f32.mrf.mxu0
        %643 = vdwg.mxu0
        %645 = vset.pattern.permute.xlu0 1
        %646 = vperm.xlu0 %645, %v551
        %v647 = vpop.permute.xlu0 %646
        %v649 = vmul.f32 %v647, %v275
        %651 = vrot.lane.b32.xlu0 %v641, 8
        %v652 = vpop.permute.xlu0 %651
        %v654 = vadd.f32 %v649, %v652
        %655 = vrot.lane.b32.xlu0 %v270, 112
        %v656 = vpop.permute.xlu0 %655
        %657 = vrot.lane.b32.xlu0 %v271, 112
        %v658 = vpop.permute.xlu0 %657
        %659 = vrot.lane.b32.xlu0 %v272, 112
        %v660 = vpop.permute.xlu0 %659
        %v661 = vsel %vm276, %v656, 0
        %v663 = vsel %vm276, %v658, 0
        %v665 = vsel %vm276, %v660, 0
        %667 = vmatprep.subr.mxu0 0.0
        %668 = vmatpush1.xpose.msra.mxu0 0.0
        %669 = vmatprep.subr.mxu0 0.0
        %670 = vmatpush1.xpose.msra.mxu0 0.0
        %671 = vmatprep.subr.mxu0 0.0
        %672 = vmatpush1.xpose.msra.mxu0 0.0
        %673 = vmatprep.subr.mxu0 0.0
        %674 = vmatpush1.xpose.msra.mxu0 0.0
        %675 = vmatprep.subr.mxu0 0.0
        %676 = vmatpush1.xpose.msra.mxu0 0.0
        %677 = vmatprep.subr.mxu0 0.0
        %678 = vmatpush1.xpose.msra.mxu0 0.0
        %679 = vmatprep.subr.mxu0 0.0
        %680 = vmatpush1.xpose.msra.mxu0 0.0
        %681 = vmatprep.subr.mxu0 0.0
        %682 = vmatpush1.xpose.msra.mxu0 0.0
        %683 = vmatprep.subr.mxu0 0.0
        %684 = vmatpush1.xpose.msra.mxu0 0.0
        %685 = vmatprep.subr.mxu0 0.0
        %686 = vmatpush1.xpose.msra.mxu0 0.0
        %687 = vmatprep.subr.mxu0 0.0
        %688 = vmatpush1.xpose.msra.mxu0 0.0
        %689 = vmatprep.subr.mxu0 0.0
        %690 = vmatpush1.xpose.msra.mxu0 0.0
        %691 = vmatprep.subr.mxu0 0.0
        %692 = vmatpush1.xpose.msra.mxu0 0.0
        %693 = vmatprep.subr.mxu0 0.0
        %694 = vmatpush1.xpose.msra.mxu0 0.0
        %695 = vmatprep.subr.mxu0 0.0
        %696 = vmatpush1.xpose.msra.mxu0 %v665
        %697 = vmatprep.subr.mxu0 0.0
        %698 = vmatpush1.xpose.msra.mxu0 %v663
        %699 = vmatprep.subr.mxu0 0.0
        %700 = vmatpush2.xpose.msra.mxu0 0.0
        %701 = vmatprep.subr.mxu0 0.0
        %702 = vmatpush2.xpose.msra.mxu0 0.0
        %703 = vmatprep.subr.mxu0 0.0
        %704 = vmatpush2.xpose.msra.mxu0 0.0
        %705 = vmatprep.subr.mxu0 0.0
        %706 = vmatpush2.xpose.msra.mxu0 0.0
        %707 = vmatprep.subr.mxu0 0.0
        %708 = vmatpush2.xpose.msra.mxu0 0.0
        %709 = vmatprep.subr.mxu0 0.0
        %710 = vmatpush2.xpose.msra.mxu0 0.0
        %711 = vmatprep.subr.mxu0 0.0
        %712 = vmatpush2.xpose.msra.mxu0 0.0
        %713 = vmatprep.subr.mxu0 0.0
        %714 = vmatpush2.xpose.msra.mxu0 0.0
        %715 = vmatprep.subr.mxu0 0.0
        %716 = vmatpush2.xpose.msra.mxu0 0.0
        %717 = vmatprep.subr.mxu0 0.0
        %718 = vmatpush2.xpose.msra.mxu0 0.0
        %719 = vmatprep.subr.mxu0 0.0
        %720 = vmatpush2.xpose.msra.mxu0 0.0
        %721 = vmatprep.subr.mxu0 0.0
        %722 = vmatpush2.xpose.msra.mxu0 0.0
        %723 = vmatprep.subr.mxu0 0.0
        %724 = vmatpush2.xpose.msra.mxu0 0.0
        %725 = vmatprep.subr.mxu0 0.0
        %726 = vmatpush2.xpose.msra.mxu0 0.0
        %727 = vmatprep.subr.mxu0 0.0
        %728 = vmatpush2.xpose.msra.mxu0 0.0
        %729 = vmatprep.subr.mxu0 0.0
        %730 = vmatpush2.xpose.msra.mxu0 0.0
        %731 = vmatprep.mubr.f32.mxu0 0.0
        %732 = vmatmul.mubr.f32.gmra.mxu0 %v661
        %v733 = vpop.f32.mrf.mxu0
        %v734 = vadd.f32 0.0, %v733
        %v735 = vpop.f32.mrf.mxu0
        %736 = vdwg.mxu0
        %v737 = vsel %vm356, %v734, -inf
        %738 = vmax.xlane.f32.xlu0 %v737
        %v739 = vpop.xlane.xlu0 %738
        %v740 = vmax.f32 %v273, %v739
        %v741 = vsub.f32 %v273, %v740
        %v742 = vmul.f32 %v741, 1.442695
        %v743 = vpow.pop %v742
        %745 = vset.pattern.permute.xlu0 2
        %746 = vperm.xlu0 %745, %v740
        %v747 = vpop.permute.xlu0 %746
        %v749 = vsub.f32 %v734, %v747
        %v750 = vmul.f32 %v749, 1.442695
        %v751 = vpow.pop %v750
        %v752 = vmul.f32 %v743, %v274
        %v753 = vsel %vm356, %v751, 0.0
        %754 = vadd.xlane.f32.xlu0 %v753
        %v755 = vpop.xlane.xlu0 %754
        %v756 = vadd.f32 %v752, %v755
        %757 = vrot.lane.b32.xlu0 %v271, 48
        %v758 = vpop.permute.xlu0 %757
        %759 = vrot.lane.b32.xlu0 %v272, 48
        %v760 = vpop.permute.xlu0 %759
        %v764 = vsel %vm356, %v751, 0
        %766 = vmatprep.subr.mxu0 0.0
        %767 = vmatpush1.msra.mxu0 0.0
        %768 = vmatprep.subr.mxu0 0.0
        %769 = vmatpush1.msra.mxu0 0.0
        %770 = vmatprep.subr.mxu0 0.0
        %771 = vmatpush1.msra.mxu0 0.0
        %772 = vmatprep.subr.mxu0 0.0
        %773 = vmatpush1.msra.mxu0 0.0
        %774 = vmatprep.subr.mxu0 0.0
        %775 = vmatpush1.msra.mxu0 0.0
        %776 = vmatprep.subr.mxu0 0.0
        %777 = vmatpush1.msra.mxu0 0.0
        %778 = vmatprep.subr.mxu0 0.0
        %779 = vmatpush1.msra.mxu0 0.0
        %780 = vmatprep.subr.mxu0 0.0
        %781 = vmatpush1.msra.mxu0 0.0
        %782 = vmatprep.subr.mxu0 0.0
        %783 = vmatpush1.msra.mxu0 0.0
        %784 = vmatprep.subr.mxu0 0.0
        %785 = vmatpush1.msra.mxu0 0.0
        %786 = vmatprep.subr.mxu0 0.0
        %787 = vmatpush1.msra.mxu0 0.0
        %788 = vmatprep.subr.mxu0 0.0
        %789 = vmatpush1.msra.mxu0 0.0
        %790 = vmatprep.subr.mxu0 0.0
        %791 = vmatpush1.msra.mxu0 0.0
        %792 = vmatprep.subr.mxu0 0.0
        %793 = vmatpush1.msra.mxu0 0.0
        %794 = vmatprep.subr.mxu0 0.0
        %795 = vmatpush1.msra.mxu0 %v760
        %796 = vmatprep.subr.mxu0 0.0
        %797 = vmatpush1.msra.mxu0 %v758
        %798 = vmatprep.subr.mxu0 0.0
        %799 = vmatpush2.msra.mxu0 0.0
        %800 = vmatprep.subr.mxu0 0.0
        %801 = vmatpush2.msra.mxu0 0.0
        %802 = vmatprep.subr.mxu0 0.0
        %803 = vmatpush2.msra.mxu0 0.0
        %804 = vmatprep.subr.mxu0 0.0
        %805 = vmatpush2.msra.mxu0 0.0
        %806 = vmatprep.subr.mxu0 0.0
        %807 = vmatpush2.msra.mxu0 0.0
        %808 = vmatprep.subr.mxu0 0.0
        %809 = vmatpush2.msra.mxu0 0.0
        %810 = vmatprep.subr.mxu0 0.0
        %811 = vmatpush2.msra.mxu0 0.0
        %812 = vmatprep.subr.mxu0 0.0
        %813 = vmatpush2.msra.mxu0 0.0
        %814 = vmatprep.subr.mxu0 0.0
        %815 = vmatpush2.msra.mxu0 0.0
        %816 = vmatprep.subr.mxu0 0.0
        %817 = vmatpush2.msra.mxu0 0.0
        %818 = vmatprep.subr.mxu0 0.0
        %819 = vmatpush2.msra.mxu0 0.0
        %820 = vmatprep.subr.mxu0 0.0
        %821 = vmatpush2.msra.mxu0 0.0
        %822 = vmatprep.subr.mxu0 0.0
        %823 = vmatpush2.msra.mxu0 0.0
        %824 = vmatprep.subr.mxu0 0.0
        %825 = vmatpush2.msra.mxu0 0.0
        %826 = vmatprep.subr.mxu0 0.0
        %827 = vmatpush2.msra.mxu0 0.0
        %828 = vmatprep.subr.mxu0 0.0
        %829 = vmatpush2.msra.mxu0 0.0
        %830 = vmatprep.mubr.f32.mxu0 0.0
        %831 = vmatmul.mubr.f32.gmra.mxu0 %v764
        %v832 = vpop.f32.mrf.mxu0
        %v833 = vadd.f32 0.0, %v832
        %v834 = vpop.f32.mrf.mxu0
        %835 = vdwg.mxu0
        %837 = vset.pattern.permute.xlu0 2
        %838 = vperm.xlu0 %837, %v743
        %v839 = vpop.permute.xlu0 %838
        %v841 = vmul.f32 %v839, %v275
        %843 = vrot.lane.b32.xlu0 %v833, 16
        %v844 = vpop.permute.xlu0 %843
        %v846 = vadd.f32 %v841, %v844
        %847 = vrot.lane.b32.xlu0 %v270, 104
        %v848 = vpop.permute.xlu0 %847
        %849 = vrot.lane.b32.xlu0 %v271, 104
        %v850 = vpop.permute.xlu0 %849
        %851 = vrot.lane.b32.xlu0 %v272, 104
        %v852 = vpop.permute.xlu0 %851
        %v853 = vsel %vm276, %v848, 0
        %v855 = vsel %vm276, %v850, 0
        %v857 = vsel %vm276, %v852, 0
        %859 = vmatprep.subr.mxu0 0.0
        %860 = vmatpush1.xpose.msra.mxu0 0.0
        %861 = vmatprep.subr.mxu0 0.0
        %862 = vmatpush1.xpose.msra.mxu0 0.0
        %863 = vmatprep.subr.mxu0 0.0
        %864 = vmatpush1.xpose.msra.mxu0 0.0
        %865 = vmatprep.subr.mxu0 0.0
        %866 = vmatpush1.xpose.msra.mxu0 0.0
        %867 = vmatprep.subr.mxu0 0.0
        %868 = vmatpush1.xpose.msra.mxu0 0.0
        %869 = vmatprep.subr.mxu0 0.0
        %870 = vmatpush1.xpose.msra.mxu0 0.0
        %871 = vmatprep.subr.mxu0 0.0
        %872 = vmatpush1.xpose.msra.mxu0 0.0
        %873 = vmatprep.subr.mxu0 0.0
        %874 = vmatpush1.xpose.msra.mxu0 0.0
        %875 = vmatprep.subr.mxu0 0.0
        %876 = vmatpush1.xpose.msra.mxu0 0.0
        %877 = vmatprep.subr.mxu0 0.0
        %878 = vmatpush1.xpose.msra.mxu0 0.0
        %879 = vmatprep.subr.mxu0 0.0
        %880 = vmatpush1.xpose.msra.mxu0 0.0
        %881 = vmatprep.subr.mxu0 0.0
        %882 = vmatpush1.xpose.msra.mxu0 0.0
        %883 = vmatprep.subr.mxu0 0.0
        %884 = vmatpush1.xpose.msra.mxu0 0.0
        %885 = vmatprep.subr.mxu0 0.0
        %886 = vmatpush1.xpose.msra.mxu0 0.0
        %887 = vmatprep.subr.mxu0 0.0
        %888 = vmatpush1.xpose.msra.mxu0 %v857
        %889 = vmatprep.subr.mxu0 0.0
        %890 = vmatpush1.xpose.msra.mxu0 %v855
        %891 = vmatprep.subr.mxu0 0.0
        %892 = vmatpush2.xpose.msra.mxu0 0.0
        %893 = vmatprep.subr.mxu0 0.0
        %894 = vmatpush2.xpose.msra.mxu0 0.0
        %895 = vmatprep.subr.mxu0 0.0
        %896 = vmatpush2.xpose.msra.mxu0 0.0
        %897 = vmatprep.subr.mxu0 0.0
        %898 = vmatpush2.xpose.msra.mxu0 0.0
        %899 = vmatprep.subr.mxu0 0.0
        %900 = vmatpush2.xpose.msra.mxu0 0.0
        %901 = vmatprep.subr.mxu0 0.0
        %902 = vmatpush2.xpose.msra.mxu0 0.0
        %903 = vmatprep.subr.mxu0 0.0
        %904 = vmatpush2.xpose.msra.mxu0 0.0
        %905 = vmatprep.subr.mxu0 0.0
        %906 = vmatpush2.xpose.msra.mxu0 0.0
        %907 = vmatprep.subr.mxu0 0.0
        %908 = vmatpush2.xpose.msra.mxu0 0.0
        %909 = vmatprep.subr.mxu0 0.0
        %910 = vmatpush2.xpose.msra.mxu0 0.0
        %911 = vmatprep.subr.mxu0 0.0
        %912 = vmatpush2.xpose.msra.mxu0 0.0
        %913 = vmatprep.subr.mxu0 0.0
        %914 = vmatpush2.xpose.msra.mxu0 0.0
        %915 = vmatprep.subr.mxu0 0.0
        %916 = vmatpush2.xpose.msra.mxu0 0.0
        %917 = vmatprep.subr.mxu0 0.0
        %918 = vmatpush2.xpose.msra.mxu0 0.0
        %919 = vmatprep.subr.mxu0 0.0
        %920 = vmatpush2.xpose.msra.mxu0 0.0
        %921 = vmatprep.subr.mxu0 0.0
        %922 = vmatpush2.xpose.msra.mxu0 0.0
        %923 = vmatprep.mubr.f32.mxu0 0.0
        %924 = vmatmul.mubr.f32.gmra.mxu0 %v853
        %v925 = vpop.f32.mrf.mxu0
        %v926 = vadd.f32 0.0, %v925
        %v927 = vpop.f32.mrf.mxu0
        %928 = vdwg.mxu0
        %v929 = vsel %vm356, %v926, -inf
        %930 = vmax.xlane.f32.xlu0 %v929
        %v931 = vpop.xlane.xlu0 %930
        %v932 = vmax.f32 %v273, %v931
        %v933 = vsub.f32 %v273, %v932
        %v934 = vmul.f32 %v933, 1.442695
        %v935 = vpow.pop %v934
        %937 = vset.pattern.permute.xlu0 3
        %938 = vperm.xlu0 %937, %v932
        %v939 = vpop.permute.xlu0 %938
        %v941 = vsub.f32 %v926, %v939
        %v942 = vmul.f32 %v941, 1.442695
        %v943 = vpow.pop %v942
        %v944 = vmul.f32 %v935, %v274
        %v945 = vsel %vm356, %v943, 0.0
        %946 = vadd.xlane.f32.xlu0 %v945
        %v947 = vpop.xlane.xlu0 %946
        %v948 = vadd.f32 %v944, %v947
        %949 = vrot.lane.b32.xlu0 %v271, 40
        %v950 = vpop.permute.xlu0 %949
        %951 = vrot.lane.b32.xlu0 %v272, 40
        %v952 = vpop.permute.xlu0 %951
        %v956 = vsel %vm356, %v943, 0
        %958 = vmatprep.subr.mxu0 0.0
        %959 = vmatpush1.msra.mxu0 0.0
        %960 = vmatprep.subr.mxu0 0.0
        %961 = vmatpush1.msra.mxu0 0.0
        %962 = vmatprep.subr.mxu0 0.0
        %963 = vmatpush1.msra.mxu0 0.0
        %964 = vmatprep.subr.mxu0 0.0
        %965 = vmatpush1.msra.mxu0 0.0
        %966 = vmatprep.subr.mxu0 0.0
        %967 = vmatpush1.msra.mxu0 0.0
        %968 = vmatprep.subr.mxu0 0.0
        %969 = vmatpush1.msra.mxu0 0.0
        %970 = vmatprep.subr.mxu0 0.0
        %971 = vmatpush1.msra.mxu0 0.0
        %972 = vmatprep.subr.mxu0 0.0
        %973 = vmatpush1.msra.mxu0 0.0
        %974 = vmatprep.subr.mxu0 0.0
        %975 = vmatpush1.msra.mxu0 0.0
        %976 = vmatprep.subr.mxu0 0.0
        %977 = vmatpush1.msra.mxu0 0.0
        %978 = vmatprep.subr.mxu0 0.0
        %979 = vmatpush1.msra.mxu0 0.0
        %980 = vmatprep.subr.mxu0 0.0
        %981 = vmatpush1.msra.mxu0 0.0
        %982 = vmatprep.subr.mxu0 0.0
        %983 = vmatpush1.msra.mxu0 0.0
        %984 = vmatprep.subr.mxu0 0.0
        %985 = vmatpush1.msra.mxu0 0.0
        %986 = vmatprep.subr.mxu0 0.0
        %987 = vmatpush1.msra.mxu0 %v952
        %988 = vmatprep.subr.mxu0 0.0
        %989 = vmatpush1.msra.mxu0 %v950
        %990 = vmatprep.subr.mxu0 0.0
        %991 = vmatpush2.msra.mxu0 0.0
        %992 = vmatprep.subr.mxu0 0.0
        %993 = vmatpush2.msra.mxu0 0.0
        %994 = vmatprep.subr.mxu0 0.0
        %995 = vmatpush2.msra.mxu0 0.0
        %996 = vmatprep.subr.mxu0 0.0
        %997 = vmatpush2.msra.mxu0 0.0
        %998 = vmatprep.subr.mxu0 0.0
        %999 = vmatpush2.msra.mxu0 0.0
        %1000 = vmatprep.subr.mxu0 0.0
        %1001 = vmatpush2.msra.mxu0 0.0
        %1002 = vmatprep.subr.mxu0 0.0
        %1003 = vmatpush2.msra.mxu0 0.0
        %1004 = vmatprep.subr.mxu0 0.0
        %1005 = vmatpush2.msra.mxu0 0.0
        %1006 = vmatprep.subr.mxu0 0.0
        %1007 = vmatpush2.msra.mxu0 0.0
        %1008 = vmatprep.subr.mxu0 0.0
        %1009 = vmatpush2.msra.mxu0 0.0
        %1010 = vmatprep.subr.mxu0 0.0
        %1011 = vmatpush2.msra.mxu0 0.0
        %1012 = vmatprep.subr.mxu0 0.0
        %1013 = vmatpush2.msra.mxu0 0.0
        %1014 = vmatprep.subr.mxu0 0.0
        %1015 = vmatpush2.msra.mxu0 0.0
        %1016 = vmatprep.subr.mxu0 0.0
        %1017 = vmatpush2.msra.mxu0 0.0
        %1018 = vmatprep.subr.mxu0 0.0
        %1019 = vmatpush2.msra.mxu0 0.0
        %1020 = vmatprep.subr.mxu0 0.0
        %1021 = vmatpush2.msra.mxu0 0.0
        %1022 = vmatprep.mubr.f32.mxu0 0.0
        %1023 = vmatmul.mubr.f32.gmra.mxu0 %v956
        %v1024 = vpop.f32.mrf.mxu0
        %v1025 = vadd.f32 0.0, %v1024
        %v1026 = vpop.f32.mrf.mxu0
        %1027 = vdwg.mxu0
        %1029 = vset.pattern.permute.xlu0 3
        %1030 = vperm.xlu0 %1029, %v935
        %v1031 = vpop.permute.xlu0 %1030
        %v1033 = vmul.f32 %v1031, %v275
        %1035 = vrot.lane.b32.xlu0 %v1025, 24
        %v1036 = vpop.permute.xlu0 %1035
        %v1038 = vadd.f32 %v1033, %v1036
        %1039 = vrot.lane.b32.xlu0 %v270, 96
        %v1040 = vpop.permute.xlu0 %1039
        %1041 = vrot.lane.b32.xlu0 %v271, 96
        %v1042 = vpop.permute.xlu0 %1041
        %1043 = vrot.lane.b32.xlu0 %v272, 96
        %v1044 = vpop.permute.xlu0 %1043
        %v1045 = vsel %vm276, %v1040, 0
        %v1047 = vsel %vm276, %v1042, 0
        %v1049 = vsel %vm276, %v1044, 0
        %1051 = vmatprep.subr.mxu0 0.0
        %1052 = vmatpush1.xpose.msra.mxu0 0.0
        %1053 = vmatprep.subr.mxu0 0.0
        %1054 = vmatpush1.xpose.msra.mxu0 0.0
        %1055 = vmatprep.subr.mxu0 0.0
        %1056 = vmatpush1.xpose.msra.mxu0 0.0
        %1057 = vmatprep.subr.mxu0 0.0
        %1058 = vmatpush1.xpose.msra.mxu0 0.0
        %1059 = vmatprep.subr.mxu0 0.0
        %1060 = vmatpush1.xpose.msra.mxu0 0.0
        %1061 = vmatprep.subr.mxu0 0.0
        %1062 = vmatpush1.xpose.msra.mxu0 0.0
        %1063 = vmatprep.subr.mxu0 0.0
        %1064 = vmatpush1.xpose.msra.mxu0 0.0
        %1065 = vmatprep.subr.mxu0 0.0
        %1066 = vmatpush1.xpose.msra.mxu0 0.0
        %1067 = vmatprep.subr.mxu0 0.0
        %1068 = vmatpush1.xpose.msra.mxu0 0.0
        %1069 = vmatprep.subr.mxu0 0.0
        %1070 = vmatpush1.xpose.msra.mxu0 0.0
        %1071 = vmatprep.subr.mxu0 0.0
        %1072 = vmatpush1.xpose.msra.mxu0 0.0
        %1073 = vmatprep.subr.mxu0 0.0
        %1074 = vmatpush1.xpose.msra.mxu0 0.0
        %1075 = vmatprep.subr.mxu0 0.0
        %1076 = vmatpush1.xpose.msra.mxu0 0.0
        %1077 = vmatprep.subr.mxu0 0.0
        %1078 = vmatpush1.xpose.msra.mxu0 0.0
        %1079 = vmatprep.subr.mxu0 0.0
        %1080 = vmatpush1.xpose.msra.mxu0 %v1049
        %1081 = vmatprep.subr.mxu0 0.0
        %1082 = vmatpush1.xpose.msra.mxu0 %v1047
        %1083 = vmatprep.subr.mxu0 0.0
        %1084 = vmatpush2.xpose.msra.mxu0 0.0
        %1085 = vmatprep.subr.mxu0 0.0
        %1086 = vmatpush2.xpose.msra.mxu0 0.0
        %1087 = vmatprep.subr.mxu0 0.0
        %1088 = vmatpush2.xpose.msra.mxu0 0.0
        %1089 = vmatprep.subr.mxu0 0.0
        %1090 = vmatpush2.xpose.msra.mxu0 0.0
        %1091 = vmatprep.subr.mxu0 0.0
        %1092 = vmatpush2.xpose.msra.mxu0 0.0
        %1093 = vmatprep.subr.mxu0 0.0
        %1094 = vmatpush2.xpose.msra.mxu0 0.0
        %1095 = vmatprep.subr.mxu0 0.0
        %1096 = vmatpush2.xpose.msra.mxu0 0.0
        %1097 = vmatprep.subr.mxu0 0.0
        %1098 = vmatpush2.xpose.msra.mxu0 0.0
        %1099 = vmatprep.subr.mxu0 0.0
        %1100 = vmatpush2.xpose.msra.mxu0 0.0
        %1101 = vmatprep.subr.mxu0 0.0
        %1102 = vmatpush2.xpose.msra.mxu0 0.0
        %1103 = vmatprep.subr.mxu0 0.0
        %1104 = vmatpush2.xpose.msra.mxu0 0.0
        %1105 = vmatprep.subr.mxu0 0.0
        %1106 = vmatpush2.xpose.msra.mxu0 0.0
        %1107 = vmatprep.subr.mxu0 0.0
        %1108 = vmatpush2.xpose.msra.mxu0 0.0
        %1109 = vmatprep.subr.mxu0 0.0
        %1110 = vmatpush2.xpose.msra.mxu0 0.0
        %1111 = vmatprep.subr.mxu0 0.0
        %1112 = vmatpush2.xpose.msra.mxu0 0.0
        %1113 = vmatprep.subr.mxu0 0.0
        %1114 = vmatpush2.xpose.msra.mxu0 0.0
        %1115 = vmatprep.mubr.f32.mxu0 0.0
        %1116 = vmatmul.mubr.f32.gmra.mxu0 %v1045
        %v1117 = vpop.f32.mrf.mxu0
        %v1118 = vadd.f32 0.0, %v1117
        %v1119 = vpop.f32.mrf.mxu0
        %1120 = vdwg.mxu0
        %v1121 = vsel %vm356, %v1118, -inf
        %1122 = vmax.xlane.f32.xlu0 %v1121
        %v1123 = vpop.xlane.xlu0 %1122
        %v1124 = vmax.f32 %v273, %v1123
        %v1125 = vsub.f32 %v273, %v1124
        %v1126 = vmul.f32 %v1125, 1.442695
        %v1127 = vpow.pop %v1126
        %1129 = vset.pattern.permute.xlu0 4
        %1130 = vperm.xlu0 %1129, %v1124
        %v1131 = vpop.permute.xlu0 %1130
        %v1133 = vsub.f32 %v1118, %v1131
        %v1134 = vmul.f32 %v1133, 1.442695
        %v1135 = vpow.pop %v1134
        %v1136 = vmul.f32 %v1127, %v274
        %v1137 = vsel %vm356, %v1135, 0.0
        %1138 = vadd.xlane.f32.xlu0 %v1137
        %v1139 = vpop.xlane.xlu0 %1138
        %v1140 = vadd.f32 %v1136, %v1139
        %1141 = vrot.lane.b32.xlu0 %v271, 32
        %v1142 = vpop.permute.xlu0 %1141
        %1143 = vrot.lane.b32.xlu0 %v272, 32
        %v1144 = vpop.permute.xlu0 %1143
        %v1148 = vsel %vm356, %v1135, 0
        %1150 = vmatprep.subr.mxu0 0.0
        %1151 = vmatpush1.msra.mxu0 0.0
        %1152 = vmatprep.subr.mxu0 0.0
        %1153 = vmatpush1.msra.mxu0 0.0
        %1154 = vmatprep.subr.mxu0 0.0
        %1155 = vmatpush1.msra.mxu0 0.0
        %1156 = vmatprep.subr.mxu0 0.0
        %1157 = vmatpush1.msra.mxu0 0.0
        %1158 = vmatprep.subr.mxu0 0.0
        %1159 = vmatpush1.msra.mxu0 0.0
        %1160 = vmatprep.subr.mxu0 0.0
        %1161 = vmatpush1.msra.mxu0 0.0
        %1162 = vmatprep.subr.mxu0 0.0
        %1163 = vmatpush1.msra.mxu0 0.0
        %1164 = vmatprep.subr.mxu0 0.0
        %1165 = vmatpush1.msra.mxu0 0.0
        %1166 = vmatprep.subr.mxu0 0.0
        %1167 = vmatpush1.msra.mxu0 0.0
        %1168 = vmatprep.subr.mxu0 0.0
        %1169 = vmatpush1.msra.mxu0 0.0
        %1170 = vmatprep.subr.mxu0 0.0
        %1171 = vmatpush1.msra.mxu0 0.0
        %1172 = vmatprep.subr.mxu0 0.0
        %1173 = vmatpush1.msra.mxu0 0.0
        %1174 = vmatprep.subr.mxu0 0.0
        %1175 = vmatpush1.msra.mxu0 0.0
        %1176 = vmatprep.subr.mxu0 0.0
        %1177 = vmatpush1.msra.mxu0 0.0
        %1178 = vmatprep.subr.mxu0 0.0
        %1179 = vmatpush1.msra.mxu0 %v1144
        %1180 = vmatprep.subr.mxu0 0.0
        %1181 = vmatpush1.msra.mxu0 %v1142
        %1182 = vmatprep.subr.mxu0 0.0
        %1183 = vmatpush2.msra.mxu0 0.0
        %1184 = vmatprep.subr.mxu0 0.0
        %1185 = vmatpush2.msra.mxu0 0.0
        %1186 = vmatprep.subr.mxu0 0.0
        %1187 = vmatpush2.msra.mxu0 0.0
        %1188 = vmatprep.subr.mxu0 0.0
        %1189 = vmatpush2.msra.mxu0 0.0
        %1190 = vmatprep.subr.mxu0 0.0
        %1191 = vmatpush2.msra.mxu0 0.0
        %1192 = vmatprep.subr.mxu0 0.0
        %1193 = vmatpush2.msra.mxu0 0.0
        %1194 = vmatprep.subr.mxu0 0.0
        %1195 = vmatpush2.msra.mxu0 0.0
        %1196 = vmatprep.subr.mxu0 0.0
        %1197 = vmatpush2.msra.mxu0 0.0
        %1198 = vmatprep.subr.mxu0 0.0
        %1199 = vmatpush2.msra.mxu0 0.0
        %1200 = vmatprep.subr.mxu0 0.0
        %1201 = vmatpush2.msra.mxu0 0.0
        %1202 = vmatprep.subr.mxu0 0.0
        %1203 = vmatpush2.msra.mxu0 0.0
        %1204 = vmatprep.subr.mxu0 0.0
        %1205 = vmatpush2.msra.mxu0 0.0
        %1206 = vmatprep.subr.mxu0 0.0
        %1207 = vmatpush2.msra.mxu0 0.0
        %1208 = vmatprep.subr.mxu0 0.0
        %1209 = vmatpush2.msra.mxu0 0.0
        %1210 = vmatprep.subr.mxu0 0.0
        %1211 = vmatpush2.msra.mxu0 0.0
        %1212 = vmatprep.subr.mxu0 0.0
        %1213 = vmatpush2.msra.mxu0 0.0
        %1214 = vmatprep.mubr.f32.mxu0 0.0
        %1215 = vmatmul.mubr.f32.gmra.mxu0 %v1148
        %v1216 = vpop.f32.mrf.mxu0
        %v1217 = vadd.f32 0.0, %v1216
        %v1218 = vpop.f32.mrf.mxu0
        %1219 = vdwg.mxu0
        %1221 = vset.pattern.permute.xlu0 4
        %1222 = vperm.xlu0 %1221, %v1127
        %v1223 = vpop.permute.xlu0 %1222
        %v1225 = vmul.f32 %v1223, %v275
        %1227 = vrot.lane.b32.xlu0 %v1217, 32
        %v1228 = vpop.permute.xlu0 %1227
        %v1230 = vadd.f32 %v1225, %v1228
        %1231 = vrot.lane.b32.xlu0 %v270, 88
        %v1232 = vpop.permute.xlu0 %1231
        %1233 = vrot.lane.b32.xlu0 %v271, 88
        %v1234 = vpop.permute.xlu0 %1233
        %1235 = vrot.lane.b32.xlu0 %v272, 88
        %v1236 = vpop.permute.xlu0 %1235
        %v1237 = vsel %vm276, %v1232, 0
        %v1239 = vsel %vm276, %v1234, 0
        %v1241 = vsel %vm276, %v1236, 0
        %1243 = vmatprep.subr.mxu0 0.0
        %1244 = vmatpush1.xpose.msra.mxu0 0.0
        %1245 = vmatprep.subr.mxu0 0.0
        %1246 = vmatpush1.xpose.msra.mxu0 0.0
        %1247 = vmatprep.subr.mxu0 0.0
        %1248 = vmatpush1.xpose.msra.mxu0 0.0
        %1249 = vmatprep.subr.mxu0 0.0
        %1250 = vmatpush1.xpose.msra.mxu0 0.0
        %1251 = vmatprep.subr.mxu0 0.0
        %1252 = vmatpush1.xpose.msra.mxu0 0.0
        %1253 = vmatprep.subr.mxu0 0.0
        %1254 = vmatpush1.xpose.msra.mxu0 0.0
        %1255 = vmatprep.subr.mxu0 0.0
        %1256 = vmatpush1.xpose.msra.mxu0 0.0
        %1257 = vmatprep.subr.mxu0 0.0
        %1258 = vmatpush1.xpose.msra.mxu0 0.0
        %1259 = vmatprep.subr.mxu0 0.0
        %1260 = vmatpush1.xpose.msra.mxu0 0.0
        %1261 = vmatprep.subr.mxu0 0.0
        %1262 = vmatpush1.xpose.msra.mxu0 0.0
        %1263 = vmatprep.subr.mxu0 0.0
        %1264 = vmatpush1.xpose.msra.mxu0 0.0
        %1265 = vmatprep.subr.mxu0 0.0
        %1266 = vmatpush1.xpose.msra.mxu0 0.0
        %1267 = vmatprep.subr.mxu0 0.0
        %1268 = vmatpush1.xpose.msra.mxu0 0.0
        %1269 = vmatprep.subr.mxu0 0.0
        %1270 = vmatpush1.xpose.msra.mxu0 0.0
        %1271 = vmatprep.subr.mxu0 0.0
        %1272 = vmatpush1.xpose.msra.mxu0 %v1241
        %1273 = vmatprep.subr.mxu0 0.0
        %1274 = vmatpush1.xpose.msra.mxu0 %v1239
        %1275 = vmatprep.subr.mxu0 0.0
        %1276 = vmatpush2.xpose.msra.mxu0 0.0
        %1277 = vmatprep.subr.mxu0 0.0
        %1278 = vmatpush2.xpose.msra.mxu0 0.0
        %1279 = vmatprep.subr.mxu0 0.0
        %1280 = vmatpush2.xpose.msra.mxu0 0.0
        %1281 = vmatprep.subr.mxu0 0.0
        %1282 = vmatpush2.xpose.msra.mxu0 0.0
        %1283 = vmatprep.subr.mxu0 0.0
        %1284 = vmatpush2.xpose.msra.mxu0 0.0
        %1285 = vmatprep.subr.mxu0 0.0
        %1286 = vmatpush2.xpose.msra.mxu0 0.0
        %1287 = vmatprep.subr.mxu0 0.0
        %1288 = vmatpush2.xpose.msra.mxu0 0.0
        %1289 = vmatprep.subr.mxu0 0.0
        %1290 = vmatpush2.xpose.msra.mxu0 0.0
        %1291 = vmatprep.subr.mxu0 0.0
        %1292 = vmatpush2.xpose.msra.mxu0 0.0
        %1293 = vmatprep.subr.mxu0 0.0
        %1294 = vmatpush2.xpose.msra.mxu0 0.0
        %1295 = vmatprep.subr.mxu0 0.0
        %1296 = vmatpush2.xpose.msra.mxu0 0.0
        %1297 = vmatprep.subr.mxu0 0.0
        %1298 = vmatpush2.xpose.msra.mxu0 0.0
        %1299 = vmatprep.subr.mxu0 0.0
        %1300 = vmatpush2.xpose.msra.mxu0 0.0
        %1301 = vmatprep.subr.mxu0 0.0
        %1302 = vmatpush2.xpose.msra.mxu0 0.0
        %1303 = vmatprep.subr.mxu0 0.0
        %1304 = vmatpush2.xpose.msra.mxu0 0.0
        %1305 = vmatprep.subr.mxu0 0.0
        %1306 = vmatpush2.xpose.msra.mxu0 0.0
        %1307 = vmatprep.mubr.f32.mxu0 0.0
        %1308 = vmatmul.mubr.f32.gmra.mxu0 %v1237
        %v1309 = vpop.f32.mrf.mxu0
        %v1310 = vadd.f32 0.0, %v1309
        %v1311 = vpop.f32.mrf.mxu0
        %1312 = vdwg.mxu0
        %v1313 = vsel %vm356, %v1310, -inf
        %1314 = vmax.xlane.f32.xlu0 %v1313
        %v1315 = vpop.xlane.xlu0 %1314
        %v1316 = vmax.f32 %v273, %v1315
        %v1317 = vsub.f32 %v273, %v1316
        %v1318 = vmul.f32 %v1317, 1.442695
        %v1319 = vpow.pop %v1318
        %1321 = vset.pattern.permute.xlu0 5
        %1322 = vperm.xlu0 %1321, %v1316
        %v1323 = vpop.permute.xlu0 %1322
        %v1325 = vsub.f32 %v1310, %v1323
        %v1326 = vmul.f32 %v1325, 1.442695
        %v1327 = vpow.pop %v1326
        %v1328 = vmul.f32 %v1319, %v274
        %v1329 = vsel %vm356, %v1327, 0.0
        %1330 = vadd.xlane.f32.xlu0 %v1329
        %v1331 = vpop.xlane.xlu0 %1330
        %v1332 = vadd.f32 %v1328, %v1331
        %1333 = vrot.lane.b32.xlu0 %v271, 24
        %v1334 = vpop.permute.xlu0 %1333
        %1335 = vrot.lane.b32.xlu0 %v272, 24
        %v1336 = vpop.permute.xlu0 %1335
        %v1340 = vsel %vm356, %v1327, 0
        %1342 = vmatprep.subr.mxu0 0.0
        %1343 = vmatpush1.msra.mxu0 0.0
        %1344 = vmatprep.subr.mxu0 0.0
        %1345 = vmatpush1.msra.mxu0 0.0
        %1346 = vmatprep.subr.mxu0 0.0
        %1347 = vmatpush1.msra.mxu0 0.0
        %1348 = vmatprep.subr.mxu0 0.0
        %1349 = vmatpush1.msra.mxu0 0.0
        %1350 = vmatprep.subr.mxu0 0.0
        %1351 = vmatpush1.msra.mxu0 0.0
        %1352 = vmatprep.subr.mxu0 0.0
        %1353 = vmatpush1.msra.mxu0 0.0
        %1354 = vmatprep.subr.mxu0 0.0
        %1355 = vmatpush1.msra.mxu0 0.0
        %1356 = vmatprep.subr.mxu0 0.0
        %1357 = vmatpush1.msra.mxu0 0.0
        %1358 = vmatprep.subr.mxu0 0.0
        %1359 = vmatpush1.msra.mxu0 0.0
        %1360 = vmatprep.subr.mxu0 0.0
        %1361 = vmatpush1.msra.mxu0 0.0
        %1362 = vmatprep.subr.mxu0 0.0
        %1363 = vmatpush1.msra.mxu0 0.0
        %1364 = vmatprep.subr.mxu0 0.0
        %1365 = vmatpush1.msra.mxu0 0.0
        %1366 = vmatprep.subr.mxu0 0.0
        %1367 = vmatpush1.msra.mxu0 0.0
        %1368 = vmatprep.subr.mxu0 0.0
        %1369 = vmatpush1.msra.mxu0 0.0
        %1370 = vmatprep.subr.mxu0 0.0
        %1371 = vmatpush1.msra.mxu0 %v1336
        %1372 = vmatprep.subr.mxu0 0.0
        %1373 = vmatpush1.msra.mxu0 %v1334
        %1374 = vmatprep.subr.mxu0 0.0
        %1375 = vmatpush2.msra.mxu0 0.0
        %1376 = vmatprep.subr.mxu0 0.0
        %1377 = vmatpush2.msra.mxu0 0.0
        %1378 = vmatprep.subr.mxu0 0.0
        %1379 = vmatpush2.msra.mxu0 0.0
        %1380 = vmatprep.subr.mxu0 0.0
        %1381 = vmatpush2.msra.mxu0 0.0
        %1382 = vmatprep.subr.mxu0 0.0
        %1383 = vmatpush2.msra.mxu0 0.0
        %1384 = vmatprep.subr.mxu0 0.0
        %1385 = vmatpush2.msra.mxu0 0.0
        %1386 = vmatprep.subr.mxu0 0.0
        %1387 = vmatpush2.msra.mxu0 0.0
        %1388 = vmatprep.subr.mxu0 0.0
        %1389 = vmatpush2.msra.mxu0 0.0
        %1390 = vmatprep.subr.mxu0 0.0
        %1391 = vmatpush2.msra.mxu0 0.0
        %1392 = vmatprep.subr.mxu0 0.0
        %1393 = vmatpush2.msra.mxu0 0.0
        %1394 = vmatprep.subr.mxu0 0.0
        %1395 = vmatpush2.msra.mxu0 0.0
        %1396 = vmatprep.subr.mxu0 0.0
        %1397 = vmatpush2.msra.mxu0 0.0
        %1398 = vmatprep.subr.mxu0 0.0
        %1399 = vmatpush2.msra.mxu0 0.0
        %1400 = vmatprep.subr.mxu0 0.0
        %1401 = vmatpush2.msra.mxu0 0.0
        %1402 = vmatprep.subr.mxu0 0.0
        %1403 = vmatpush2.msra.mxu0 0.0
        %1404 = vmatprep.subr.mxu0 0.0
        %1405 = vmatpush2.msra.mxu0 0.0
        %1406 = vmatprep.mubr.f32.mxu0 0.0
        %1407 = vmatmul.mubr.f32.gmra.mxu0 %v1340
        %v1408 = vpop.f32.mrf.mxu0
        %v1409 = vadd.f32 0.0, %v1408
        %v1410 = vpop.f32.mrf.mxu0
        %1411 = vdwg.mxu0
        %1413 = vset.pattern.permute.xlu0 5
        %1414 = vperm.xlu0 %1413, %v1319
        %v1415 = vpop.permute.xlu0 %1414
        %v1417 = vmul.f32 %v1415, %v275
        %1419 = vrot.lane.b32.xlu0 %v1409, 40
        %v1420 = vpop.permute.xlu0 %1419
        %v1422 = vadd.f32 %v1417, %v1420
        %1423 = vrot.lane.b32.xlu0 %v270, 80
        %v1424 = vpop.permute.xlu0 %1423
        %1425 = vrot.lane.b32.xlu0 %v271, 80
        %v1426 = vpop.permute.xlu0 %1425
        %1427 = vrot.lane.b32.xlu0 %v272, 80
        %v1428 = vpop.permute.xlu0 %1427
        %v1429 = vsel %vm276, %v1424, 0
        %v1431 = vsel %vm276, %v1426, 0
        %v1433 = vsel %vm276, %v1428, 0
        %1435 = vmatprep.subr.mxu0 0.0
        %1436 = vmatpush1.xpose.msra.mxu0 0.0
        %1437 = vmatprep.subr.mxu0 0.0
        %1438 = vmatpush1.xpose.msra.mxu0 0.0
        %1439 = vmatprep.subr.mxu0 0.0
        %1440 = vmatpush1.xpose.msra.mxu0 0.0
        %1441 = vmatprep.subr.mxu0 0.0
        %1442 = vmatpush1.xpose.msra.mxu0 0.0
        %1443 = vmatprep.subr.mxu0 0.0
        %1444 = vmatpush1.xpose.msra.mxu0 0.0
        %1445 = vmatprep.subr.mxu0 0.0
        %1446 = vmatpush1.xpose.msra.mxu0 0.0
        %1447 = vmatprep.subr.mxu0 0.0
        %1448 = vmatpush1.xpose.msra.mxu0 0.0
        %1449 = vmatprep.subr.mxu0 0.0
        %1450 = vmatpush1.xpose.msra.mxu0 0.0
        %1451 = vmatprep.subr.mxu0 0.0
        %1452 = vmatpush1.xpose.msra.mxu0 0.0
        %1453 = vmatprep.subr.mxu0 0.0
        %1454 = vmatpush1.xpose.msra.mxu0 0.0
        %1455 = vmatprep.subr.mxu0 0.0
        %1456 = vmatpush1.xpose.msra.mxu0 0.0
        %1457 = vmatprep.subr.mxu0 0.0
        %1458 = vmatpush1.xpose.msra.mxu0 0.0
        %1459 = vmatprep.subr.mxu0 0.0
        %1460 = vmatpush1.xpose.msra.mxu0 0.0
        %1461 = vmatprep.subr.mxu0 0.0
        %1462 = vmatpush1.xpose.msra.mxu0 0.0
        %1463 = vmatprep.subr.mxu0 0.0
        %1464 = vmatpush1.xpose.msra.mxu0 %v1433
        %1465 = vmatprep.subr.mxu0 0.0
        %1466 = vmatpush1.xpose.msra.mxu0 %v1431
        %1467 = vmatprep.subr.mxu0 0.0
        %1468 = vmatpush2.xpose.msra.mxu0 0.0
        %1469 = vmatprep.subr.mxu0 0.0
        %1470 = vmatpush2.xpose.msra.mxu0 0.0
        %1471 = vmatprep.subr.mxu0 0.0
        %1472 = vmatpush2.xpose.msra.mxu0 0.0
        %1473 = vmatprep.subr.mxu0 0.0
        %1474 = vmatpush2.xpose.msra.mxu0 0.0
        %1475 = vmatprep.subr.mxu0 0.0
        %1476 = vmatpush2.xpose.msra.mxu0 0.0
        %1477 = vmatprep.subr.mxu0 0.0
        %1478 = vmatpush2.xpose.msra.mxu0 0.0
        %1479 = vmatprep.subr.mxu0 0.0
        %1480 = vmatpush2.xpose.msra.mxu0 0.0
        %1481 = vmatprep.subr.mxu0 0.0
        %1482 = vmatpush2.xpose.msra.mxu0 0.0
        %1483 = vmatprep.subr.mxu0 0.0
        %1484 = vmatpush2.xpose.msra.mxu0 0.0
        %1485 = vmatprep.subr.mxu0 0.0
        %1486 = vmatpush2.xpose.msra.mxu0 0.0
        %1487 = vmatprep.subr.mxu0 0.0
        %1488 = vmatpush2.xpose.msra.mxu0 0.0
        %1489 = vmatprep.subr.mxu0 0.0
        %1490 = vmatpush2.xpose.msra.mxu0 0.0
        %1491 = vmatprep.subr.mxu0 0.0
        %1492 = vmatpush2.xpose.msra.mxu0 0.0
        %1493 = vmatprep.subr.mxu0 0.0
        %1494 = vmatpush2.xpose.msra.mxu0 0.0
        %1495 = vmatprep.subr.mxu0 0.0
        %1496 = vmatpush2.xpose.msra.mxu0 0.0
        %1497 = vmatprep.subr.mxu0 0.0
        %1498 = vmatpush2.xpose.msra.mxu0 0.0
        %1499 = vmatprep.mubr.f32.mxu0 0.0
        %1500 = vmatmul.mubr.f32.gmra.mxu0 %v1429
        %v1501 = vpop.f32.mrf.mxu0
        %v1502 = vadd.f32 0.0, %v1501
        %v1503 = vpop.f32.mrf.mxu0
        %1504 = vdwg.mxu0
        %v1505 = vsel %vm356, %v1502, -inf
        %1506 = vmax.xlane.f32.xlu0 %v1505
        %v1507 = vpop.xlane.xlu0 %1506
        %v1508 = vmax.f32 %v273, %v1507
        %v1509 = vsub.f32 %v273, %v1508
        %v1510 = vmul.f32 %v1509, 1.442695
        %v1511 = vpow.pop %v1510
        %1513 = vset.pattern.permute.xlu0 6
        %1514 = vperm.xlu0 %1513, %v1508
        %v1515 = vpop.permute.xlu0 %1514
        %v1517 = vsub.f32 %v1502, %v1515
        %v1518 = vmul.f32 %v1517, 1.442695
        %v1519 = vpow.pop %v1518
        %v1520 = vmul.f32 %v1511, %v274
        %v1521 = vsel %vm356, %v1519, 0.0
        %1522 = vadd.xlane.f32.xlu0 %v1521
        %v1523 = vpop.xlane.xlu0 %1522
        %v1524 = vadd.f32 %v1520, %v1523
        %1525 = vrot.lane.b32.xlu0 %v271, 16
        %v1526 = vpop.permute.xlu0 %1525
        %1527 = vrot.lane.b32.xlu0 %v272, 16
        %v1528 = vpop.permute.xlu0 %1527
        %v1532 = vsel %vm356, %v1519, 0
        %1534 = vmatprep.subr.mxu0 0.0
        %1535 = vmatpush1.msra.mxu0 0.0
        %1536 = vmatprep.subr.mxu0 0.0
        %1537 = vmatpush1.msra.mxu0 0.0
        %1538 = vmatprep.subr.mxu0 0.0
        %1539 = vmatpush1.msra.mxu0 0.0
        %1540 = vmatprep.subr.mxu0 0.0
        %1541 = vmatpush1.msra.mxu0 0.0
        %1542 = vmatprep.subr.mxu0 0.0
        %1543 = vmatpush1.msra.mxu0 0.0
        %1544 = vmatprep.subr.mxu0 0.0
        %1545 = vmatpush1.msra.mxu0 0.0
        %1546 = vmatprep.subr.mxu0 0.0
        %1547 = vmatpush1.msra.mxu0 0.0
        %1548 = vmatprep.subr.mxu0 0.0
        %1549 = vmatpush1.msra.mxu0 0.0
        %1550 = vmatprep.subr.mxu0 0.0
        %1551 = vmatpush1.msra.mxu0 0.0
        %1552 = vmatprep.subr.mxu0 0.0
        %1553 = vmatpush1.msra.mxu0 0.0
        %1554 = vmatprep.subr.mxu0 0.0
        %1555 = vmatpush1.msra.mxu0 0.0
        %1556 = vmatprep.subr.mxu0 0.0
        %1557 = vmatpush1.msra.mxu0 0.0
        %1558 = vmatprep.subr.mxu0 0.0
        %1559 = vmatpush1.msra.mxu0 0.0
        %1560 = vmatprep.subr.mxu0 0.0
        %1561 = vmatpush1.msra.mxu0 0.0
        %1562 = vmatprep.subr.mxu0 0.0
        %1563 = vmatpush1.msra.mxu0 %v1528
        %1564 = vmatprep.subr.mxu0 0.0
        %1565 = vmatpush1.msra.mxu0 %v1526
        %1566 = vmatprep.subr.mxu0 0.0
        %1567 = vmatpush2.msra.mxu0 0.0
        %1568 = vmatprep.subr.mxu0 0.0
        %1569 = vmatpush2.msra.mxu0 0.0
        %1570 = vmatprep.subr.mxu0 0.0
        %1571 = vmatpush2.msra.mxu0 0.0
        %1572 = vmatprep.subr.mxu0 0.0
        %1573 = vmatpush2.msra.mxu0 0.0
        %1574 = vmatprep.subr.mxu0 0.0
        %1575 = vmatpush2.msra.mxu0 0.0
        %1576 = vmatprep.subr.mxu0 0.0
        %1577 = vmatpush2.msra.mxu0 0.0
        %1578 = vmatprep.subr.mxu0 0.0
        %1579 = vmatpush2.msra.mxu0 0.0
        %1580 = vmatprep.subr.mxu0 0.0
        %1581 = vmatpush2.msra.mxu0 0.0
        %1582 = vmatprep.subr.mxu0 0.0
        %1583 = vmatpush2.msra.mxu0 0.0
        %1584 = vmatprep.subr.mxu0 0.0
        %1585 = vmatpush2.msra.mxu0 0.0
        %1586 = vmatprep.subr.mxu0 0.0
        %1587 = vmatpush2.msra.mxu0 0.0
        %1588 = vmatprep.subr.mxu0 0.0
        %1589 = vmatpush2.msra.mxu0 0.0
        %1590 = vmatprep.subr.mxu0 0.0
        %1591 = vmatpush2.msra.mxu0 0.0
        %1592 = vmatprep.subr.mxu0 0.0
        %1593 = vmatpush2.msra.mxu0 0.0
        %1594 = vmatprep.subr.mxu0 0.0
        %1595 = vmatpush2.msra.mxu0 0.0
        %1596 = vmatprep.subr.mxu0 0.0
        %1597 = vmatpush2.msra.mxu0 0.0
        %1598 = vmatprep.mubr.f32.mxu0 0.0
        %1599 = vmatmul.mubr.f32.gmra.mxu0 %v1532
        %v1600 = vpop.f32.mrf.mxu0
        %v1601 = vadd.f32 0.0, %v1600
        %v1602 = vpop.f32.mrf.mxu0
        %1603 = vdwg.mxu0
        %1605 = vset.pattern.permute.xlu0 6
        %1606 = vperm.xlu0 %1605, %v1511
        %v1607 = vpop.permute.xlu0 %1606
        %v1609 = vmul.f32 %v1607, %v275
        %1611 = vrot.lane.b32.xlu0 %v1601, 48
        %v1612 = vpop.permute.xlu0 %1611
        %v1614 = vadd.f32 %v1609, %v1612
        %1615 = vrot.lane.b32.xlu0 %v270, 72
        %v1616 = vpop.permute.xlu0 %1615
        %1617 = vrot.lane.b32.xlu0 %v271, 72
        %v1618 = vpop.permute.xlu0 %1617
        %1619 = vrot.lane.b32.xlu0 %v272, 72
        %v1620 = vpop.permute.xlu0 %1619
        %v1621 = vsel %vm276, %v1616, 0
        %v1623 = vsel %vm276, %v1618, 0
        %v1625 = vsel %vm276, %v1620, 0
        %1627 = vmatprep.subr.mxu0 0.0
        %1628 = vmatpush1.xpose.msra.mxu0 0.0
        %1629 = vmatprep.subr.mxu0 0.0
        %1630 = vmatpush1.xpose.msra.mxu0 0.0
        %1631 = vmatprep.subr.mxu0 0.0
        %1632 = vmatpush1.xpose.msra.mxu0 0.0
        %1633 = vmatprep.subr.mxu0 0.0
        %1634 = vmatpush1.xpose.msra.mxu0 0.0
        %1635 = vmatprep.subr.mxu0 0.0
        %1636 = vmatpush1.xpose.msra.mxu0 0.0
        %1637 = vmatprep.subr.mxu0 0.0
        %1638 = vmatpush1.xpose.msra.mxu0 0.0
        %1639 = vmatprep.subr.mxu0 0.0
        %1640 = vmatpush1.xpose.msra.mxu0 0.0
        %1641 = vmatprep.subr.mxu0 0.0
        %1642 = vmatpush1.xpose.msra.mxu0 0.0
        %1643 = vmatprep.subr.mxu0 0.0
        %1644 = vmatpush1.xpose.msra.mxu0 0.0
        %1645 = vmatprep.subr.mxu0 0.0
        %1646 = vmatpush1.xpose.msra.mxu0 0.0
        %1647 = vmatprep.subr.mxu0 0.0
        %1648 = vmatpush1.xpose.msra.mxu0 0.0
        %1649 = vmatprep.subr.mxu0 0.0
        %1650 = vmatpush1.xpose.msra.mxu0 0.0
        %1651 = vmatprep.subr.mxu0 0.0
        %1652 = vmatpush1.xpose.msra.mxu0 0.0
        %1653 = vmatprep.subr.mxu0 0.0
        %1654 = vmatpush1.xpose.msra.mxu0 0.0
        %1655 = vmatprep.subr.mxu0 0.0
        %1656 = vmatpush1.xpose.msra.mxu0 %v1625
        %1657 = vmatprep.subr.mxu0 0.0
        %1658 = vmatpush1.xpose.msra.mxu0 %v1623
        %1659 = vmatprep.subr.mxu0 0.0
        %1660 = vmatpush2.xpose.msra.mxu0 0.0
        %1661 = vmatprep.subr.mxu0 0.0
        %1662 = vmatpush2.xpose.msra.mxu0 0.0
        %1663 = vmatprep.subr.mxu0 0.0
        %1664 = vmatpush2.xpose.msra.mxu0 0.0
        %1665 = vmatprep.subr.mxu0 0.0
        %1666 = vmatpush2.xpose.msra.mxu0 0.0
        %1667 = vmatprep.subr.mxu0 0.0
        %1668 = vmatpush2.xpose.msra.mxu0 0.0
        %1669 = vmatprep.subr.mxu0 0.0
        %1670 = vmatpush2.xpose.msra.mxu0 0.0
        %1671 = vmatprep.subr.mxu0 0.0
        %1672 = vmatpush2.xpose.msra.mxu0 0.0
        %1673 = vmatprep.subr.mxu0 0.0
        %1674 = vmatpush2.xpose.msra.mxu0 0.0
        %1675 = vmatprep.subr.mxu0 0.0
        %1676 = vmatpush2.xpose.msra.mxu0 0.0
        %1677 = vmatprep.subr.mxu0 0.0
        %1678 = vmatpush2.xpose.msra.mxu0 0.0
        %1679 = vmatprep.subr.mxu0 0.0
        %1680 = vmatpush2.xpose.msra.mxu0 0.0
        %1681 = vmatprep.subr.mxu0 0.0
        %1682 = vmatpush2.xpose.msra.mxu0 0.0
        %1683 = vmatprep.subr.mxu0 0.0
        %1684 = vmatpush2.xpose.msra.mxu0 0.0
        %1685 = vmatprep.subr.mxu0 0.0
        %1686 = vmatpush2.xpose.msra.mxu0 0.0
        %1687 = vmatprep.subr.mxu0 0.0
        %1688 = vmatpush2.xpose.msra.mxu0 0.0
        %1689 = vmatprep.subr.mxu0 0.0
        %1690 = vmatpush2.xpose.msra.mxu0 0.0
        %1691 = vmatprep.mubr.f32.mxu0 0.0
        %1692 = vmatmul.mubr.f32.gmra.mxu0 %v1621
        %v1693 = vpop.f32.mrf.mxu0
        %v1694 = vadd.f32 0.0, %v1693
        %v1695 = vpop.f32.mrf.mxu0
        %1696 = vdwg.mxu0
        %v1697 = vsel %vm356, %v1694, -inf
        %1698 = vmax.xlane.f32.xlu0 %v1697
        %v1699 = vpop.xlane.xlu0 %1698
        %v1700 = vmax.f32 %v273, %v1699
        %v1701 = vsub.f32 %v273, %v1700
        %v1702 = vmul.f32 %v1701, 1.442695
        %v1703 = vpow.pop %v1702
        %1705 = vset.pattern.permute.xlu0 7
        %1706 = vperm.xlu0 %1705, %v1700
        %v1707 = vpop.permute.xlu0 %1706
        %v1709 = vsub.f32 %v1694, %v1707
        %v1710 = vmul.f32 %v1709, 1.442695
        %v1711 = vpow.pop %v1710
        %v1712 = vmul.f32 %v1703, %v274
        %v1713 = vsel %vm356, %v1711, 0.0
        %1714 = vadd.xlane.f32.xlu0 %v1713
        %v1715 = vpop.xlane.xlu0 %1714
        %v1716 = vadd.f32 %v1712, %v1715
        %1717 = vrot.lane.b32.xlu0 %v271, 8
        %v1718 = vpop.permute.xlu0 %1717
        %1719 = vrot.lane.b32.xlu0 %v272, 8
        %v1720 = vpop.permute.xlu0 %1719
        %v1724 = vsel %vm356, %v1711, 0
        %1726 = vmatprep.subr.mxu0 0.0
        %1727 = vmatpush1.msra.mxu0 0.0
        %1728 = vmatprep.subr.mxu0 0.0
        %1729 = vmatpush1.msra.mxu0 0.0
        %1730 = vmatprep.subr.mxu0 0.0
        %1731 = vmatpush1.msra.mxu0 0.0
        %1732 = vmatprep.subr.mxu0 0.0
        %1733 = vmatpush1.msra.mxu0 0.0
        %1734 = vmatprep.subr.mxu0 0.0
        %1735 = vmatpush1.msra.mxu0 0.0
        %1736 = vmatprep.subr.mxu0 0.0
        %1737 = vmatpush1.msra.mxu0 0.0
        %1738 = vmatprep.subr.mxu0 0.0
        %1739 = vmatpush1.msra.mxu0 0.0
        %1740 = vmatprep.subr.mxu0 0.0
        %1741 = vmatpush1.msra.mxu0 0.0
        %1742 = vmatprep.subr.mxu0 0.0
        %1743 = vmatpush1.msra.mxu0 0.0
        %1744 = vmatprep.subr.mxu0 0.0
        %1745 = vmatpush1.msra.mxu0 0.0
        %1746 = vmatprep.subr.mxu0 0.0
        %1747 = vmatpush1.msra.mxu0 0.0
        %1748 = vmatprep.subr.mxu0 0.0
        %1749 = vmatpush1.msra.mxu0 0.0
        %1750 = vmatprep.subr.mxu0 0.0
        %1751 = vmatpush1.msra.mxu0 0.0
        %1752 = vmatprep.subr.mxu0 0.0
        %1753 = vmatpush1.msra.mxu0 0.0
        %1754 = vmatprep.subr.mxu0 0.0
        %1755 = vmatpush1.msra.mxu0 %v1720
        %1756 = vmatprep.subr.mxu0 0.0
        %1757 = vmatpush1.msra.mxu0 %v1718
        %1758 = vmatprep.subr.mxu0 0.0
        %1759 = vmatpush2.msra.mxu0 0.0
        %1760 = vmatprep.subr.mxu0 0.0
        %1761 = vmatpush2.msra.mxu0 0.0
        %1762 = vmatprep.subr.mxu0 0.0
        %1763 = vmatpush2.msra.mxu0 0.0
        %1764 = vmatprep.subr.mxu0 0.0
        %1765 = vmatpush2.msra.mxu0 0.0
        %1766 = vmatprep.subr.mxu0 0.0
        %1767 = vmatpush2.msra.mxu0 0.0
        %1768 = vmatprep.subr.mxu0 0.0
        %1769 = vmatpush2.msra.mxu0 0.0
        %1770 = vmatprep.subr.mxu0 0.0
        %1771 = vmatpush2.msra.mxu0 0.0
        %1772 = vmatprep.subr.mxu0 0.0
        %1773 = vmatpush2.msra.mxu0 0.0
        %1774 = vmatprep.subr.mxu0 0.0
        %1775 = vmatpush2.msra.mxu0 0.0
        %1776 = vmatprep.subr.mxu0 0.0
        %1777 = vmatpush2.msra.mxu0 0.0
        %1778 = vmatprep.subr.mxu0 0.0
        %1779 = vmatpush2.msra.mxu0 0.0
        %1780 = vmatprep.subr.mxu0 0.0
        %1781 = vmatpush2.msra.mxu0 0.0
        %1782 = vmatprep.subr.mxu0 0.0
        %1783 = vmatpush2.msra.mxu0 0.0
        %1784 = vmatprep.subr.mxu0 0.0
        %1785 = vmatpush2.msra.mxu0 0.0
        %1786 = vmatprep.subr.mxu0 0.0
        %1787 = vmatpush2.msra.mxu0 0.0
        %1788 = vmatprep.subr.mxu0 0.0
        %1789 = vmatpush2.msra.mxu0 0.0
        %1790 = vmatprep.mubr.f32.mxu0 0.0
        %1791 = vmatmul.mubr.f32.gmra.mxu0 %v1724
        %v1792 = vpop.f32.mrf.mxu0
        %v1793 = vadd.f32 0.0, %v1792
        %v1794 = vpop.f32.mrf.mxu0
        %1795 = vdwg.mxu0
        %1797 = vset.pattern.permute.xlu0 7
        %1798 = vperm.xlu0 %1797, %v1703
        %v1799 = vpop.permute.xlu0 %1798
        %v1801 = vmul.f32 %v1799, %v275
        %1803 = vrot.lane.b32.xlu0 %v1793, 56
        %v1804 = vpop.permute.xlu0 %1803
        %v1806 = vadd.f32 %v1801, %v1804
        %vm1807 = vcmask 7168
        %v1808 = vsel %vm1807, %v360, %v548
        %vm1809 = vcmask 15360
        %v1810 = vsel %vm1809, %v1808, %v740
        %vm1811 = vcmask 23552
        %v1812 = vsel %vm1811, %v1810, %v932
        %vm1813 = vcmask 31744
        %v1814 = vsel %vm1813, %v1812, %v1124
        %vm1815 = vcmask 39936
        %v1816 = vsel %vm1815, %v1814, %v1316
        %vm1817 = vcmask 48128
        %v1818 = vsel %vm1817, %v1816, %v1508
        %vm1819 = vcmask 56320
        %v1820 = vsel %vm1819, %v1818, %v1700
        %1821 = vst.msk [vmem:[#allocation2] sm:$0xff] %vm276, %v1820
        %v1822 = vsel %vm1807, %v376, %v564
        %v1823 = vsel %vm1809, %v1822, %v756
        %v1824 = vsel %vm1811, %v1823, %v948
        %v1825 = vsel %vm1813, %v1824, %v1140
        %v1826 = vsel %vm1815, %v1825, %v1332
        %v1827 = vsel %vm1817, %v1826, %v1524
        %v1828 = vsel %vm1819, %v1827, %v1716
        %1829 = vst.msk [vmem:[#allocation3] sm:$0xff] %vm276, %v1828
        %v1830 = vsel %vm276, %v462, %v654
        %v1831 = vsel %vm356, %v1830, %v846
        %vm1832 = vcmask 195584
        %v1833 = vsel %vm1832, %v1831, %v1038
        %vm1834 = vcmask 261120
        %v1835 = vsel %vm1834, %v1833, %v1230
        %vm1836 = vcmask 326656
        %v1837 = vsel %vm1836, %v1835, %v1422
        %vm1838 = vcmask 392192
        %v1839 = vsel %vm1838, %v1837, %v1614
        %vm1840 = vcmask 457728
        %v1841 = vsel %vm1840, %v1839, %v1806
        %vm1842 = vcmask 523264
        %1843 = vst.msk [vmem:[#allocation4] sm:$0xff] %vm1842, %v1841
        // Predicated region
        $region41: #{custom_multihead_attention.5} parent=35 // pred_check
          %p1844 = pneg %p261
        $region42: #{custom_multihead_attention.5} parent=35 // pred_check_branch
          %1846 = sbr.rel (%p1844) target = $region44
        $region43: #{custom_multihead_attention.5} parent=35 // pred_region
          %v1847 = vld [vmem:[#allocation3] sm:$0xff]
          %v1848 = vrcp.pop %v1847
          %v1849 = vld [vmem:[#allocation4] sm:$0xff]
          %1851 = vset.pattern.permute.xlu0 0
          %1852 = vperm.xlu0 %1851, %v1848
          %v1853 = vpop.permute.xlu0 %1852
          %v1855 = vmul.f32 %v1849, %v1853
          %1856 = vset.pattern.permute.xlu0 1
          %1857 = vperm.xlu0 %1856, %v1848
          %v1858 = vpop.permute.xlu0 %1857
          %v1860 = vmul.f32 %v1849, %v1858
          %1861 = vset.pattern.permute.xlu0 2
          %1862 = vperm.xlu0 %1861, %v1848
          %v1863 = vpop.permute.xlu0 %1862
          %v1865 = vmul.f32 %v1849, %v1863
          %1866 = vset.pattern.permute.xlu0 3
          %1867 = vperm.xlu0 %1866, %v1848
          %v1868 = vpop.permute.xlu0 %1867
          %v1870 = vmul.f32 %v1849, %v1868
          %1871 = vset.pattern.permute.xlu0 4
          %1872 = vperm.xlu0 %1871, %v1848
          %v1873 = vpop.permute.xlu0 %1872
          %v1875 = vmul.f32 %v1849, %v1873
          %1876 = vset.pattern.permute.xlu0 5
          %1877 = vperm.xlu0 %1876, %v1848
          %v1878 = vpop.permute.xlu0 %1877
          %v1880 = vmul.f32 %v1849, %v1878
          %1881 = vset.pattern.permute.xlu0 6
          %1882 = vperm.xlu0 %1881, %v1848
          %v1883 = vpop.permute.xlu0 %1882
          %v1885 = vmul.f32 %v1849, %v1883
          %1886 = vset.pattern.permute.xlu0 7
          %1887 = vperm.xlu0 %1886, %v1848
          %v1888 = vpop.permute.xlu0 %1887
          %v1890 = vmul.f32 %v1849, %v1888
          %v1891 = vsel %vm276, %v1855, %v1860
          %v1892 = vsel %vm356, %v1891, %v1865
          %v1893 = vsel %vm1832, %v1892, %v1870
          %v1894 = vsel %vm1834, %v1893, %v1875
          %v1895 = vsel %vm1836, %v1894, %v1880
          %v1896 = vsel %vm1838, %v1895, %v1885
          %v1897 = vsel %vm1840, %v1896, %v1890
          %v1898 = vld [vmem:[%s2] sm:$0xff]
          %v1899 = vld [vmem:[%s2 + $0x8] sm:$0xff]
          %v1900 = vld [vmem:[%s2 + $0x10] sm:$0xff]
          %v1901 = vld [vmem:[%s2 + $0x18] sm:$0xff]
          %v1902 = vld [vmem:[%s2 + $0x20] sm:$0xff]
          %v1903 = vld [vmem:[%s2 + $0x28] sm:$0xff]
          %v1904 = vld [vmem:[%s2 + $0x30] sm:$0xff]
          %v1905 = vld [vmem:[%s2 + $0x38] sm:$0xff]
          %v1906 = vld [vmem:[%s3] sm:$0x1]
          %v1908 = vlaneseq
          %v1909 = vshrl.u32 %v1908, 7
          %v1910 = vsub.s32 0, %v1909
          %v1911 = vrot.slane %v1906, %v1910
          %v1914 = vsel %vm1842, %v1897, 0
          %1916 = vmatprep.subr.mxu0 0.0
          %1917 = vmatpush1.msra.mxu0 0.0
          %1918 = vmatprep.subr.mxu0 0.0
          %1919 = vmatpush1.msra.mxu0 0.0
          %1920 = vmatprep.subr.mxu0 0.0
          %1921 = vmatpush1.msra.mxu0 0.0
          %1922 = vmatprep.subr.mxu0 0.0
          %1923 = vmatpush1.msra.mxu0 0.0
          %1924 = vmatprep.subr.mxu0 0.0
          %1925 = vmatpush1.msra.mxu0 0.0
          %1926 = vmatprep.subr.mxu0 0.0
          %1927 = vmatpush1.msra.mxu0 0.0
          %1928 = vmatprep.subr.mxu0 0.0
          %1929 = vmatpush1.msra.mxu0 0.0
          %1930 = vmatprep.subr.mxu0 0.0
          %1931 = vmatpush1.msra.mxu0 0.0
          %1932 = vmatprep.subr.mxu0 0.0
          %1933 = vmatpush1.msra.mxu0 %v1905
          %1934 = vmatprep.subr.mxu0 0.0
          %1935 = vmatpush1.msra.mxu0 %v1904
          %1936 = vmatprep.subr.mxu0 0.0
          %1937 = vmatpush1.msra.mxu0 %v1903
          %1938 = vmatprep.subr.mxu0 0.0
          %1939 = vmatpush1.msra.mxu0 %v1902
          %1940 = vmatprep.subr.mxu0 0.0
          %1941 = vmatpush1.msra.mxu0 %v1901
          %1942 = vmatprep.subr.mxu0 0.0
          %1943 = vmatpush1.msra.mxu0 %v1900
          %1944 = vmatprep.subr.mxu0 0.0
          %1945 = vmatpush1.msra.mxu0 %v1899
          %1946 = vmatprep.subr.mxu0 0.0
          %1947 = vmatpush1.msra.mxu0 %v1898
          %1948 = vmatprep.subr.mxu0 0.0
          %1949 = vmatpush2.msra.mxu0 0.0
          %1950 = vmatprep.subr.mxu0 0.0
          %1951 = vmatpush2.msra.mxu0 0.0
          %1952 = vmatprep.subr.mxu0 0.0
          %1953 = vmatpush2.msra.mxu0 0.0
          %1954 = vmatprep.subr.mxu0 0.0
          %1955 = vmatpush2.msra.mxu0 0.0
          %1956 = vmatprep.subr.mxu0 0.0
          %1957 = vmatpush2.msra.mxu0 0.0
          %1958 = vmatprep.subr.mxu0 0.0
          %1959 = vmatpush2.msra.mxu0 0.0
          %1960 = vmatprep.subr.mxu0 0.0
          %1961 = vmatpush2.msra.mxu0 0.0
          %1962 = vmatprep.subr.mxu0 0.0
          %1963 = vmatpush2.msra.mxu0 0.0
          %1964 = vmatprep.subr.mxu0 0.0
          %1965 = vmatpush2.msra.mxu0 0.0
          %1966 = vmatprep.subr.mxu0 0.0
          %1967 = vmatpush2.msra.mxu0 0.0
          %1968 = vmatprep.subr.mxu0 0.0
          %1969 = vmatpush2.msra.mxu0 0.0
          %1970 = vmatprep.subr.mxu0 0.0
          %1971 = vmatpush2.msra.mxu0 0.0
          %1972 = vmatprep.subr.mxu0 0.0
          %1973 = vmatpush2.msra.mxu0 0.0
          %1974 = vmatprep.subr.mxu0 0.0
          %1975 = vmatpush2.msra.mxu0 0.0
          %1976 = vmatprep.subr.mxu0 0.0
          %1977 = vmatpush2.msra.mxu0 0.0
          %1978 = vmatprep.subr.mxu0 0.0
          %1979 = vmatpush2.msra.mxu0 0.0
          %1980 = vmatprep.mubr.f32.mxu0 0.0
          %1981 = vmatmul.mubr.f32.gmra.mxu0 %v1914
          %v1982 = vpop.f32.mrf.mxu0
          %v1983 = vadd.f32 %v1911, %v1982
          %v1984 = vpop.f32.mrf.mxu0
          %1985 = vdwg.mxu0
          %1986 = vst [vmem:[%s243] sm:$0xff] %v1983
        $region44: #{custom_multihead_attention.5} parent=35 // pred_fallthru
          _
        %s1987 = sand.u32 %s145, 1
        %s1988 = scalar_lea.sflag [#allocation6], %s1987
        %s1989 = sand.u32 %s145, 1
        %s1990 = smul.addr %s1989, 8
        %s1991 = scalar_lea.vmem [#allocation5], %s1990
        // Predicated region
        $region45: #{custom_multihead_attention.5} parent=35 // pred_check
          %p1992 = pneg %p155
        $region46: #{custom_multihead_attention.5} parent=35 // pred_check_branch
          %1994 = sbr.rel (%p1992) target = $region48
        $region47: #{custom_multihead_attention.5} parent=35 // pred_region
          %s1996 = ssub.s32 128, 128
          %1997 = vsyncadd %s1988, %s1996
          %s1998 = sadd.s32 %s24, %s23
          %s1999 = smul.addr %s1998, 128
          %s2000 = scalar_lea.hbm %s4, %s1999
          %s2002 = sshll.u32 %s1991, 4
          %s2003 = int_to_ptr.vmem [resolvable:$true] %s2002
          %2005 = dma.vmem_to_hbm [thread:$0]  %s2003, 128, %s2000, %s1988
        $region48: #{custom_multihead_attention.5} parent=35 // pred_fallthru
          _
      $region36: #{custom_multihead_attention.5} parent=5 // pred_fallthru
        _
      %p2006 = scmp.le.s32.totalorder 2, %s13
      // Predicated region
      $region49: #{custom_multihead_attention.5} parent=5 // pred_check
        %p2007 = pneg %p2006
      $region50: #{custom_multihead_attention.5} parent=5 // pred_check_branch
        %2009 = sbr.rel (%p2007) target = $region52
      $region51: #{custom_multihead_attention.5} parent=5 // pred_region
        %s2010 = ssub.s32 %s13, 2
        // Predicated region
        $region53: #{custom_multihead_attention.5} parent=51 // pred_check
          %p2011 = pneg %p161
        $region54: #{custom_multihead_attention.5} parent=51 // pred_check_branch
          %2013 = sbr.rel (%p2011) target = $region56
        $region55: #{custom_multihead_attention.5} parent=51 // pred_region
          %s2014 = sand.u32 %s146, 1
          %s2015 = scalar_lea.sflag [#allocation6], %s2014
          %s2016 = sand.u32 %s146, 1
          %s2017 = smul.addr %s2016, 8
          %s2018 = scalar_lea.vmem [#allocation5], %s2017
          %2019 = dma.done %s2015, 128
        $region56: #{custom_multihead_attention.5} parent=51 // pred_fallthru
          _
      $region52: #{custom_multihead_attention.5} parent=5 // pred_fallthru
        _
    $region6: #{custom_multihead_attention.5} parent=1 // loop_footer
      %s17 = sadd.s32 1, %s13
    $region7: #{custom_multihead_attention.5} parent=1 // loop_footer_branch
      %12 = sbr.rel target = $region3
    $region8: #{custom_multihead_attention.5} parent=1 // loop_exit
      _
    %2020 = vsyncpa [#allocation6], 1
    %s2021 = scalar_lea.sflag [#allocation6], 1
    %2022 = vsyncpa %s2021, 1

</llo_original>
